<compile_context>
chip_gen: v6e
topology: v6e:2x2x1
jax: 0.10.0
libtpu: 0.0.40
codegen_flags: <defaults>
</compile_context>

<pallas_src>
import jax
import jax.numpy as jnp
import numpy as np
from jax import lax
from jax.experimental import pallas as pl
from jax.experimental.pallas import tpu as pltpu

_HIGH = lax.Precision.HIGHEST


# --------------------------------------------------------------------------- #
# Fused kernel: im2col + one MXU matmul for both convs, then channel + spatial
# attention and the final blend.  One batch element per grid step.
# --------------------------------------------------------------------------- #
def _sknet_fused_kernel(xp_ref, w_ref, b_ref, wfct_ref, bfc_ref, a_ref,
                        bsel_ref, wse_ref, sa_ref, sb_ref, out_ref):
    _, H, W, C = out_ref.shape
    Cin = xp_ref.shape[3]

    # im2col: 9 taps of the 3x3/pad=1 conv (offset +1 inside the pad=2 input)
    # followed by 9 taps of the 3x3/dil=2/pad=2 conv.
    patches = []
    for dy in range(3):
        for dx in range(3):
            patches.append(xp_ref[:, 1 + dy:1 + dy + H, 1 + dx:1 + dx + W, :])
    for dy in range(3):
        for dx in range(3):
            patches.append(xp_ref[:, 2 * dy:2 * dy + H, 2 * dx:2 * dx + W, :])
    pm = jnp.concatenate(patches, axis=-1).reshape(H * W, 18 * Cin)

    # One MXU matmul produces both convs (weights block-diagonal over Cout).
    y = jnp.dot(pm, w_ref[...], precision=_HIGH,
                preferred_element_type=jnp.float32) + b_ref[...]
    y = jnp.maximum(y, 0.0)                      # conv + folded BN + ReLU
    x3 = y[:, :C]                                # (H*W, C)
    x5 = y[:, C:]                                # (H*W, C)
    xf = x3 + x5                                 # (H*W, C)

    # SK channel attention: global avg-pool -> fc+relu -> exp softmax over A/B.
    pooled = jnp.sum(xf, axis=0, keepdims=True) * (1.0 / float(H * W))   # (1,C)
    z = jnp.maximum(
        jnp.dot(pooled, wfct_ref[...], precision=_HIGH,
                preferred_element_type=jnp.float32) + bfc_ref[...], 0.0)  # (1,r)
    ea = jnp.exp(jnp.dot(z, a_ref[...], precision=_HIGH,
                         preferred_element_type=jnp.float32))             # (1,C)
    eb = jnp.exp(jnp.dot(z, bsel_ref[...], precision=_HIGH,
                         preferred_element_type=jnp.float32))
    s1 = ea / (ea + eb)
    s2 = 1.0 - s1

    # Spatial SE: 1x1 conv (C -> 1, no bias) + sigmoid, then matmul with SA/SB.
    x3_4d = x3.reshape(1, H, W, C)
    x5_4d = x5.reshape(1, H, W, C)
    xf_4d = xf.reshape(1, H, W, C)
    se_logit = jnp.sum(xf_4d * wse_ref[...].reshape(1, 1, 1, C), axis=-1)  # (1,H,W)
    se = 1.0 / (1.0 + jnp.exp(-se_logit))
    se2 = se[0]                                                            # (H,W)
    num = jnp.dot(se2, sa_ref[0], precision=_HIGH,
                  preferred_element_type=jnp.float32)                      # (H,W)
    den = jnp.dot(se2, sb_ref[0], precision=_HIGH,
                  preferred_element_type=jnp.float32)
    sa1 = num / (num + den)
    sa2 = 1.0 - sa1

    # Final blend: V (channel attention) + SV (spatial attention).
    V = x3_4d * s1[:, None, None, :] + x5_4d * s2[:, None, None, :]
    SV = x3_4d * sa1[None, :, :, None] + x5_4d * sa2[None, :, :, None]
    out_ref[...] = V + SV


# --------------------------------------------------------------------------- #
# Wrapper
# --------------------------------------------------------------------------- #
def _fold_bn(w_oihw, bias, gamma, beta, mean, var, eps=1e-5):
    # torch conv weight (Cout, Cin, 3, 3) -> (9*Cin, Cout) with eval-mode BN folded.
    s = gamma / jnp.sqrt(var + eps)
    w = jnp.transpose(w_oihw, (2, 3, 1, 0))                  # (3,3,Cin,Cout)
    w_eff = w * s[None, None, None, :]
    b_eff = (bias - mean) * s + beta
    cout, cin = w_oihw.shape[0], w_oihw.shape[1]
    return w_eff.reshape(9 * cin, cout), b_eff.reshape(1, cout)


def dual_attention_conv_sknet_forward(x_nchw, params, sa_rand, sb_rand):
    x = jnp.transpose(x_nchw, (0, 2, 3, 1)).astype(jnp.float32)   # -> NHWC
    B, H, W, Cin = x.shape
    Cout = params["w3"].shape[0]
    r = params["A"].shape[0]

    w3m, b3e = _fold_bn(params["w3"], params["b3"], params["gamma3"],
                        params["beta3"], params["mean3"], params["var3"])
    w5m, b5e = _fold_bn(params["w5"], params["b5"], params["gamma5"],
                        params["beta5"], params["mean5"], params["var5"])

    # Block-diagonal weight so one matmul yields [conv3 | conv5] along Cout.
    zeros = jnp.zeros_like(w3m)
    w_cat = jnp.concatenate(
        [jnp.concatenate([w3m, zeros], axis=1),
         jnp.concatenate([zeros, w5m], axis=1)], axis=0)      # (18*Cin, 2*Cout)
    b_cat = jnp.concatenate([b3e, b5e], axis=1)               # (1, 2*Cout)

    xp = jnp.pad(x, ((0, 0), (2, 2), (2, 2), (0, 0)))         # single pad=2 copy

    wfct = jnp.transpose(params["Wfc"], (1, 0))               # (Cout, r)
    bfc = params["bfc"].reshape(1, r)
    wse = params["w_se"].reshape(1, Cout)
    sa = sa_rand[:, 0]                                        # (B, W, W)
    sb = sb_rand[:, 0]

    out = pl.pallas_call(
        _sknet_fused_kernel,
        out_shape=jax.ShapeDtypeStruct((B, H, W, Cout), jnp.float32),
        grid=(B,),
        in_specs=[
            pl.BlockSpec((1, H + 4, W + 4, Cin), lambda b: (b, 0, 0, 0)),
            pl.BlockSpec((18 * Cin, 2 * Cout), lambda b: (0, 0)),
            pl.BlockSpec((1, 2 * Cout), lambda b: (0, 0)),
            pl.BlockSpec((Cout, r), lambda b: (0, 0)),
            pl.BlockSpec((1, r), lambda b: (0, 0)),
            pl.BlockSpec((r, Cout), lambda b: (0, 0)),
            pl.BlockSpec((r, Cout), lambda b: (0, 0)),
            pl.BlockSpec((1, Cout), lambda b: (0, 0)),
            pl.BlockSpec((1, W, W), lambda b: (b, 0, 0)),
            pl.BlockSpec((1, W, W), lambda b: (b, 0, 0)),
        ],
        out_specs=pl.BlockSpec((1, H, W, Cout), lambda b: (b, 0, 0, 0)),
        compiler_params=pltpu.CompilerParams(
            dimension_semantics=("parallel",),
            vmem_limit_bytes=32 * 1024 * 1024),
    )(xp, w_cat, b_cat, wfct, bfc, params["A"], params["B"], wse, sa, sb)

    return jnp.transpose(out, (0, 3, 1, 2))                   # back to NCHW


# --------------------------------------------------------------------------- #
# Pure-JAX reference (mirrors the PyTorch forward, kernel_three=False path).
# --------------------------------------------------------------------------- #
def reference_forward(x, p, sa_rand, sb_rand):
    eps = 1e-5

    def conv_bn_relu(x, w, b, gamma, beta, mean, var, d):
        y = lax.conv_general_dilated(
            x, w, window_strides=(1, 1),
            padding=((d, d), (d, d)), rhs_dilation=(d, d),
            dimension_numbers=("NCHW", "OIHW", "NCHW"),
            precision=_HIGH)
        y = y + b[None, :, None, None]
        s = gamma / jnp.sqrt(var + eps)
        y = (y - mean[None, :, None, None]) * s[None, :, None, None] \
            + beta[None, :, None, None]
        return jnp.maximum(y, 0.0)

    x3 = conv_bn_relu(x, p["w3"], p["b3"], p["gamma3"], p["beta3"],
                      p["mean3"], p["var3"], 1)
    x5 = conv_bn_relu(x, p["w5"], p["b5"], p["gamma5"], p["beta5"],
                      p["mean5"], p["var5"], 2)
    xf = x3 + x5
    b, c = xf.shape[0], xf.shape[1]
    pooled = jnp.mean(xf, axis=(2, 3))                               # (b,c)
    z = jnp.maximum(jnp.dot(pooled, p["Wfc"].T, precision=_HIGH) + p["bfc"], 0.0)
    ea = jnp.exp(jnp.dot(z, p["A"], precision=_HIGH))
    eb = jnp.exp(jnp.dot(z, p["B"], precision=_HIGH))
    s1 = (ea / (ea + eb)).reshape(b, c, 1, 1)
    V = x3 * s1 + x5 * (1.0 - s1)
    se = jax.nn.sigmoid(
        jnp.einsum("bchw,c->bhw", xf, p["w_se"], precision=_HIGH))[:, None]
    num = jnp.matmul(se, sa_rand, precision=_HIGH)
    den = jnp.matmul(se, sb_rand, precision=_HIGH)
    sa1 = num / (num + den)
    SV = x3 * sa1 + x5 * (1.0 - sa1)
    return V + SV


if __name__ == "__main__":
    B, in_ch, out_ch, size = 2, 4, 8, 8          # H = W must equal `size` (=8)
    reduction = 16
    r = max(out_ch // reduction, 32)

    key = jax.random.PRNGKey(0)
    ks = jax.random.split(key, 24)
    params = {
        "w3": jax.random.normal(ks[0], (out_ch, in_ch, 3, 3), jnp.float32) * 0.1,
        "b3": jax.random.normal(ks[1], (out_ch,), jnp.float32) * 0.1,
        "gamma3": jax.random.uniform(ks[2], (out_ch,), jnp.float32, 0.5, 1.5),
        "beta3": jax.random.normal(ks[3], (out_ch,), jnp.float32) * 0.1,
        "mean3": jax.random.normal(ks[4], (out_ch,), jnp.float32) * 0.1,
        "var3": jax.random.uniform(ks[5], (out_ch,), jnp.float32, 0.5, 1.5),
        "w5": jax.random.normal(ks[6], (out_ch, in_ch, 3, 3), jnp.float32) * 0.1,
        "b5": jax.random.normal(ks[7], (out_ch,), jnp.float32) * 0.1,
        "gamma5": jax.random.uniform(ks[8], (out_ch,), jnp.float32, 0.5, 1.5),
        "beta5": jax.random.normal(ks[9], (out_ch,), jnp.float32) * 0.1,
        "mean5": jax.random.normal(ks[10], (out_ch,), jnp.float32) * 0.1,
        "var5": jax.random.uniform(ks[11], (out_ch,), jnp.float32, 0.5, 1.5),
        "A": jax.random.uniform(ks[12], (r, out_ch), jnp.float32),
        "B": jax.random.uniform(ks[13], (r, out_ch), jnp.float32),
        "Wfc": jax.random.normal(ks[14], (r, out_ch), jnp.float32) * 0.1,
        "bfc": jax.random.normal(ks[15], (r,), jnp.float32) * 0.1,
        "w_se": jax.random.normal(ks[16], (out_ch,), jnp.float32) * 0.1,
    }
    x = jax.random.normal(ks[17], (B, in_ch, size, size), jnp.float32)
    SA = jax.random.uniform(ks[18], (B, 1, size, size), jnp.float32)
    SB = jax.random.uniform(ks[19], (B, 1, size, size), jnp.float32)

    out = dual_attention_conv_sknet_forward(x, params, SA, SB)
    out = jax.block_until_ready(out)

    ref = reference_forward(x, params, SA, SB)
    np.testing.assert_allclose(np.asarray(out), np.asarray(ref),
                               rtol=2e-3, atol=2e-3)
    print("KERNEL_OK")
</pallas_src>

<mosaic_0001>
module attributes {stable_mosaic.version = 11 : i64} {
  func.func @_sknet_fused_kernel(%arg0: i32, %arg1: memref<1x12x12x4xf32, #tpu.memory_space<vmem>>, %arg2: memref<72x16xf32, #tpu.memory_space<vmem>>, %arg3: memref<1x16xf32, #tpu.memory_space<vmem>>, %arg4: memref<8x32xf32, #tpu.memory_space<vmem>>, %arg5: memref<1x32xf32, #tpu.memory_space<vmem>>, %arg6: memref<32x8xf32, #tpu.memory_space<vmem>>, %arg7: memref<32x8xf32, #tpu.memory_space<vmem>>, %arg8: memref<1x8xf32, #tpu.memory_space<vmem>>, %arg9: memref<1x8x8xf32, #tpu.memory_space<vmem>>, %arg10: memref<1x8x8xf32, #tpu.memory_space<vmem>>, %arg11: memref<1x8x8x8xf32, #tpu.memory_space<vmem>>) attributes {dimension_semantics = [#tpu.dimension_semantics<parallel>], iteration_bounds = array<i64: 2>, scalar_prefetch = 0 : i64, scratch_operands = 0 : i64, tpu.core_type = #tpu.core_type<tc>, window_params = [{transform_indices = @transform_0, window_bounds = array<i64: 1, 12, 12, 4>}, {pipeline_mode = #tpu.pipeline_mode<synchronous>, transform_indices = @transform_1, window_bounds = array<i64: 72, 16>}, {pipeline_mode = #tpu.pipeline_mode<synchronous>, transform_indices = @transform_2, window_bounds = array<i64: 1, 16>}, {pipeline_mode = #tpu.pipeline_mode<synchronous>, transform_indices = @transform_3, window_bounds = array<i64: 8, 32>}, {pipeline_mode = #tpu.pipeline_mode<synchronous>, transform_indices = @transform_4, window_bounds = array<i64: 1, 32>}, {pipeline_mode = #tpu.pipeline_mode<synchronous>, transform_indices = @transform_5, window_bounds = array<i64: 32, 8>}, {pipeline_mode = #tpu.pipeline_mode<synchronous>, transform_indices = @transform_6, window_bounds = array<i64: 32, 8>}, {pipeline_mode = #tpu.pipeline_mode<synchronous>, transform_indices = @transform_7, window_bounds = array<i64: 1, 8>}, {transform_indices = @transform_8, window_bounds = array<i64: 1, 8, 8>}, {transform_indices = @transform_9, window_bounds = array<i64: 1, 8, 8>}, {transform_indices = @transform_10, window_bounds = array<i64: 1, 8, 8, 8>}]} {
    %c0 = arith.constant 0 : index
    %c1 = arith.constant 1 : index
    %c1_0 = arith.constant 1 : index
    %c0_1 = arith.constant 0 : index
    %0 = vector.load %arg1[%c0, %c1, %c1_0, %c0_1] : memref<1x12x12x4xf32, #tpu.memory_space<vmem>>, vector<1x8x8x4xf32>
    %c0_2 = arith.constant 0 : index
    %c1_3 = arith.constant 1 : index
    %c2 = arith.constant 2 : index
    %c0_4 = arith.constant 0 : index
    %1 = vector.load %arg1[%c0_2, %c1_3, %c2, %c0_4] : memref<1x12x12x4xf32, #tpu.memory_space<vmem>>, vector<1x8x8x4xf32>
    %c0_5 = arith.constant 0 : index
    %c1_6 = arith.constant 1 : index
    %c3 = arith.constant 3 : index
    %c0_7 = arith.constant 0 : index
    %2 = vector.load %arg1[%c0_5, %c1_6, %c3, %c0_7] : memref<1x12x12x4xf32, #tpu.memory_space<vmem>>, vector<1x8x8x4xf32>
    %c0_8 = arith.constant 0 : index
    %c2_9 = arith.constant 2 : index
    %c1_10 = arith.constant 1 : index
    %c0_11 = arith.constant 0 : index
    %3 = vector.load %arg1[%c0_8, %c2_9, %c1_10, %c0_11] : memref<1x12x12x4xf32, #tpu.memory_space<vmem>>, vector<1x8x8x4xf32>
    %c0_12 = arith.constant 0 : index
    %c2_13 = arith.constant 2 : index
    %c2_14 = arith.constant 2 : index
    %c0_15 = arith.constant 0 : index
    %4 = vector.load %arg1[%c0_12, %c2_13, %c2_14, %c0_15] : memref<1x12x12x4xf32, #tpu.memory_space<vmem>>, vector<1x8x8x4xf32>
    %c0_16 = arith.constant 0 : index
    %c2_17 = arith.constant 2 : index
    %c3_18 = arith.constant 3 : index
    %c0_19 = arith.constant 0 : index
    %5 = vector.load %arg1[%c0_16, %c2_17, %c3_18, %c0_19] : memref<1x12x12x4xf32, #tpu.memory_space<vmem>>, vector<1x8x8x4xf32>
    %c0_20 = arith.constant 0 : index
    %c3_21 = arith.constant 3 : index
    %c1_22 = arith.constant 1 : index
    %c0_23 = arith.constant 0 : index
    %6 = vector.load %arg1[%c0_20, %c3_21, %c1_22, %c0_23] : memref<1x12x12x4xf32, #tpu.memory_space<vmem>>, vector<1x8x8x4xf32>
    %c0_24 = arith.constant 0 : index
    %c3_25 = arith.constant 3 : index
    %c2_26 = arith.constant 2 : index
    %c0_27 = arith.constant 0 : index
    %7 = vector.load %arg1[%c0_24, %c3_25, %c2_26, %c0_27] : memref<1x12x12x4xf32, #tpu.memory_space<vmem>>, vector<1x8x8x4xf32>
    %c0_28 = arith.constant 0 : index
    %c3_29 = arith.constant 3 : index
    %c3_30 = arith.constant 3 : index
    %c0_31 = arith.constant 0 : index
    %8 = vector.load %arg1[%c0_28, %c3_29, %c3_30, %c0_31] : memref<1x12x12x4xf32, #tpu.memory_space<vmem>>, vector<1x8x8x4xf32>
    %c0_32 = arith.constant 0 : index
    %c0_33 = arith.constant 0 : index
    %c0_34 = arith.constant 0 : index
    %c0_35 = arith.constant 0 : index
    %9 = vector.load %arg1[%c0_32, %c0_33, %c0_34, %c0_35] : memref<1x12x12x4xf32, #tpu.memory_space<vmem>>, vector<1x8x8x4xf32>
    %c0_36 = arith.constant 0 : index
    %c0_37 = arith.constant 0 : index
    %c2_38 = arith.constant 2 : index
    %c0_39 = arith.constant 0 : index
    %10 = vector.load %arg1[%c0_36, %c0_37, %c2_38, %c0_39] : memref<1x12x12x4xf32, #tpu.memory_space<vmem>>, vector<1x8x8x4xf32>
    %c0_40 = arith.constant 0 : index
    %c0_41 = arith.constant 0 : index
    %c4 = arith.constant 4 : index
    %c0_42 = arith.constant 0 : index
    %11 = vector.load %arg1[%c0_40, %c0_41, %c4, %c0_42] : memref<1x12x12x4xf32, #tpu.memory_space<vmem>>, vector<1x8x8x4xf32>
    %c0_43 = arith.constant 0 : index
    %c2_44 = arith.constant 2 : index
    %c0_45 = arith.constant 0 : index
    %c0_46 = arith.constant 0 : index
    %12 = vector.load %arg1[%c0_43, %c2_44, %c0_45, %c0_46] : memref<1x12x12x4xf32, #tpu.memory_space<vmem>>, vector<1x8x8x4xf32>
    %c0_47 = arith.constant 0 : index
    %c2_48 = arith.constant 2 : index
    %c2_49 = arith.constant 2 : index
    %c0_50 = arith.constant 0 : index
    %13 = vector.load %arg1[%c0_47, %c2_48, %c2_49, %c0_50] : memref<1x12x12x4xf32, #tpu.memory_space<vmem>>, vector<1x8x8x4xf32>
    %c0_51 = arith.constant 0 : index
    %c2_52 = arith.constant 2 : index
    %c4_53 = arith.constant 4 : index
    %c0_54 = arith.constant 0 : index
    %14 = vector.load %arg1[%c0_51, %c2_52, %c4_53, %c0_54] : memref<1x12x12x4xf32, #tpu.memory_space<vmem>>, vector<1x8x8x4xf32>
    %c0_55 = arith.constant 0 : index
    %c4_56 = arith.constant 4 : index
    %c0_57 = arith.constant 0 : index
    %c0_58 = arith.constant 0 : index
    %15 = vector.load %arg1[%c0_55, %c4_56, %c0_57, %c0_58] : memref<1x12x12x4xf32, #tpu.memory_space<vmem>>, vector<1x8x8x4xf32>
    %c0_59 = arith.constant 0 : index
    %c4_60 = arith.constant 4 : index
    %c2_61 = arith.constant 2 : index
    %c0_62 = arith.constant 0 : index
    %16 = vector.load %arg1[%c0_59, %c4_60, %c2_61, %c0_62] : memref<1x12x12x4xf32, #tpu.memory_space<vmem>>, vector<1x8x8x4xf32>
    %c0_63 = arith.constant 0 : index
    %c4_64 = arith.constant 4 : index
    %c4_65 = arith.constant 4 : index
    %c0_66 = arith.constant 0 : index
    %17 = vector.load %arg1[%c0_63, %c4_64, %c4_65, %c0_66] : memref<1x12x12x4xf32, #tpu.memory_space<vmem>>, vector<1x8x8x4xf32>
    %18 = tpu.concatenate %0, %1, %2, %3, %4, %5, %6, %7, %8, %9, %10, %11, %12, %13, %14, %15 in 3 : vector<1x8x8x4xf32>, vector<1x8x8x4xf32>, vector<1x8x8x4xf32>, vector<1x8x8x4xf32>, vector<1x8x8x4xf32>, vector<1x8x8x4xf32>, vector<1x8x8x4xf32>, vector<1x8x8x4xf32>, vector<1x8x8x4xf32>, vector<1x8x8x4xf32>, vector<1x8x8x4xf32>, vector<1x8x8x4xf32>, vector<1x8x8x4xf32>, vector<1x8x8x4xf32>, vector<1x8x8x4xf32>, vector<1x8x8x4xf32> -> vector<1x8x8x64xf32>
    %19 = tpu.concatenate %16, %17 in 3 : vector<1x8x8x4xf32>, vector<1x8x8x4xf32> -> vector<1x8x8x8xf32>
    %20 = tpu.concatenate %18, %19 in 3 : vector<1x8x8x64xf32>, vector<1x8x8x8xf32> -> vector<1x8x8x72xf32>
    %21 = vector.shape_cast %20 : vector<1x8x8x72xf32> to vector<64x72xf32>
    %c0_67 = arith.constant 0 : index
    %c0_68 = arith.constant 0 : index
    %22 = vector.load %arg2[%c0_67, %c0_68] : memref<72x16xf32, #tpu.memory_space<vmem>>, vector<72x16xf32>
    %cst = arith.constant dense<0.000000e+00> : vector<64x16xf32>
    %23 = tpu.matmul %21, %22, %cst {dimension_numbers = #tpu.dot_dimension_numbers<[1], [0], [0], [1], [0, 0, 1, 1], [], []>, precision = #tpu.contract_precision<fp32>} : vector<64x72xf32>, vector<72x16xf32>, vector<64x16xf32> -> vector<64x16xf32>
    %c0_69 = arith.constant 0 : index
    %c0_70 = arith.constant 0 : index
    %24 = vector.load %arg3[%c0_69, %c0_70] : memref<1x16xf32, #tpu.memory_space<vmem>>, vector<1x16xf32>
    %25 = vector.broadcast %24 : vector<1x16xf32> to vector<64x16xf32>
    %26 = arith.addf %23, %25 : vector<64x16xf32>
    %cst_71 = arith.constant 0.000000e+00 : f32
    %27 = vector.broadcast %cst_71 : f32 to vector<64x16xf32>
    %28 = arith.maximumf %26, %27 : vector<64x16xf32>
    %29 = vector.extract_strided_slice %28 {offsets = [0, 0], sizes = [64, 8], strides = [1, 1]} : vector<64x16xf32> to vector<64x8xf32>
    %30 = vector.extract_strided_slice %28 {offsets = [0, 8], sizes = [64, 8], strides = [1, 1]} : vector<64x16xf32> to vector<64x8xf32>
    %31 = arith.addf %29, %30 : vector<64x8xf32>
    %cst_72 = arith.constant dense<0.000000e+00> : vector<8xf32>
    %32 = vector.multi_reduction <add>, %31, %cst_72 [0] : vector<64x8xf32> to vector<8xf32>
    %33 = vector.shape_cast %32 : vector<8xf32> to vector<1x8xf32>
    %cst_73 = arith.constant 1.562500e-02 : f32
    %34 = vector.broadcast %cst_73 : f32 to vector<1x8xf32>
    %35 = arith.mulf %33, %34 : vector<1x8xf32>
    %c0_74 = arith.constant 0 : index
    %c0_75 = arith.constant 0 : index
    %36 = vector.load %arg4[%c0_74, %c0_75] : memref<8x32xf32, #tpu.memory_space<vmem>>, vector<8x32xf32>
    %cst_76 = arith.constant dense<0.000000e+00> : vector<1x32xf32>
    %37 = tpu.matmul %35, %36, %cst_76 {dimension_numbers = #tpu.dot_dimension_numbers<[1], [0], [0], [1], [0, 0, 1, 1], [], []>, precision = #tpu.contract_precision<fp32>} : vector<1x8xf32>, vector<8x32xf32>, vector<1x32xf32> -> vector<1x32xf32>
    %c0_77 = arith.constant 0 : index
    %c0_78 = arith.constant 0 : index
    %38 = vector.load %arg5[%c0_77, %c0_78] : memref<1x32xf32, #tpu.memory_space<vmem>>, vector<1x32xf32>
    %39 = arith.addf %37, %38 : vector<1x32xf32>
    %cst_79 = arith.constant 0.000000e+00 : f32
    %40 = vector.broadcast %cst_79 : f32 to vector<1x32xf32>
    %41 = arith.maximumf %39, %40 : vector<1x32xf32>
    %c0_80 = arith.constant 0 : index
    %c0_81 = arith.constant 0 : index
    %42 = vector.load %arg6[%c0_80, %c0_81] : memref<32x8xf32, #tpu.memory_space<vmem>>, vector<32x8xf32>
    %cst_82 = arith.constant dense<0.000000e+00> : vector<1x8xf32>
    %43 = tpu.matmul %41, %42, %cst_82 {dimension_numbers = #tpu.dot_dimension_numbers<[1], [0], [0], [1], [0, 0, 1, 1], [], []>, precision = #tpu.contract_precision<fp32>} : vector<1x32xf32>, vector<32x8xf32>, vector<1x8xf32> -> vector<1x8xf32>
    %44 = math.exp %43 : vector<1x8xf32>
    %c0_83 = arith.constant 0 : index
    %c0_84 = arith.constant 0 : index
    %45 = vector.load %arg7[%c0_83, %c0_84] : memref<32x8xf32, #tpu.memory_space<vmem>>, vector<32x8xf32>
    %cst_85 = arith.constant dense<0.000000e+00> : vector<1x8xf32>
    %46 = tpu.matmul %41, %45, %cst_85 {dimension_numbers = #tpu.dot_dimension_numbers<[1], [0], [0], [1], [0, 0, 1, 1], [], []>, precision = #tpu.contract_precision<fp32>} : vector<1x32xf32>, vector<32x8xf32>, vector<1x8xf32> -> vector<1x8xf32>
    %47 = math.exp %46 : vector<1x8xf32>
    %48 = arith.addf %44, %47 : vector<1x8xf32>
    %49 = arith.divf %44, %48 : vector<1x8xf32>
    %cst_86 = arith.constant 1.000000e+00 : f32
    %50 = vector.broadcast %cst_86 : f32 to vector<1x8xf32>
    %51 = arith.subf %50, %49 : vector<1x8xf32>
    %52 = vector.shape_cast %29 : vector<64x8xf32> to vector<1x8x8x8xf32>
    %53 = vector.shape_cast %30 : vector<64x8xf32> to vector<1x8x8x8xf32>
    %54 = vector.shape_cast %31 : vector<64x8xf32> to vector<1x8x8x8xf32>
    %c0_87 = arith.constant 0 : index
    %c0_88 = arith.constant 0 : index
    %55 = vector.load %arg8[%c0_87, %c0_88] : memref<1x8xf32, #tpu.memory_space<vmem>>, vector<1x8xf32>
    %56 = vector.shape_cast %55 : vector<1x8xf32> to vector<1x1x1x8xf32>
    %57 = vector.broadcast %56 : vector<1x1x1x8xf32> to vector<1x8x8x8xf32>
    %58 = arith.mulf %54, %57 : vector<1x8x8x8xf32>
    %cst_89 = arith.constant dense<0.000000e+00> : vector<1x8x8xf32>
    %59 = vector.multi_reduction <add>, %58, %cst_89 [3] : vector<1x8x8x8xf32> to vector<1x8x8xf32>
    %cst_90 = arith.constant 0.000000e+00 : f32
    %60 = vector.broadcast %cst_90 : f32 to vector<1x8x8xf32>
    %61 = arith.subf %60, %59 : vector<1x8x8xf32>
    %62 = math.exp %61 : vector<1x8x8xf32>
    %cst_91 = arith.constant 1.000000e+00 : f32
    %63 = vector.broadcast %cst_91 : f32 to vector<1x8x8xf32>
    %64 = arith.addf %63, %62 : vector<1x8x8xf32>
    %cst_92 = arith.constant 1.000000e+00 : f32
    %65 = vector.broadcast %cst_92 : f32 to vector<1x8x8xf32>
    %66 = arith.divf %65, %64 : vector<1x8x8xf32>
    %67 = vector.shape_cast %66 : vector<1x8x8xf32> to vector<8x8xf32>
    %c0_93 = arith.constant 0 : index
    %c0_94 = arith.constant 0 : index
    %c0_95 = arith.constant 0 : index
    %68 = vector.load %arg9[%c0_93, %c0_94, %c0_95] : memref<1x8x8xf32, #tpu.memory_space<vmem>>, vector<1x8x8xf32>
    %69 = vector.shape_cast %68 : vector<1x8x8xf32> to vector<8x8xf32>
    %cst_96 = arith.constant dense<0.000000e+00> : vector<8x8xf32>
    %70 = tpu.matmul %67, %69, %cst_96 {dimension_numbers = #tpu.dot_dimension_numbers<[1], [0], [0], [1], [0, 0, 1, 1], [], []>, precision = #tpu.contract_precision<fp32>} : vector<8x8xf32>, vector<8x8xf32>, vector<8x8xf32> -> vector<8x8xf32>
    %c0_97 = arith.constant 0 : index
    %c0_98 = arith.constant 0 : index
    %c0_99 = arith.constant 0 : index
    %71 = vector.load %arg10[%c0_97, %c0_98, %c0_99] : memref<1x8x8xf32, #tpu.memory_space<vmem>>, vector<1x8x8xf32>
    %72 = vector.shape_cast %71 : vector<1x8x8xf32> to vector<8x8xf32>
    %cst_100 = arith.constant dense<0.000000e+00> : vector<8x8xf32>
    %73 = tpu.matmul %67, %72, %cst_100 {dimension_numbers = #tpu.dot_dimension_numbers<[1], [0], [0], [1], [0, 0, 1, 1], [], []>, precision = #tpu.contract_precision<fp32>} : vector<8x8xf32>, vector<8x8xf32>, vector<8x8xf32> -> vector<8x8xf32>
    %74 = arith.addf %70, %73 : vector<8x8xf32>
    %75 = arith.divf %70, %74 : vector<8x8xf32>
    %cst_101 = arith.constant 1.000000e+00 : f32
    %76 = vector.broadcast %cst_101 : f32 to vector<8x8xf32>
    %77 = arith.subf %76, %75 : vector<8x8xf32>
    %78 = vector.shape_cast %49 : vector<1x8xf32> to vector<1x1x1x8xf32>
    %79 = vector.broadcast %78 : vector<1x1x1x8xf32> to vector<1x8x8x8xf32>
    %80 = arith.mulf %52, %79 : vector<1x8x8x8xf32>
    %81 = vector.shape_cast %51 : vector<1x8xf32> to vector<1x1x1x8xf32>
    %82 = vector.broadcast %81 : vector<1x1x1x8xf32> to vector<1x8x8x8xf32>
    %83 = arith.mulf %53, %82 : vector<1x8x8x8xf32>
    %84 = arith.addf %80, %83 : vector<1x8x8x8xf32>
    %85 = vector.shape_cast %75 : vector<8x8xf32> to vector<1x8x8x1xf32>
    %86 = vector.broadcast %85 : vector<1x8x8x1xf32> to vector<1x8x8x8xf32>
    %87 = arith.mulf %52, %86 : vector<1x8x8x8xf32>
    %88 = vector.shape_cast %77 : vector<8x8xf32> to vector<1x8x8x1xf32>
    %89 = vector.broadcast %88 : vector<1x8x8x1xf32> to vector<1x8x8x8xf32>
    %90 = arith.mulf %53, %89 : vector<1x8x8x8xf32>
    %91 = arith.addf %87, %90 : vector<1x8x8x8xf32>
    %92 = arith.addf %84, %91 : vector<1x8x8x8xf32>
    %c0_102 = arith.constant 0 : index
    %c0_103 = arith.constant 0 : index
    %c0_104 = arith.constant 0 : index
    %c0_105 = arith.constant 0 : index
    %93 = vector.load %arg11[%c0_102, %c0_103, %c0_104, %c0_105] : memref<1x8x8x8xf32, #tpu.memory_space<vmem>>, vector<1x8x8x8xf32>
    tpu.vector_store %arg11[%c0_102, %c0_103, %c0_104, %c0_105], %92 {strides = array<i32>} : memref<1x8x8x8xf32, #tpu.memory_space<vmem>>, vector<1x8x8x8xf32>,
    return
  }
  func.func @transform_0(%arg0: i32) -> (i32, i32, i32, i32) {
    %c0_i32 = arith.constant 0 : i32
    %c0_i32_0 = arith.constant 0 : i32
    %c0_i32_1 = arith.constant 0 : i32
    %c0_i32_2 = arith.constant 0 : i32
    return %arg0, %c0_i32, %c0_i32_0, %c0_i32_1 : i32, i32, i32, i32
  }
  func.func @transform_1(%arg0: i32) -> (i32, i32) {
    %c0_i32 = arith.constant 0 : i32
    %c0_i32_0 = arith.constant 0 : i32
    %c0_i32_1 = arith.constant 0 : i32
    return %c0_i32, %c0_i32_0 : i32, i32
  }
  func.func @transform_2(%arg0: i32) -> (i32, i32) {
    %c0_i32 = arith.constant 0 : i32
    %c0_i32_0 = arith.constant 0 : i32
    %c0_i32_1 = arith.constant 0 : i32
    return %c0_i32, %c0_i32_0 : i32, i32
  }
  func.func @transform_3(%arg0: i32) -> (i32, i32) {
    %c0_i32 = arith.constant 0 : i32
    %c0_i32_0 = arith.constant 0 : i32
    %c0_i32_1 = arith.constant 0 : i32
    return %c0_i32, %c0_i32_0 : i32, i32
  }
  func.func @transform_4(%arg0: i32) -> (i32, i32) {
    %c0_i32 = arith.constant 0 : i32
    %c0_i32_0 = arith.constant 0 : i32
    %c0_i32_1 = arith.constant 0 : i32
    return %c0_i32, %c0_i32_0 : i32, i32
  }
  func.func @transform_5(%arg0: i32) -> (i32, i32) {
    %c0_i32 = arith.constant 0 : i32
    %c0_i32_0 = arith.constant 0 : i32
    %c0_i32_1 = arith.constant 0 : i32
    return %c0_i32, %c0_i32_0 : i32, i32
  }
  func.func @transform_6(%arg0: i32) -> (i32, i32) {
    %c0_i32 = arith.constant 0 : i32
    %c0_i32_0 = arith.constant 0 : i32
    %c0_i32_1 = arith.constant 0 : i32
    return %c0_i32, %c0_i32_0 : i32, i32
  }
  func.func @transform_7(%arg0: i32) -> (i32, i32) {
    %c0_i32 = arith.constant 0 : i32
    %c0_i32_0 = arith.constant 0 : i32
    %c0_i32_1 = arith.constant 0 : i32
    return %c0_i32, %c0_i32_0 : i32, i32
  }
  func.func @transform_8(%arg0: i32) -> (i32, i32, i32) {
    %c0_i32 = arith.constant 0 : i32
    %c0_i32_0 = arith.constant 0 : i32
    %c0_i32_1 = arith.constant 0 : i32
    return %arg0, %c0_i32, %c0_i32_0 : i32, i32, i32
  }
  func.func @transform_9(%arg0: i32) -> (i32, i32, i32) {
    %c0_i32 = arith.constant 0 : i32
    %c0_i32_0 = arith.constant 0 : i32
    %c0_i32_1 = arith.constant 0 : i32
    return %arg0, %c0_i32, %c0_i32_0 : i32, i32, i32
  }
  func.func @transform_10(%arg0: i32) -> (i32, i32, i32, i32) {
    %c0_i32 = arith.constant 0 : i32
    %c0_i32_0 = arith.constant 0 : i32
    %c0_i32_1 = arith.constant 0 : i32
    %c0_i32_2 = arith.constant 0 : i32
    return %arg0, %c0_i32, %c0_i32_0, %c0_i32_1 : i32, i32, i32, i32
  }
}

</mosaic_0001>

<llo_original>
// kernel: tpu_custom_call.1
$region0: #{tpu_custom_call.1}
  #allocation0 [shape = 'u32[]', space=smem, size = 0x4, offset = 0x4, fixed_abs, tag = 'smem constant byte address 0x4 - core index']
  #allocation1 [shape = 'u32[144,128]{1,0:T(1,128)}', space=vmem, size = 0x12000, scoped, tag = 'internal scratch']
  %s0 = inlined_call_operand.vmem [shape: f32[2,12,12,4], index: 0, kind: input, shape index: {}]
  %s1 = inlined_call_operand.vmem [shape: f32[72,16], index: 1, kind: input, shape index: {}]
  %s2 = inlined_call_operand.vmem [shape: f32[1,16], index: 2, kind: input, shape index: {}]
  %s3 = inlined_call_operand.vmem [shape: f32[8,32], index: 3, kind: input, shape index: {}]
  %s4 = inlined_call_operand.vmem [shape: f32[1,32], index: 4, kind: input, shape index: {}]
  %s5 = inlined_call_operand.vmem [shape: f32[32,8], index: 5, kind: input, shape index: {}]
  %s6 = inlined_call_operand.vmem [shape: f32[32,8], index: 6, kind: input, shape index: {}]
  %s7 = inlined_call_operand.vmem [shape: f32[1,8], index: 7, kind: input, shape index: {}]
  %s8 = inlined_call_operand.vmem [shape: f32[2,8,8], index: 8, kind: input, shape index: {}]
  %s9 = inlined_call_operand.vmem [shape: f32[2,8,8], index: 9, kind: input, shape index: {}]
  %s10 = inlined_call_operand.hbm [shape: f32[2,8,8,8], index: 10, kind: output, shape index: {}]
  %s11 = sld [smem:[#allocation0]]
  $region73: #{tpu_custom_call.1} parent=0
    _
  %s13 = ssub.s32 1, %s11
  %s14 = scalar_select 0, %s13, %s11
  $region1: #{tpu_custom_call.1} parent=0
    #allocation2 [shape = 'u8[65536]{0}', space=vmem, size = 0x10000, scoped, tag = 'output window, operand 0']
    #allocation3 [shape = 's32[2]{0}', space=sflag, size = 0x8, scoped, tag = 'scoped memory for tpu_custom_call.1']
    %15 = vsyncpa [#allocation3], 0
    %s16 = scalar_lea.sflag [#allocation3], 1
    %17 = vsyncpa %s16, 0
    loop: start=0, step=1, limit=4
    $region2: #{tpu_custom_call.1} parent=1 // loop_pre_header
      _
    $region3: #{tpu_custom_call.1} parent=1 // loop_header
      %s19 = sphi 0, %s23
      %p20 = scmp.ge.s32.totalorder %s19, 4
      %s29 = sphi 0, %s31
      %s32 = sphi 0, %s29
      %s33 = sphi 0, %s32
      %s49 = sphi 0, %s33
      %s53 = sphi 0, %s53
      %s55 = sphi 0, %s53
      %s56 = sphi 0, %s55
      %s70 = sphi 0, %s56
      %s74 = sphi 0, %s74
      %s76 = sphi 0, %s74
      %s77 = sphi 0, %s76
      %s91 = sphi 0, %s77
      %s95 = sphi 0, %s95
      %s97 = sphi 0, %s95
      %s98 = sphi 0, %s97
      %s112 = sphi 0, %s98
      %s116 = sphi 0, %s116
      %s118 = sphi 0, %s116
      %s119 = sphi 0, %s118
      %s133 = sphi 0, %s119
      %s137 = sphi 0, %s137
      %s139 = sphi 0, %s137
      %s140 = sphi 0, %s139
      %s154 = sphi 0, %s140
      %s158 = sphi 0, %s158
      %s160 = sphi 0, %s158
      %s161 = sphi 0, %s160
      %s175 = sphi 0, %s161
      %s179 = sphi 0, %s179
      %s181 = sphi 0, %s179
      %s182 = sphi 0, %s181
      %s196 = sphi 0, %s182
      %s202 = sphi 0, %s204
      %s205 = sphi 0, %s202
      %s206 = sphi 0, %s205
      %s222 = sphi 0, %s206
      %s228 = sphi 0, %s230
      %s231 = sphi 0, %s228
      %s232 = sphi 0, %s231
      %s248 = sphi 0, %s232
      %s254 = sphi 0, %s256
      %s257 = sphi 0, %s254
      %s258 = sphi 0, %s257
      %s274 = sphi 0, %s258
    $region4: #{tpu_custom_call.1} parent=1 // loop_header_branch
      %22 = sbr.rel (%p20) target = $region8
    $region5: #{tpu_custom_call.1} parent=1 // loop_body
      %s24 = ssub.s32 %s19, 1
      %s25 = ssub.s32 %s19, 2
      %s26 = sadd.s32 %s19, 1
      %s27 = ssub.s32 %s19, %s26
      %p28 = scmp.eq.s32.totalorder %s27, 0
      %s30 = sadd.s32 %s29, 1
      %s31 = scalar_select %p28, %s29, %s30
      %p34 = pneg %p28
      %p35 = scmp.eq.s32.totalorder %s19, 1
      %p36 = por %p34, %p35
      %p37 = scmp.ne.s32.totalorder %s29, %s32
      %p38 = scmp.eq.s32.totalorder %s19, 0
      %p39 = por %p37, %p38
      %p40 = scmp.ne.s32.totalorder %s29, %s32
      %p41 = scmp.eq.s32.totalorder %s24, 1
      %p42 = por %p40, %p41
      %p43 = scmp.ne.s32.totalorder %s32, %s33
      %p44 = scmp.eq.s32.totalorder %s24, 0
      %p45 = por %p43, %p44
      %p46 = scmp.ne.s32.totalorder %s32, %s33
      %p47 = scmp.eq.s32.totalorder %s25, 1
      %p48 = por %p46, %p47
      %p50 = scmp.ne.s32.totalorder %s33, %s49
      %p51 = scmp.eq.s32.totalorder %s25, 0
      %p52 = por %p50, %p51
      %s54 = sadd.s32 %s53, 1
      %p57 = scmp.eq.s32.totalorder %s19, 1
      %p58 = scmp.ne.s32.totalorder %s53, %s55
      %p59 = scmp.eq.s32.totalorder %s19, 0
      %p60 = por %p58, %p59
      %p61 = scmp.ne.s32.totalorder %s53, %s55
      %p62 = scmp.eq.s32.totalorder %s24, 1
      %p63 = por %p61, %p62
      %p64 = scmp.ne.s32.totalorder %s55, %s56
      %p65 = scmp.eq.s32.totalorder %s24, 0
      %p66 = por %p64, %p65
      %p67 = scmp.ne.s32.totalorder %s55, %s56
      %p68 = scmp.eq.s32.totalorder %s25, 1
      %p69 = por %p67, %p68
      %p71 = scmp.ne.s32.totalorder %s56, %s70
      %p72 = scmp.eq.s32.totalorder %s25, 0
      %p73 = por %p71, %p72
      %s75 = sadd.s32 %s74, 1
      %p78 = scmp.eq.s32.totalorder %s19, 1
      %p79 = scmp.ne.s32.totalorder %s74, %s76
      %p80 = scmp.eq.s32.totalorder %s19, 0
      %p81 = por %p79, %p80
      %p82 = scmp.ne.s32.totalorder %s74, %s76
      %p83 = scmp.eq.s32.totalorder %s24, 1
      %p84 = por %p82, %p83
      %p85 = scmp.ne.s32.totalorder %s76, %s77
      %p86 = scmp.eq.s32.totalorder %s24, 0
      %p87 = por %p85, %p86
      %p88 = scmp.ne.s32.totalorder %s76, %s77
      %p89 = scmp.eq.s32.totalorder %s25, 1
      %p90 = por %p88, %p89
      %p92 = scmp.ne.s32.totalorder %s77, %s91
      %p93 = scmp.eq.s32.totalorder %s25, 0
      %p94 = por %p92, %p93
      %s96 = sadd.s32 %s95, 1
      %p99 = scmp.eq.s32.totalorder %s19, 1
      %p100 = scmp.ne.s32.totalorder %s95, %s97
      %p101 = scmp.eq.s32.totalorder %s19, 0
      %p102 = por %p100, %p101
      %p103 = scmp.ne.s32.totalorder %s95, %s97
      %p104 = scmp.eq.s32.totalorder %s24, 1
      %p105 = por %p103, %p104
      %p106 = scmp.ne.s32.totalorder %s97, %s98
      %p107 = scmp.eq.s32.totalorder %s24, 0
      %p108 = por %p106, %p107
      %p109 = scmp.ne.s32.totalorder %s97, %s98
      %p110 = scmp.eq.s32.totalorder %s25, 1
      %p111 = por %p109, %p110
      %p113 = scmp.ne.s32.totalorder %s98, %s112
      %p114 = scmp.eq.s32.totalorder %s25, 0
      %p115 = por %p113, %p114
      %s117 = sadd.s32 %s116, 1
      %p120 = scmp.eq.s32.totalorder %s19, 1
      %p121 = scmp.ne.s32.totalorder %s116, %s118
      %p122 = scmp.eq.s32.totalorder %s19, 0
      %p123 = por %p121, %p122
      %p124 = scmp.ne.s32.totalorder %s116, %s118
      %p125 = scmp.eq.s32.totalorder %s24, 1
      %p126 = por %p124, %p125
      %p127 = scmp.ne.s32.totalorder %s118, %s119
      %p128 = scmp.eq.s32.totalorder %s24, 0
      %p129 = por %p127, %p128
      %p130 = scmp.ne.s32.totalorder %s118, %s119
      %p131 = scmp.eq.s32.totalorder %s25, 1
      %p132 = por %p130, %p131
      %p134 = scmp.ne.s32.totalorder %s119, %s133
      %p135 = scmp.eq.s32.totalorder %s25, 0
      %p136 = por %p134, %p135
      %s138 = sadd.s32 %s137, 1
      %p141 = scmp.eq.s32.totalorder %s19, 1
      %p142 = scmp.ne.s32.totalorder %s137, %s139
      %p143 = scmp.eq.s32.totalorder %s19, 0
      %p144 = por %p142, %p143
      %p145 = scmp.ne.s32.totalorder %s137, %s139
      %p146 = scmp.eq.s32.totalorder %s24, 1
      %p147 = por %p145, %p146
      %p148 = scmp.ne.s32.totalorder %s139, %s140
      %p149 = scmp.eq.s32.totalorder %s24, 0
      %p150 = por %p148, %p149
      %p151 = scmp.ne.s32.totalorder %s139, %s140
      %p152 = scmp.eq.s32.totalorder %s25, 1
      %p153 = por %p151, %p152
      %p155 = scmp.ne.s32.totalorder %s140, %s154
      %p156 = scmp.eq.s32.totalorder %s25, 0
      %p157 = por %p155, %p156
      %s159 = sadd.s32 %s158, 1
      %p162 = scmp.eq.s32.totalorder %s19, 1
      %p163 = scmp.ne.s32.totalorder %s158, %s160
      %p164 = scmp.eq.s32.totalorder %s19, 0
      %p165 = por %p163, %p164
      %p166 = scmp.ne.s32.totalorder %s158, %s160
      %p167 = scmp.eq.s32.totalorder %s24, 1
      %p168 = por %p166, %p167
      %p169 = scmp.ne.s32.totalorder %s160, %s161
      %p170 = scmp.eq.s32.totalorder %s24, 0
      %p171 = por %p169, %p170
      %p172 = scmp.ne.s32.totalorder %s160, %s161
      %p173 = scmp.eq.s32.totalorder %s25, 1
      %p174 = por %p172, %p173
      %p176 = scmp.ne.s32.totalorder %s161, %s175
      %p177 = scmp.eq.s32.totalorder %s25, 0
      %p178 = por %p176, %p177
      %s180 = sadd.s32 %s179, 1
      %p183 = scmp.eq.s32.totalorder %s19, 1
      %p184 = scmp.ne.s32.totalorder %s179, %s181
      %p185 = scmp.eq.s32.totalorder %s19, 0
      %p186 = por %p184, %p185
      %p187 = scmp.ne.s32.totalorder %s179, %s181
      %p188 = scmp.eq.s32.totalorder %s24, 1
      %p189 = por %p187, %p188
      %p190 = scmp.ne.s32.totalorder %s181, %s182
      %p191 = scmp.eq.s32.totalorder %s24, 0
      %p192 = por %p190, %p191
      %p193 = scmp.ne.s32.totalorder %s181, %s182
      %p194 = scmp.eq.s32.totalorder %s25, 1
      %p195 = por %p193, %p194
      %p197 = scmp.ne.s32.totalorder %s182, %s196
      %p198 = scmp.eq.s32.totalorder %s25, 0
      %p199 = por %p197, %p198
      %s200 = ssub.s32 %s19, %s26
      %p201 = scmp.eq.s32.totalorder %s200, 0
      %s203 = sadd.s32 %s202, 1
      %s204 = scalar_select %p201, %s202, %s203
      %p207 = pneg %p201
      %p208 = scmp.eq.s32.totalorder %s19, 1
      %p209 = por %p207, %p208
      %p210 = scmp.ne.s32.totalorder %s202, %s205
      %p211 = scmp.eq.s32.totalorder %s19, 0
      %p212 = por %p210, %p211
      %p213 = scmp.ne.s32.totalorder %s202, %s205
      %p214 = scmp.eq.s32.totalorder %s24, 1
      %p215 = por %p213, %p214
      %p216 = scmp.ne.s32.totalorder %s205, %s206
      %p217 = scmp.eq.s32.totalorder %s24, 0
      %p218 = por %p216, %p217
      %p219 = scmp.ne.s32.totalorder %s205, %s206
      %p220 = scmp.eq.s32.totalorder %s25, 1
      %p221 = por %p219, %p220
      %p223 = scmp.ne.s32.totalorder %s206, %s222
      %p224 = scmp.eq.s32.totalorder %s25, 0
      %p225 = por %p223, %p224
      %s226 = ssub.s32 %s19, %s26
      %p227 = scmp.eq.s32.totalorder %s226, 0
      %s229 = sadd.s32 %s228, 1
      %s230 = scalar_select %p227, %s228, %s229
      %p233 = pneg %p227
      %p234 = scmp.eq.s32.totalorder %s19, 1
      %p235 = por %p233, %p234
      %p236 = scmp.ne.s32.totalorder %s228, %s231
      %p237 = scmp.eq.s32.totalorder %s19, 0
      %p238 = por %p236, %p237
      %p239 = scmp.ne.s32.totalorder %s228, %s231
      %p240 = scmp.eq.s32.totalorder %s24, 1
      %p241 = por %p239, %p240
      %p242 = scmp.ne.s32.totalorder %s231, %s232
      %p243 = scmp.eq.s32.totalorder %s24, 0
      %p244 = por %p242, %p243
      %p245 = scmp.ne.s32.totalorder %s231, %s232
      %p246 = scmp.eq.s32.totalorder %s25, 1
      %p247 = por %p245, %p246
      %p249 = scmp.ne.s32.totalorder %s232, %s248
      %p250 = scmp.eq.s32.totalorder %s25, 0
      %p251 = por %p249, %p250
      %s252 = ssub.s32 %s19, %s26
      %p253 = scmp.eq.s32.totalorder %s252, 0
      %s255 = sadd.s32 %s254, 1
      %s256 = scalar_select %p253, %s254, %s255
      %p259 = pneg %p253
      %p260 = scmp.eq.s32.totalorder %s19, 1
      %p261 = por %p259, %p260
      %p262 = scmp.ne.s32.totalorder %s254, %s257
      %p263 = scmp.eq.s32.totalorder %s19, 0
      %p264 = por %p262, %p263
      %p265 = scmp.ne.s32.totalorder %s254, %s257
      %p266 = scmp.eq.s32.totalorder %s24, 1
      %p267 = por %p265, %p266
      %p268 = scmp.ne.s32.totalorder %s257, %s258
      %p269 = scmp.eq.s32.totalorder %s24, 0
      %p270 = por %p268, %p269
      %p271 = scmp.ne.s32.totalorder %s257, %s258
      %p272 = scmp.eq.s32.totalorder %s25, 1
      %p273 = por %p271, %p272
      %p275 = scmp.ne.s32.totalorder %s258, %s274
      %p276 = scmp.eq.s32.totalorder %s25, 0
      %p277 = por %p275, %p276
      %p278 = scmp.le.s32.totalorder 1, %s19
      %p279 = scmp.lt.s32.totalorder %s19, 3
      %p280 = pnand %p278, %p279
      %p281 = pneg %p280
      // Predicated region
      $region9: #{tpu_custom_call.1} parent=5 // pred_check
        _
      $region10: #{tpu_custom_call.1} parent=5 // pred_check_branch
        %283 = sbr.rel (%p280) target = $region12
      $region11: #{tpu_custom_call.1} parent=5 // pred_region
        %s284 = ssub.s32 %s19, 1
        // Predicated region
        $region13: #{tpu_custom_call.1} parent=11 // pred_check
          %p285 = pneg %p66
        $region14: #{tpu_custom_call.1} parent=11 // pred_check_branch
          %287 = sbr.rel (%p285) target = $region16
        $region15: #{tpu_custom_call.1} parent=11 // pred_region
          _
        $region16: #{tpu_custom_call.1} parent=11 // pred_fallthru
          _
        // Predicated region
        $region17: #{tpu_custom_call.1} parent=11 // pred_check
          %p288 = pneg %p87
        $region18: #{tpu_custom_call.1} parent=11 // pred_check_branch
          %290 = sbr.rel (%p288) target = $region20
        $region19: #{tpu_custom_call.1} parent=11 // pred_region
          _
        $region20: #{tpu_custom_call.1} parent=11 // pred_fallthru
          _
        // Predicated region
        $region21: #{tpu_custom_call.1} parent=11 // pred_check
          %p291 = pneg %p108
        $region22: #{tpu_custom_call.1} parent=11 // pred_check_branch
          %293 = sbr.rel (%p291) target = $region24
        $region23: #{tpu_custom_call.1} parent=11 // pred_region
          _
        $region24: #{tpu_custom_call.1} parent=11 // pred_fallthru
          _
        // Predicated region
        $region25: #{tpu_custom_call.1} parent=11 // pred_check
          %p294 = pneg %p129
        $region26: #{tpu_custom_call.1} parent=11 // pred_check_branch
          %296 = sbr.rel (%p294) target = $region28
        $region27: #{tpu_custom_call.1} parent=11 // pred_region
          _
        $region28: #{tpu_custom_call.1} parent=11 // pred_fallthru
          _
        // Predicated region
        $region29: #{tpu_custom_call.1} parent=11 // pred_check
          %p297 = pneg %p150
        $region30: #{tpu_custom_call.1} parent=11 // pred_check_branch
          %299 = sbr.rel (%p297) target = $region32
        $region31: #{tpu_custom_call.1} parent=11 // pred_region
          _
        $region32: #{tpu_custom_call.1} parent=11 // pred_fallthru
          _
        // Predicated region
        $region33: #{tpu_custom_call.1} parent=11 // pred_check
          %p300 = pneg %p171
        $region34: #{tpu_custom_call.1} parent=11 // pred_check_branch
          %302 = sbr.rel (%p300) target = $region36
        $region35: #{tpu_custom_call.1} parent=11 // pred_region
          _
        $region36: #{tpu_custom_call.1} parent=11 // pred_fallthru
          _
        // Predicated region
        $region37: #{tpu_custom_call.1} parent=11 // pred_check
          %p303 = pneg %p192
        $region38: #{tpu_custom_call.1} parent=11 // pred_check_branch
          %305 = sbr.rel (%p303) target = $region40
        $region39: #{tpu_custom_call.1} parent=11 // pred_region
          _
        $region40: #{tpu_custom_call.1} parent=11 // pred_fallthru
          _
      $region12: #{tpu_custom_call.1} parent=5 // pred_fallthru
        _
      %p306 = scmp.lt.s32.totalorder %s19, 2
      // Predicated region
      $region41: #{tpu_custom_call.1} parent=5 // pred_check
        %p307 = pneg %p306
      $region42: #{tpu_custom_call.1} parent=5 // pred_check_branch
        %309 = sbr.rel (%p307) target = $region44
      $region43: #{tpu_custom_call.1} parent=5 // pred_region
        // Predicated region
        $region45: #{tpu_custom_call.1} parent=43 // pred_check
          %p310 = pneg %p39
        $region46: #{tpu_custom_call.1} parent=43 // pred_check_branch
          %312 = sbr.rel (%p310) target = $region48
        $region47: #{tpu_custom_call.1} parent=43 // pred_region
          %p313 = scmp.lt.s32.totalorder %s19, 1
          %s314 = scalar_select %p313, %s19, 1
          %s315 = smul.addr %s314, 24
          %s316 = smul.addr %s315, 8
          %s317 = scalar_lea.vmem %s0, %s316
        $region48: #{tpu_custom_call.1} parent=43 // pred_fallthru
          _
        // Predicated region
        $region49: #{tpu_custom_call.1} parent=43 // pred_check
          %p318 = pneg %p212
        $region50: #{tpu_custom_call.1} parent=43 // pred_check_branch
          %320 = sbr.rel (%p318) target = $region52
        $region51: #{tpu_custom_call.1} parent=43 // pred_region
          %p321 = scmp.lt.s32.totalorder %s19, 1
          %s322 = scalar_select %p321, %s19, 1
          %s323 = smul.addr %s322, 8
          %s324 = scalar_lea.vmem %s8, %s323
        $region52: #{tpu_custom_call.1} parent=43 // pred_fallthru
          _
        // Predicated region
        $region53: #{tpu_custom_call.1} parent=43 // pred_check
          %p325 = pneg %p238
        $region54: #{tpu_custom_call.1} parent=43 // pred_check_branch
          %327 = sbr.rel (%p325) target = $region56
        $region55: #{tpu_custom_call.1} parent=43 // pred_region
          %p328 = scmp.lt.s32.totalorder %s19, 1
          %s329 = scalar_select %p328, %s19, 1
          %s330 = smul.addr %s329, 8
          %s331 = scalar_lea.vmem %s9, %s330
        $region56: #{tpu_custom_call.1} parent=43 // pred_fallthru
          _
      $region44: #{tpu_custom_call.1} parent=5 // pred_fallthru
        _
      %p332 = scmp.le.s32.totalorder 1, %s19
      %p333 = scmp.lt.s32.totalorder %s19, 3
      %p334 = pnand %p332, %p333
      %p335 = pneg %p334
      // Predicated region
      $region57: #{tpu_custom_call.1} parent=5 // pred_check
        _
      $region58: #{tpu_custom_call.1} parent=5 // pred_check_branch
        %337 = sbr.rel (%p334) target = $region60
      $region59: #{tpu_custom_call.1} parent=5 // pred_region
        %s338 = ssub.s32 %s19, 1
        %p339 = scmp.lt.s32.totalorder %s24, 1
        %s340 = scalar_select %p339, %s24, 1
        %s341 = smul.addr %s340, 24
        %s342 = smul.addr %s341, 8
        %s343 = scalar_lea.vmem %s0, %s342
        %p344 = pneg %p45
        %p345 = pneg %p42
        %p346 = pneg %p66
        %p347 = pneg %p63
        %p348 = pneg %p87
        %p349 = pneg %p84
        %p350 = pneg %p108
        %p351 = pneg %p105
        %p352 = pneg %p129
        %p353 = pneg %p126
        %p354 = pneg %p150
        %p355 = pneg %p147
        %p356 = pneg %p171
        %p357 = pneg %p168
        %p358 = pneg %p192
        %p359 = pneg %p189
        %p360 = scmp.lt.s32.totalorder %s24, 1
        %s361 = scalar_select %p360, %s24, 1
        %s362 = smul.addr %s361, 8
        %s363 = scalar_lea.vmem %s8, %s362
        %p364 = pneg %p218
        %p365 = pneg %p215
        %p366 = scmp.lt.s32.totalorder %s24, 1
        %s367 = scalar_select %p366, %s24, 1
        %s368 = smul.addr %s367, 8
        %s369 = scalar_lea.vmem %s9, %s368
        %p370 = pneg %p244
        %p371 = pneg %p241
        %p372 = pneg %p270
        %p373 = pneg %p267
        %s374 = sand.u32 %s257, 1
        %s375 = scalar_lea.sflag [#allocation3], %s374
        %s376 = sand.u32 %s257, 1
        %s377 = smul.addr %s376, 64
        %s378 = scalar_lea.vmem [#allocation2], %s377
        %p379 = scmp.lt.s32.totalorder %s24, 1
        %s380 = scalar_select %p379, %s24, 1
        %s381 = smul.addr %s380, 24
        %s382 = smul.addr %s381, 8
        %s383 = scalar_lea.vmem %s0, %s382
        %p384 = scmp.lt.s32.totalorder %s24, 1
        %s385 = scalar_select %p384, %s24, 1
        %s386 = smul.addr %s385, 8
        %s387 = scalar_lea.vmem %s8, %s386
        %p388 = scmp.lt.s32.totalorder %s24, 1
        %s389 = scalar_select %p388, %s24, 1
        %s390 = smul.addr %s389, 8
        %s391 = scalar_lea.vmem %s9, %s390
        %s392 = scalar_lea.vmem %s383, 16
        %v393 = vld [vmem:[%s392 + $0x1] sm:$0xff]
        %v394 = vld [vmem:[%s392 + $0x11] sm:$0xff]
        %v395 = vld [vmem:[%s392 + $0x21] sm:$0xff]
        %v396 = vld [vmem:[%s392 + $0x31] sm:$0xff]
        %v397 = vld [vmem:[%s392 + $0x41] sm:$0xff]
        %v398 = vld [vmem:[%s392 + $0x51] sm:$0xff]
        %v399 = vld [vmem:[%s392 + $0x61] sm:$0xff]
        %v400 = vld [vmem:[%s392 + $0x71] sm:$0xff]
        %v401 = vld [vmem:[%s392 + $0x2] sm:$0xff]
        %v402 = vld [vmem:[%s392 + $0x12] sm:$0xff]
        %v403 = vld [vmem:[%s392 + $0x22] sm:$0xff]
        %v404 = vld [vmem:[%s392 + $0x32] sm:$0xff]
        %v405 = vld [vmem:[%s392 + $0x42] sm:$0xff]
        %v406 = vld [vmem:[%s392 + $0x52] sm:$0xff]
        %v407 = vld [vmem:[%s392 + $0x62] sm:$0xff]
        %v408 = vld [vmem:[%s392 + $0x72] sm:$0xff]
        %v409 = vld [vmem:[%s392 + $0x3] sm:$0xff]
        %v410 = vld [vmem:[%s392 + $0x13] sm:$0xff]
        %v411 = vld [vmem:[%s392 + $0x23] sm:$0xff]
        %v412 = vld [vmem:[%s392 + $0x33] sm:$0xff]
        %v413 = vld [vmem:[%s392 + $0x43] sm:$0xff]
        %v414 = vld [vmem:[%s392 + $0x53] sm:$0xff]
        %v415 = vld [vmem:[%s392 + $0x63] sm:$0xff]
        %v416 = vld [vmem:[%s392 + $0x73] sm:$0xff]
        %s417 = scalar_lea.vmem %s383, 32
        %v418 = vld [vmem:[%s417 + $0x1] sm:$0xff]
        %v419 = vld [vmem:[%s417 + $0x11] sm:$0xff]
        %v420 = vld [vmem:[%s417 + $0x21] sm:$0xff]
        %v421 = vld [vmem:[%s417 + $0x31] sm:$0xff]
        %v422 = vld [vmem:[%s417 + $0x41] sm:$0xff]
        %v423 = vld [vmem:[%s417 + $0x51] sm:$0xff]
        %v424 = vld [vmem:[%s417 + $0x61] sm:$0xff]
        %v425 = vld [vmem:[%s417 + $0x71] sm:$0xff]
        %v426 = vld [vmem:[%s417 + $0x2] sm:$0xff]
        %v427 = vld [vmem:[%s417 + $0x12] sm:$0xff]
        %v428 = vld [vmem:[%s417 + $0x22] sm:$0xff]
        %v429 = vld [vmem:[%s417 + $0x32] sm:$0xff]
        %v430 = vld [vmem:[%s417 + $0x42] sm:$0xff]
        %v431 = vld [vmem:[%s417 + $0x52] sm:$0xff]
        %v432 = vld [vmem:[%s417 + $0x62] sm:$0xff]
        %v433 = vld [vmem:[%s417 + $0x72] sm:$0xff]
        %v434 = vld [vmem:[%s417 + $0x3] sm:$0xff]
        %v435 = vld [vmem:[%s417 + $0x13] sm:$0xff]
        %v436 = vld [vmem:[%s417 + $0x23] sm:$0xff]
        %v437 = vld [vmem:[%s417 + $0x33] sm:$0xff]
        %v438 = vld [vmem:[%s417 + $0x43] sm:$0xff]
        %v439 = vld [vmem:[%s417 + $0x53] sm:$0xff]
        %v440 = vld [vmem:[%s417 + $0x63] sm:$0xff]
        %v441 = vld [vmem:[%s417 + $0x73] sm:$0xff]
        %s442 = scalar_lea.vmem %s383, 48
        %v443 = vld [vmem:[%s442 + $0x1] sm:$0xff]
        %v444 = vld [vmem:[%s442 + $0x11] sm:$0xff]
        %v445 = vld [vmem:[%s442 + $0x21] sm:$0xff]
        %v446 = vld [vmem:[%s442 + $0x31] sm:$0xff]
        %v447 = vld [vmem:[%s442 + $0x41] sm:$0xff]
        %v448 = vld [vmem:[%s442 + $0x51] sm:$0xff]
        %v449 = vld [vmem:[%s442 + $0x61] sm:$0xff]
        %v450 = vld [vmem:[%s442 + $0x71] sm:$0xff]
        %v451 = vld [vmem:[%s442 + $0x2] sm:$0xff]
        %v452 = vld [vmem:[%s442 + $0x12] sm:$0xff]
        %v453 = vld [vmem:[%s442 + $0x22] sm:$0xff]
        %v454 = vld [vmem:[%s442 + $0x32] sm:$0xff]
        %v455 = vld [vmem:[%s442 + $0x42] sm:$0xff]
        %v456 = vld [vmem:[%s442 + $0x52] sm:$0xff]
        %v457 = vld [vmem:[%s442 + $0x62] sm:$0xff]
        %v458 = vld [vmem:[%s442 + $0x72] sm:$0xff]
        %v459 = vld [vmem:[%s442 + $0x3] sm:$0xff]
        %v460 = vld [vmem:[%s442 + $0x13] sm:$0xff]
        %v461 = vld [vmem:[%s442 + $0x23] sm:$0xff]
        %v462 = vld [vmem:[%s442 + $0x33] sm:$0xff]
        %v463 = vld [vmem:[%s442 + $0x43] sm:$0xff]
        %v464 = vld [vmem:[%s442 + $0x53] sm:$0xff]
        %v465 = vld [vmem:[%s442 + $0x63] sm:$0xff]
        %v466 = vld [vmem:[%s442 + $0x73] sm:$0xff]
        %v467 = vld [vmem:[%s383] sm:$0xff]
        %v468 = vld [vmem:[%s383 + $0x10] sm:$0xff]
        %v469 = vld [vmem:[%s383 + $0x20] sm:$0xff]
        %v470 = vld [vmem:[%s383 + $0x30] sm:$0xff]
        %v471 = vld [vmem:[%s383 + $0x40] sm:$0xff]
        %v472 = vld [vmem:[%s383 + $0x50] sm:$0xff]
        %v473 = vld [vmem:[%s383 + $0x60] sm:$0xff]
        %v474 = vld [vmem:[%s383 + $0x70] sm:$0xff]
        %v475 = vld [vmem:[%s383 + $0x2] sm:$0xff]
        %v476 = vld [vmem:[%s383 + $0x12] sm:$0xff]
        %v477 = vld [vmem:[%s383 + $0x22] sm:$0xff]
        %v478 = vld [vmem:[%s383 + $0x32] sm:$0xff]
        %v479 = vld [vmem:[%s383 + $0x42] sm:$0xff]
        %v480 = vld [vmem:[%s383 + $0x52] sm:$0xff]
        %v481 = vld [vmem:[%s383 + $0x62] sm:$0xff]
        %v482 = vld [vmem:[%s383 + $0x72] sm:$0xff]
        %v483 = vld [vmem:[%s383 + $0x4] sm:$0xff]
        %v484 = vld [vmem:[%s383 + $0x14] sm:$0xff]
        %v485 = vld [vmem:[%s383 + $0x24] sm:$0xff]
        %v486 = vld [vmem:[%s383 + $0x34] sm:$0xff]
        %v487 = vld [vmem:[%s383 + $0x44] sm:$0xff]
        %v488 = vld [vmem:[%s383 + $0x54] sm:$0xff]
        %v489 = vld [vmem:[%s383 + $0x64] sm:$0xff]
        %v490 = vld [vmem:[%s383 + $0x74] sm:$0xff]
        %v491 = vld [vmem:[%s417] sm:$0xff]
        %v492 = vld [vmem:[%s417 + $0x10] sm:$0xff]
        %v493 = vld [vmem:[%s417 + $0x20] sm:$0xff]
        %v494 = vld [vmem:[%s417 + $0x30] sm:$0xff]
        %v495 = vld [vmem:[%s417 + $0x40] sm:$0xff]
        %v496 = vld [vmem:[%s417 + $0x50] sm:$0xff]
        %v497 = vld [vmem:[%s417 + $0x60] sm:$0xff]
        %v498 = vld [vmem:[%s417 + $0x70] sm:$0xff]
        %v499 = vld [vmem:[%s417 + $0x4] sm:$0xff]
        %v500 = vld [vmem:[%s417 + $0x14] sm:$0xff]
        %v501 = vld [vmem:[%s417 + $0x24] sm:$0xff]
        %v502 = vld [vmem:[%s417 + $0x34] sm:$0xff]
        %v503 = vld [vmem:[%s417 + $0x44] sm:$0xff]
        %v504 = vld [vmem:[%s417 + $0x54] sm:$0xff]
        %v505 = vld [vmem:[%s417 + $0x64] sm:$0xff]
        %v506 = vld [vmem:[%s417 + $0x74] sm:$0xff]
        %s507 = scalar_lea.vmem %s383, 64
        %v508 = vld [vmem:[%s507] sm:$0xff]
        %v509 = vld [vmem:[%s507 + $0x10] sm:$0xff]
        %v510 = vld [vmem:[%s507 + $0x20] sm:$0xff]
        %v511 = vld [vmem:[%s507 + $0x30] sm:$0xff]
        %v512 = vld [vmem:[%s507 + $0x40] sm:$0xff]
        %v513 = vld [vmem:[%s507 + $0x50] sm:$0xff]
        %v514 = vld [vmem:[%s507 + $0x60] sm:$0xff]
        %v515 = vld [vmem:[%s507 + $0x70] sm:$0xff]
        %v516 = vld [vmem:[%s507 + $0x2] sm:$0xff]
        %v517 = vld [vmem:[%s507 + $0x12] sm:$0xff]
        %v518 = vld [vmem:[%s507 + $0x22] sm:$0xff]
        %v519 = vld [vmem:[%s507 + $0x32] sm:$0xff]
        %v520 = vld [vmem:[%s507 + $0x42] sm:$0xff]
        %v521 = vld [vmem:[%s507 + $0x52] sm:$0xff]
        %v522 = vld [vmem:[%s507 + $0x62] sm:$0xff]
        %v523 = vld [vmem:[%s507 + $0x72] sm:$0xff]
        %v524 = vld [vmem:[%s507 + $0x4] sm:$0xff]
        %v525 = vld [vmem:[%s507 + $0x14] sm:$0xff]
        %v526 = vld [vmem:[%s507 + $0x24] sm:$0xff]
        %v527 = vld [vmem:[%s507 + $0x34] sm:$0xff]
        %v528 = vld [vmem:[%s507 + $0x44] sm:$0xff]
        %v529 = vld [vmem:[%s507 + $0x54] sm:$0xff]
        %v530 = vld [vmem:[%s507 + $0x64] sm:$0xff]
        %v531 = vld [vmem:[%s507 + $0x74] sm:$0xff]
        %540 = vrot.lane.b32.xlu0 %v401, 4
        %v541 = vpop.permute.xlu0 %540
        %542 = vrot.lane.b32.xlu0 %v402, 4
        %v543 = vpop.permute.xlu0 %542
        %544 = vrot.lane.b32.xlu0 %v403, 4
        %v545 = vpop.permute.xlu0 %544
        %546 = vrot.lane.b32.xlu0 %v404, 4
        %v547 = vpop.permute.xlu0 %546
        %548 = vrot.lane.b32.xlu0 %v405, 4
        %v549 = vpop.permute.xlu0 %548
        %550 = vrot.lane.b32.xlu0 %v406, 4
        %v551 = vpop.permute.xlu0 %550
        %552 = vrot.lane.b32.xlu0 %v407, 4
        %v553 = vpop.permute.xlu0 %552
        %554 = vrot.lane.b32.xlu0 %v408, 4
        %v555 = vpop.permute.xlu0 %554
        %572 = vrot.lane.b32.xlu0 %v409, 8
        %v573 = vpop.permute.xlu0 %572
        %574 = vrot.lane.b32.xlu0 %v410, 8
        %v575 = vpop.permute.xlu0 %574
        %576 = vrot.lane.b32.xlu0 %v411, 8
        %v577 = vpop.permute.xlu0 %576
        %578 = vrot.lane.b32.xlu0 %v412, 8
        %v579 = vpop.permute.xlu0 %578
        %580 = vrot.lane.b32.xlu0 %v413, 8
        %v581 = vpop.permute.xlu0 %580
        %582 = vrot.lane.b32.xlu0 %v414, 8
        %v583 = vpop.permute.xlu0 %582
        %584 = vrot.lane.b32.xlu0 %v415, 8
        %v585 = vpop.permute.xlu0 %584
        %586 = vrot.lane.b32.xlu0 %v416, 8
        %v587 = vpop.permute.xlu0 %586
        %604 = vrot.lane.b32.xlu0 %v418, 12
        %v605 = vpop.permute.xlu0 %604
        %606 = vrot.lane.b32.xlu0 %v419, 12
        %v607 = vpop.permute.xlu0 %606
        %608 = vrot.lane.b32.xlu0 %v420, 12
        %v609 = vpop.permute.xlu0 %608
        %610 = vrot.lane.b32.xlu0 %v421, 12
        %v611 = vpop.permute.xlu0 %610
        %612 = vrot.lane.b32.xlu0 %v422, 12
        %v613 = vpop.permute.xlu0 %612
        %614 = vrot.lane.b32.xlu0 %v423, 12
        %v615 = vpop.permute.xlu0 %614
        %616 = vrot.lane.b32.xlu0 %v424, 12
        %v617 = vpop.permute.xlu0 %616
        %618 = vrot.lane.b32.xlu0 %v425, 12
        %v619 = vpop.permute.xlu0 %618
        %636 = vrot.lane.b32.xlu0 %v426, 16
        %v637 = vpop.permute.xlu0 %636
        %638 = vrot.lane.b32.xlu0 %v427, 16
        %v639 = vpop.permute.xlu0 %638
        %640 = vrot.lane.b32.xlu0 %v428, 16
        %v641 = vpop.permute.xlu0 %640
        %642 = vrot.lane.b32.xlu0 %v429, 16
        %v643 = vpop.permute.xlu0 %642
        %644 = vrot.lane.b32.xlu0 %v430, 16
        %v645 = vpop.permute.xlu0 %644
        %646 = vrot.lane.b32.xlu0 %v431, 16
        %v647 = vpop.permute.xlu0 %646
        %648 = vrot.lane.b32.xlu0 %v432, 16
        %v649 = vpop.permute.xlu0 %648
        %650 = vrot.lane.b32.xlu0 %v433, 16
        %v651 = vpop.permute.xlu0 %650
        %668 = vrot.lane.b32.xlu0 %v434, 20
        %v669 = vpop.permute.xlu0 %668
        %670 = vrot.lane.b32.xlu0 %v435, 20
        %v671 = vpop.permute.xlu0 %670
        %672 = vrot.lane.b32.xlu0 %v436, 20
        %v673 = vpop.permute.xlu0 %672
        %674 = vrot.lane.b32.xlu0 %v437, 20
        %v675 = vpop.permute.xlu0 %674
        %676 = vrot.lane.b32.xlu0 %v438, 20
        %v677 = vpop.permute.xlu0 %676
        %678 = vrot.lane.b32.xlu0 %v439, 20
        %v679 = vpop.permute.xlu0 %678
        %680 = vrot.lane.b32.xlu0 %v440, 20
        %v681 = vpop.permute.xlu0 %680
        %682 = vrot.lane.b32.xlu0 %v441, 20
        %v683 = vpop.permute.xlu0 %682
        %700 = vrot.lane.b32.xlu0 %v443, 24
        %v701 = vpop.permute.xlu0 %700
        %702 = vrot.lane.b32.xlu0 %v444, 24
        %v703 = vpop.permute.xlu0 %702
        %704 = vrot.lane.b32.xlu0 %v445, 24
        %v705 = vpop.permute.xlu0 %704
        %706 = vrot.lane.b32.xlu0 %v446, 24
        %v707 = vpop.permute.xlu0 %706
        %708 = vrot.lane.b32.xlu0 %v447, 24
        %v709 = vpop.permute.xlu0 %708
        %710 = vrot.lane.b32.xlu0 %v448, 24
        %v711 = vpop.permute.xlu0 %710
        %712 = vrot.lane.b32.xlu0 %v449, 24
        %v713 = vpop.permute.xlu0 %712
        %714 = vrot.lane.b32.xlu0 %v450, 24
        %v715 = vpop.permute.xlu0 %714
        %732 = vrot.lane.b32.xlu0 %v451, 28
        %v733 = vpop.permute.xlu0 %732
        %734 = vrot.lane.b32.xlu0 %v452, 28
        %v735 = vpop.permute.xlu0 %734
        %736 = vrot.lane.b32.xlu0 %v453, 28
        %v737 = vpop.permute.xlu0 %736
        %738 = vrot.lane.b32.xlu0 %v454, 28
        %v739 = vpop.permute.xlu0 %738
        %740 = vrot.lane.b32.xlu0 %v455, 28
        %v741 = vpop.permute.xlu0 %740
        %742 = vrot.lane.b32.xlu0 %v456, 28
        %v743 = vpop.permute.xlu0 %742
        %744 = vrot.lane.b32.xlu0 %v457, 28
        %v745 = vpop.permute.xlu0 %744
        %746 = vrot.lane.b32.xlu0 %v458, 28
        %v747 = vpop.permute.xlu0 %746
        %764 = vrot.lane.b32.xlu0 %v459, 32
        %v765 = vpop.permute.xlu0 %764
        %766 = vrot.lane.b32.xlu0 %v460, 32
        %v767 = vpop.permute.xlu0 %766
        %768 = vrot.lane.b32.xlu0 %v461, 32
        %v769 = vpop.permute.xlu0 %768
        %770 = vrot.lane.b32.xlu0 %v462, 32
        %v771 = vpop.permute.xlu0 %770
        %772 = vrot.lane.b32.xlu0 %v463, 32
        %v773 = vpop.permute.xlu0 %772
        %774 = vrot.lane.b32.xlu0 %v464, 32
        %v775 = vpop.permute.xlu0 %774
        %776 = vrot.lane.b32.xlu0 %v465, 32
        %v777 = vpop.permute.xlu0 %776
        %778 = vrot.lane.b32.xlu0 %v466, 32
        %v779 = vpop.permute.xlu0 %778
        %796 = vrot.lane.b32.xlu0 %v467, 36
        %v797 = vpop.permute.xlu0 %796
        %798 = vrot.lane.b32.xlu0 %v468, 36
        %v799 = vpop.permute.xlu0 %798
        %800 = vrot.lane.b32.xlu0 %v469, 36
        %v801 = vpop.permute.xlu0 %800
        %802 = vrot.lane.b32.xlu0 %v470, 36
        %v803 = vpop.permute.xlu0 %802
        %804 = vrot.lane.b32.xlu0 %v471, 36
        %v805 = vpop.permute.xlu0 %804
        %806 = vrot.lane.b32.xlu0 %v472, 36
        %v807 = vpop.permute.xlu0 %806
        %808 = vrot.lane.b32.xlu0 %v473, 36
        %v809 = vpop.permute.xlu0 %808
        %810 = vrot.lane.b32.xlu0 %v474, 36
        %v811 = vpop.permute.xlu0 %810
        %828 = vrot.lane.b32.xlu0 %v475, 40
        %v829 = vpop.permute.xlu0 %828
        %830 = vrot.lane.b32.xlu0 %v476, 40
        %v831 = vpop.permute.xlu0 %830
        %832 = vrot.lane.b32.xlu0 %v477, 40
        %v833 = vpop.permute.xlu0 %832
        %834 = vrot.lane.b32.xlu0 %v478, 40
        %v835 = vpop.permute.xlu0 %834
        %836 = vrot.lane.b32.xlu0 %v479, 40
        %v837 = vpop.permute.xlu0 %836
        %838 = vrot.lane.b32.xlu0 %v480, 40
        %v839 = vpop.permute.xlu0 %838
        %840 = vrot.lane.b32.xlu0 %v481, 40
        %v841 = vpop.permute.xlu0 %840
        %842 = vrot.lane.b32.xlu0 %v482, 40
        %v843 = vpop.permute.xlu0 %842
        %860 = vrot.lane.b32.xlu0 %v483, 44
        %v861 = vpop.permute.xlu0 %860
        %862 = vrot.lane.b32.xlu0 %v484, 44
        %v863 = vpop.permute.xlu0 %862
        %864 = vrot.lane.b32.xlu0 %v485, 44
        %v865 = vpop.permute.xlu0 %864
        %866 = vrot.lane.b32.xlu0 %v486, 44
        %v867 = vpop.permute.xlu0 %866
        %868 = vrot.lane.b32.xlu0 %v487, 44
        %v869 = vpop.permute.xlu0 %868
        %870 = vrot.lane.b32.xlu0 %v488, 44
        %v871 = vpop.permute.xlu0 %870
        %872 = vrot.lane.b32.xlu0 %v489, 44
        %v873 = vpop.permute.xlu0 %872
        %874 = vrot.lane.b32.xlu0 %v490, 44
        %v875 = vpop.permute.xlu0 %874
        %892 = vrot.lane.b32.xlu0 %v491, 48
        %v893 = vpop.permute.xlu0 %892
        %894 = vrot.lane.b32.xlu0 %v492, 48
        %v895 = vpop.permute.xlu0 %894
        %896 = vrot.lane.b32.xlu0 %v493, 48
        %v897 = vpop.permute.xlu0 %896
        %898 = vrot.lane.b32.xlu0 %v494, 48
        %v899 = vpop.permute.xlu0 %898
        %900 = vrot.lane.b32.xlu0 %v495, 48
        %v901 = vpop.permute.xlu0 %900
        %902 = vrot.lane.b32.xlu0 %v496, 48
        %v903 = vpop.permute.xlu0 %902
        %904 = vrot.lane.b32.xlu0 %v497, 48
        %v905 = vpop.permute.xlu0 %904
        %906 = vrot.lane.b32.xlu0 %v498, 48
        %v907 = vpop.permute.xlu0 %906
        %916 = vrot.lane.b32.xlu0 %v426, 52
        %v917 = vpop.permute.xlu0 %916
        %918 = vrot.lane.b32.xlu0 %v427, 52
        %v919 = vpop.permute.xlu0 %918
        %920 = vrot.lane.b32.xlu0 %v428, 52
        %v921 = vpop.permute.xlu0 %920
        %922 = vrot.lane.b32.xlu0 %v429, 52
        %v923 = vpop.permute.xlu0 %922
        %924 = vrot.lane.b32.xlu0 %v430, 52
        %v925 = vpop.permute.xlu0 %924
        %926 = vrot.lane.b32.xlu0 %v431, 52
        %v927 = vpop.permute.xlu0 %926
        %928 = vrot.lane.b32.xlu0 %v432, 52
        %v929 = vpop.permute.xlu0 %928
        %930 = vrot.lane.b32.xlu0 %v433, 52
        %v931 = vpop.permute.xlu0 %930
        %948 = vrot.lane.b32.xlu0 %v499, 56
        %v949 = vpop.permute.xlu0 %948
        %950 = vrot.lane.b32.xlu0 %v500, 56
        %v951 = vpop.permute.xlu0 %950
        %952 = vrot.lane.b32.xlu0 %v501, 56
        %v953 = vpop.permute.xlu0 %952
        %954 = vrot.lane.b32.xlu0 %v502, 56
        %v955 = vpop.permute.xlu0 %954
        %956 = vrot.lane.b32.xlu0 %v503, 56
        %v957 = vpop.permute.xlu0 %956
        %958 = vrot.lane.b32.xlu0 %v504, 56
        %v959 = vpop.permute.xlu0 %958
        %960 = vrot.lane.b32.xlu0 %v505, 56
        %v961 = vpop.permute.xlu0 %960
        %962 = vrot.lane.b32.xlu0 %v506, 56
        %v963 = vpop.permute.xlu0 %962
        %980 = vrot.lane.b32.xlu0 %v508, 60
        %v981 = vpop.permute.xlu0 %980
        %982 = vrot.lane.b32.xlu0 %v509, 60
        %v983 = vpop.permute.xlu0 %982
        %984 = vrot.lane.b32.xlu0 %v510, 60
        %v985 = vpop.permute.xlu0 %984
        %986 = vrot.lane.b32.xlu0 %v511, 60
        %v987 = vpop.permute.xlu0 %986
        %988 = vrot.lane.b32.xlu0 %v512, 60
        %v989 = vpop.permute.xlu0 %988
        %990 = vrot.lane.b32.xlu0 %v513, 60
        %v991 = vpop.permute.xlu0 %990
        %992 = vrot.lane.b32.xlu0 %v514, 60
        %v993 = vpop.permute.xlu0 %992
        %994 = vrot.lane.b32.xlu0 %v515, 60
        %v995 = vpop.permute.xlu0 %994
        %vm1004 = vcmask 31744
        %v1005 = vsel %vm1004, %v393, %v541
        %v1006 = vsel %vm1004, %v394, %v543
        %v1007 = vsel %vm1004, %v395, %v545
        %v1008 = vsel %vm1004, %v396, %v547
        %v1009 = vsel %vm1004, %v397, %v549
        %v1010 = vsel %vm1004, %v398, %v551
        %v1011 = vsel %vm1004, %v399, %v553
        %v1012 = vsel %vm1004, %v400, %v555
        %vm1013 = vcmask 64512
        %v1014 = vsel %vm1013, %v1005, %v573
        %v1015 = vsel %vm1013, %v1006, %v575
        %v1016 = vsel %vm1013, %v1007, %v577
        %v1017 = vsel %vm1013, %v1008, %v579
        %v1018 = vsel %vm1013, %v1009, %v581
        %v1019 = vsel %vm1013, %v1010, %v583
        %v1020 = vsel %vm1013, %v1011, %v585
        %v1021 = vsel %vm1013, %v1012, %v587
        %vm1022 = vcmask 97280
        %v1023 = vsel %vm1022, %v1014, %v605
        %v1024 = vsel %vm1022, %v1015, %v607
        %v1025 = vsel %vm1022, %v1016, %v609
        %v1026 = vsel %vm1022, %v1017, %v611
        %v1027 = vsel %vm1022, %v1018, %v613
        %v1028 = vsel %vm1022, %v1019, %v615
        %v1029 = vsel %vm1022, %v1020, %v617
        %v1030 = vsel %vm1022, %v1021, %v619
        %vm1031 = vcmask 130048
        %v1032 = vsel %vm1031, %v1023, %v637
        %v1033 = vsel %vm1031, %v1024, %v639
        %v1034 = vsel %vm1031, %v1025, %v641
        %v1035 = vsel %vm1031, %v1026, %v643
        %v1036 = vsel %vm1031, %v1027, %v645
        %v1037 = vsel %vm1031, %v1028, %v647
        %v1038 = vsel %vm1031, %v1029, %v649
        %v1039 = vsel %vm1031, %v1030, %v651
        %vm1040 = vcmask 162816
        %v1041 = vsel %vm1040, %v1032, %v669
        %v1042 = vsel %vm1040, %v1033, %v671
        %v1043 = vsel %vm1040, %v1034, %v673
        %v1044 = vsel %vm1040, %v1035, %v675
        %v1045 = vsel %vm1040, %v1036, %v677
        %v1046 = vsel %vm1040, %v1037, %v679
        %v1047 = vsel %vm1040, %v1038, %v681
        %v1048 = vsel %vm1040, %v1039, %v683
        %vm1049 = vcmask 195584
        %v1050 = vsel %vm1049, %v1041, %v701
        %v1051 = vsel %vm1049, %v1042, %v703
        %v1052 = vsel %vm1049, %v1043, %v705
        %v1053 = vsel %vm1049, %v1044, %v707
        %v1054 = vsel %vm1049, %v1045, %v709
        %v1055 = vsel %vm1049, %v1046, %v711
        %v1056 = vsel %vm1049, %v1047, %v713
        %v1057 = vsel %vm1049, %v1048, %v715
        %vm1058 = vcmask 228352
        %v1059 = vsel %vm1058, %v1050, %v733
        %v1060 = vsel %vm1058, %v1051, %v735
        %v1061 = vsel %vm1058, %v1052, %v737
        %v1062 = vsel %vm1058, %v1053, %v739
        %v1063 = vsel %vm1058, %v1054, %v741
        %v1064 = vsel %vm1058, %v1055, %v743
        %v1065 = vsel %vm1058, %v1056, %v745
        %v1066 = vsel %vm1058, %v1057, %v747
        %vm1067 = vcmask 261120
        %v1068 = vsel %vm1067, %v1059, %v765
        %v1069 = vsel %vm1067, %v1060, %v767
        %v1070 = vsel %vm1067, %v1061, %v769
        %v1071 = vsel %vm1067, %v1062, %v771
        %v1072 = vsel %vm1067, %v1063, %v773
        %v1073 = vsel %vm1067, %v1064, %v775
        %v1074 = vsel %vm1067, %v1065, %v777
        %v1075 = vsel %vm1067, %v1066, %v779
        %vm1076 = vcmask 293888
        %v1077 = vsel %vm1076, %v1068, %v797
        %v1078 = vsel %vm1076, %v1069, %v799
        %v1079 = vsel %vm1076, %v1070, %v801
        %v1080 = vsel %vm1076, %v1071, %v803
        %v1081 = vsel %vm1076, %v1072, %v805
        %v1082 = vsel %vm1076, %v1073, %v807
        %v1083 = vsel %vm1076, %v1074, %v809
        %v1084 = vsel %vm1076, %v1075, %v811
        %vm1085 = vcmask 326656
        %v1086 = vsel %vm1085, %v1077, %v829
        %v1087 = vsel %vm1085, %v1078, %v831
        %v1088 = vsel %vm1085, %v1079, %v833
        %v1089 = vsel %vm1085, %v1080, %v835
        %v1090 = vsel %vm1085, %v1081, %v837
        %v1091 = vsel %vm1085, %v1082, %v839
        %v1092 = vsel %vm1085, %v1083, %v841
        %v1093 = vsel %vm1085, %v1084, %v843
        %vm1094 = vcmask 359424
        %v1095 = vsel %vm1094, %v1086, %v861
        %v1096 = vsel %vm1094, %v1087, %v863
        %v1097 = vsel %vm1094, %v1088, %v865
        %v1098 = vsel %vm1094, %v1089, %v867
        %v1099 = vsel %vm1094, %v1090, %v869
        %v1100 = vsel %vm1094, %v1091, %v871
        %v1101 = vsel %vm1094, %v1092, %v873
        %v1102 = vsel %vm1094, %v1093, %v875
        %vm1103 = vcmask 392192
        %v1104 = vsel %vm1103, %v1095, %v893
        %v1105 = vsel %vm1103, %v1096, %v895
        %v1106 = vsel %vm1103, %v1097, %v897
        %v1107 = vsel %vm1103, %v1098, %v899
        %v1108 = vsel %vm1103, %v1099, %v901
        %v1109 = vsel %vm1103, %v1100, %v903
        %v1110 = vsel %vm1103, %v1101, %v905
        %v1111 = vsel %vm1103, %v1102, %v907
        %vm1112 = vcmask 424960
        %v1113 = vsel %vm1112, %v1104, %v917
        %v1114 = vsel %vm1112, %v1105, %v919
        %v1115 = vsel %vm1112, %v1106, %v921
        %v1116 = vsel %vm1112, %v1107, %v923
        %v1117 = vsel %vm1112, %v1108, %v925
        %v1118 = vsel %vm1112, %v1109, %v927
        %v1119 = vsel %vm1112, %v1110, %v929
        %v1120 = vsel %vm1112, %v1111, %v931
        %vm1121 = vcmask 457728
        %v1122 = vsel %vm1121, %v1113, %v949
        %v1123 = vsel %vm1121, %v1114, %v951
        %v1124 = vsel %vm1121, %v1115, %v953
        %v1125 = vsel %vm1121, %v1116, %v955
        %v1126 = vsel %vm1121, %v1117, %v957
        %v1127 = vsel %vm1121, %v1118, %v959
        %v1128 = vsel %vm1121, %v1119, %v961
        %v1129 = vsel %vm1121, %v1120, %v963
        %vm1130 = vcmask 490496
        %v1131 = vsel %vm1130, %v1122, %v981
        %v1132 = vsel %vm1130, %v1123, %v983
        %v1133 = vsel %vm1130, %v1124, %v985
        %v1134 = vsel %vm1130, %v1125, %v987
        %v1135 = vsel %vm1130, %v1126, %v989
        %v1136 = vsel %vm1130, %v1127, %v991
        %v1137 = vsel %vm1130, %v1128, %v993
        %v1138 = vsel %vm1130, %v1129, %v995
        %1147 = vrot.lane.b32.xlu0 %v524, 4
        %v1148 = vpop.permute.xlu0 %1147
        %1149 = vrot.lane.b32.xlu0 %v525, 4
        %v1150 = vpop.permute.xlu0 %1149
        %1151 = vrot.lane.b32.xlu0 %v526, 4
        %v1152 = vpop.permute.xlu0 %1151
        %1153 = vrot.lane.b32.xlu0 %v527, 4
        %v1154 = vpop.permute.xlu0 %1153
        %1155 = vrot.lane.b32.xlu0 %v528, 4
        %v1156 = vpop.permute.xlu0 %1155
        %1157 = vrot.lane.b32.xlu0 %v529, 4
        %v1158 = vpop.permute.xlu0 %1157
        %1159 = vrot.lane.b32.xlu0 %v530, 4
        %v1160 = vpop.permute.xlu0 %1159
        %1161 = vrot.lane.b32.xlu0 %v531, 4
        %v1162 = vpop.permute.xlu0 %1161
        %v1171 = vsel %vm1004, %v516, %v1148
        %v1172 = vsel %vm1004, %v517, %v1150
        %v1173 = vsel %vm1004, %v518, %v1152
        %v1174 = vsel %vm1004, %v519, %v1154
        %v1175 = vsel %vm1004, %v520, %v1156
        %v1176 = vsel %vm1004, %v521, %v1158
        %v1177 = vsel %vm1004, %v522, %v1160
        %v1178 = vsel %vm1004, %v523, %v1162
        %1187 = vrot.lane.b32.xlu0 %v1171, 64
        %v1188 = vpop.permute.xlu0 %1187
        %1189 = vrot.lane.b32.xlu0 %v1172, 64
        %v1190 = vpop.permute.xlu0 %1189
        %1191 = vrot.lane.b32.xlu0 %v1173, 64
        %v1192 = vpop.permute.xlu0 %1191
        %1193 = vrot.lane.b32.xlu0 %v1174, 64
        %v1194 = vpop.permute.xlu0 %1193
        %1195 = vrot.lane.b32.xlu0 %v1175, 64
        %v1196 = vpop.permute.xlu0 %1195
        %1197 = vrot.lane.b32.xlu0 %v1176, 64
        %v1198 = vpop.permute.xlu0 %1197
        %1199 = vrot.lane.b32.xlu0 %v1177, 64
        %v1200 = vpop.permute.xlu0 %1199
        %1201 = vrot.lane.b32.xlu0 %v1178, 64
        %v1202 = vpop.permute.xlu0 %1201
        %vm1211 = vcmask 523264
        %v1212 = vsel %vm1211, %v1131, %v1188
        %v1213 = vsel %vm1211, %v1132, %v1190
        %v1214 = vsel %vm1211, %v1133, %v1192
        %v1215 = vsel %vm1211, %v1134, %v1194
        %v1216 = vsel %vm1211, %v1135, %v1196
        %v1217 = vsel %vm1211, %v1136, %v1198
        %v1218 = vsel %vm1211, %v1137, %v1200
        %v1219 = vsel %vm1211, %v1138, %v1202
        %v1220 = vld [vmem:[%s1] sm:$0xff]
        %v1221 = vld [vmem:[%s1 + $0x8] sm:$0xff]
        %v1222 = vld [vmem:[%s1 + $0x10] sm:$0xff]
        %v1223 = vld [vmem:[%s1 + $0x18] sm:$0xff]
        %v1224 = vld [vmem:[%s1 + $0x20] sm:$0xff]
        %v1225 = vld [vmem:[%s1 + $0x28] sm:$0xff]
        %v1226 = vld [vmem:[%s1 + $0x30] sm:$0xff]
        %v1227 = vld [vmem:[%s1 + $0x38] sm:$0xff]
        %v1228 = vld [vmem:[%s1 + $0x40] sm:$0xff]
        %v1229 = vld [vmem:[%s2] sm:$0x1]
        %v1231 = vlaneseq
        %v1232 = vshrl.u32 %v1231, 7
        %v1233 = vsub.s32 0, %v1232
        %v1234 = vrot.slane %v1229, %v1233
        %vm1236 = vcmask 588800
        %v1238 = vsel %vm1236, %v1212, 0
        %v1241 = vsel %vm1236, %v1213, 0
        %v1244 = vsel %vm1236, %v1214, 0
        %v1247 = vsel %vm1236, %v1215, 0
        %v1250 = vsel %vm1236, %v1216, 0
        %v1253 = vsel %vm1236, %v1217, 0
        %v1256 = vsel %vm1236, %v1218, 0
        %v1259 = vsel %vm1236, %v1219, 0
        %1261 = vmatprep.subr.mxu0 0.0
        %1262 = vmatpush1.msra.mxu0 0.0
        %1263 = vmatprep.subr.mxu0 0.0
        %1264 = vmatpush1.msra.mxu0 0.0
        %1265 = vmatprep.subr.mxu0 0.0
        %1266 = vmatpush1.msra.mxu0 0.0
        %1267 = vmatprep.subr.mxu0 0.0
        %1268 = vmatpush1.msra.mxu0 0.0
        %1269 = vmatprep.subr.mxu0 0.0
        %1270 = vmatpush1.msra.mxu0 0.0
        %1271 = vmatprep.subr.mxu0 0.0
        %1272 = vmatpush1.msra.mxu0 0.0
        %1273 = vmatprep.subr.mxu0 0.0
        %1274 = vmatpush1.msra.mxu0 0.0
        %1275 = vmatprep.subr.mxu0 0.0
        %v1276 = vand.u32 %v1228, 4294901760
        %1277 = vmatpush1.msra.mxu0 %v1276
        %1278 = vmatprep.subr.mxu0 0.0
        %v1279 = vand.u32 %v1227, 4294901760
        %1280 = vmatpush1.msra.mxu0 %v1279
        %1281 = vmatprep.subr.mxu0 0.0
        %v1282 = vand.u32 %v1226, 4294901760
        %1283 = vmatpush1.msra.mxu0 %v1282
        %1284 = vmatprep.subr.mxu0 0.0
        %v1285 = vand.u32 %v1225, 4294901760
        %1286 = vmatpush1.msra.mxu0 %v1285
        %1287 = vmatprep.subr.mxu0 0.0
        %v1288 = vand.u32 %v1224, 4294901760
        %1289 = vmatpush1.msra.mxu0 %v1288
        %1290 = vmatprep.subr.mxu0 0.0
        %v1291 = vand.u32 %v1223, 4294901760
        %1292 = vmatpush1.msra.mxu0 %v1291
        %1293 = vmatprep.subr.mxu0 0.0
        %v1294 = vand.u32 %v1222, 4294901760
        %1295 = vmatpush1.msra.mxu0 %v1294
        %1296 = vmatprep.subr.mxu0 0.0
        %v1297 = vand.u32 %v1221, 4294901760
        %1298 = vmatpush1.msra.mxu0 %v1297
        %1299 = vmatprep.subr.mxu0 0.0
        %v1300 = vand.u32 %v1220, 4294901760
        %1301 = vmatpush1.msra.mxu0 %v1300
        %1302 = vmatprep.subr.mxu0 0.0
        %1303 = vmatpush2.msra.mxu0 0.0
        %1304 = vmatprep.subr.mxu0 0.0
        %1305 = vmatpush2.msra.mxu0 0.0
        %1306 = vmatprep.subr.mxu0 0.0
        %1307 = vmatpush2.msra.mxu0 0.0
        %1308 = vmatprep.subr.mxu0 0.0
        %1309 = vmatpush2.msra.mxu0 0.0
        %1310 = vmatprep.subr.mxu0 0.0
        %1311 = vmatpush2.msra.mxu0 0.0
        %1312 = vmatprep.subr.mxu0 0.0
        %1313 = vmatpush2.msra.mxu0 0.0
        %1314 = vmatprep.subr.mxu0 0.0
        %1315 = vmatpush2.msra.mxu0 0.0
        %1316 = vmatprep.subr.mxu0 0.0
        %1317 = vmatpush2.msra.mxu0 0.0
        %1318 = vmatprep.subr.mxu0 0.0
        %1319 = vmatpush2.msra.mxu0 0.0
        %1320 = vmatprep.subr.mxu0 0.0
        %1321 = vmatpush2.msra.mxu0 0.0
        %1322 = vmatprep.subr.mxu0 0.0
        %1323 = vmatpush2.msra.mxu0 0.0
        %1324 = vmatprep.subr.mxu0 0.0
        %1325 = vmatpush2.msra.mxu0 0.0
        %1326 = vmatprep.subr.mxu0 0.0
        %1327 = vmatpush2.msra.mxu0 0.0
        %1328 = vmatprep.subr.mxu0 0.0
        %1329 = vmatpush2.msra.mxu0 0.0
        %1330 = vmatprep.subr.mxu0 0.0
        %1331 = vmatpush2.msra.mxu0 0.0
        %1332 = vmatprep.subr.mxu0 0.0
        %1333 = vmatpush2.msra.mxu0 0.0
        %1334 = vmatprep.mubr.f32.mxu0 0.0
        %v1335 = vand.u32 %v1238, 4294901760
        %v1336 = vsub.f32 %v1238, %v1335
        %v1337 = vand.u32 %v1336, 4294901760
        %v1338 = vsub.f32 %v1336, %v1337
        %v1339 = vand.u32 %v1338, 4294901760
        %1340 = vmatmul.mubr.f32.gmra.mxu0 %v1339
        %v1341 = vpop.f32.mrf.mxu0
        %v1342 = vadd.f32 %v1234, %v1341
        %v1343 = vpop.f32.mrf.mxu0
        %1344 = vmatprep.mubr.f32.mxu0 0.0
        %v1345 = vand.u32 %v1241, 4294901760
        %v1346 = vsub.f32 %v1241, %v1345
        %v1347 = vand.u32 %v1346, 4294901760
        %v1348 = vsub.f32 %v1346, %v1347
        %v1349 = vand.u32 %v1348, 4294901760
        %1350 = vmatmul.mubr.f32.gmra.mxu0 %v1349
        %v1351 = vpop.f32.mrf.mxu0
        %v1352 = vadd.f32 %v1234, %v1351
        %v1353 = vpop.f32.mrf.mxu0
        %1354 = vmatprep.mubr.f32.mxu0 0.0
        %v1355 = vand.u32 %v1244, 4294901760
        %v1356 = vsub.f32 %v1244, %v1355
        %v1357 = vand.u32 %v1356, 4294901760
        %v1358 = vsub.f32 %v1356, %v1357
        %v1359 = vand.u32 %v1358, 4294901760
        %1360 = vmatmul.mubr.f32.gmra.mxu0 %v1359
        %v1361 = vpop.f32.mrf.mxu0
        %v1362 = vadd.f32 %v1234, %v1361
        %v1363 = vpop.f32.mrf.mxu0
        %1364 = vmatprep.mubr.f32.mxu0 0.0
        %v1365 = vand.u32 %v1247, 4294901760
        %v1366 = vsub.f32 %v1247, %v1365
        %v1367 = vand.u32 %v1366, 4294901760
        %v1368 = vsub.f32 %v1366, %v1367
        %v1369 = vand.u32 %v1368, 4294901760
        %1370 = vmatmul.mubr.f32.gmra.mxu0 %v1369
        %v1371 = vpop.f32.mrf.mxu0
        %v1372 = vadd.f32 %v1234, %v1371
        %v1373 = vpop.f32.mrf.mxu0
        %1374 = vmatprep.mubr.f32.mxu0 0.0
        %v1375 = vand.u32 %v1250, 4294901760
        %v1376 = vsub.f32 %v1250, %v1375
        %v1377 = vand.u32 %v1376, 4294901760
        %v1378 = vsub.f32 %v1376, %v1377
        %v1379 = vand.u32 %v1378, 4294901760
        %1380 = vmatmul.mubr.f32.gmra.mxu0 %v1379
        %v1381 = vpop.f32.mrf.mxu0
        %v1382 = vadd.f32 %v1234, %v1381
        %v1383 = vpop.f32.mrf.mxu0
        %1384 = vmatprep.mubr.f32.mxu0 0.0
        %v1385 = vand.u32 %v1253, 4294901760
        %v1386 = vsub.f32 %v1253, %v1385
        %v1387 = vand.u32 %v1386, 4294901760
        %v1388 = vsub.f32 %v1386, %v1387
        %v1389 = vand.u32 %v1388, 4294901760
        %1390 = vmatmul.mubr.f32.gmra.mxu0 %v1389
        %v1391 = vpop.f32.mrf.mxu0
        %v1392 = vadd.f32 %v1234, %v1391
        %v1393 = vpop.f32.mrf.mxu0
        %1394 = vmatprep.mubr.f32.mxu0 0.0
        %v1395 = vand.u32 %v1256, 4294901760
        %v1396 = vsub.f32 %v1256, %v1395
        %v1397 = vand.u32 %v1396, 4294901760
        %v1398 = vsub.f32 %v1396, %v1397
        %v1399 = vand.u32 %v1398, 4294901760
        %1400 = vmatmul.mubr.f32.gmra.mxu0 %v1399
        %v1401 = vpop.f32.mrf.mxu0
        %v1402 = vadd.f32 %v1234, %v1401
        %v1403 = vpop.f32.mrf.mxu0
        %1404 = vmatprep.mubr.f32.mxu0 0.0
        %v1405 = vand.u32 %v1259, 4294901760
        %v1406 = vsub.f32 %v1259, %v1405
        %v1407 = vand.u32 %v1406, 4294901760
        %v1408 = vsub.f32 %v1406, %v1407
        %v1409 = vand.u32 %v1408, 4294901760
        %1410 = vmatmul.mubr.f32.gmra.mxu0 %v1409
        %v1411 = vpop.f32.mrf.mxu0
        %v1412 = vadd.f32 %v1234, %v1411
        %v1413 = vpop.f32.mrf.mxu0
        %1414 = vdwg.mxu0
        %1415 = vmatprep.subr.mxu0 0.0
        %1416 = vmatpush1.msra.mxu0 0.0
        %1417 = vmatprep.subr.mxu0 0.0
        %1418 = vmatpush1.msra.mxu0 0.0
        %1419 = vmatprep.subr.mxu0 0.0
        %1420 = vmatpush1.msra.mxu0 0.0
        %1421 = vmatprep.subr.mxu0 0.0
        %1422 = vmatpush1.msra.mxu0 0.0
        %1423 = vmatprep.subr.mxu0 0.0
        %1424 = vmatpush1.msra.mxu0 0.0
        %1425 = vmatprep.subr.mxu0 0.0
        %1426 = vmatpush1.msra.mxu0 0.0
        %1427 = vmatprep.subr.mxu0 0.0
        %1428 = vmatpush1.msra.mxu0 0.0
        %1429 = vmatprep.subr.mxu0 0.0
        %v1430 = vand.u32 %v1228, 4294901760
        %v1431 = vsub.f32 %v1228, %v1430
        %v1432 = vand.u32 %v1431, 4294901760
        %v1433 = vsub.f32 %v1431, %v1432
        %v1434 = vand.u32 %v1433, 4294901760
        %1435 = vmatpush1.msra.mxu0 %v1434
        %1436 = vmatprep.subr.mxu0 0.0
        %v1437 = vand.u32 %v1227, 4294901760
        %v1438 = vsub.f32 %v1227, %v1437
        %v1439 = vand.u32 %v1438, 4294901760
        %v1440 = vsub.f32 %v1438, %v1439
        %v1441 = vand.u32 %v1440, 4294901760
        %1442 = vmatpush1.msra.mxu0 %v1441
        %1443 = vmatprep.subr.mxu0 0.0
        %v1444 = vand.u32 %v1226, 4294901760
        %v1445 = vsub.f32 %v1226, %v1444
        %v1446 = vand.u32 %v1445, 4294901760
        %v1447 = vsub.f32 %v1445, %v1446
        %v1448 = vand.u32 %v1447, 4294901760
        %1449 = vmatpush1.msra.mxu0 %v1448
        %1450 = vmatprep.subr.mxu0 0.0
        %v1451 = vand.u32 %v1225, 4294901760
        %v1452 = vsub.f32 %v1225, %v1451
        %v1453 = vand.u32 %v1452, 4294901760
        %v1454 = vsub.f32 %v1452, %v1453
        %v1455 = vand.u32 %v1454, 4294901760
        %1456 = vmatpush1.msra.mxu0 %v1455
        %1457 = vmatprep.subr.mxu0 0.0
        %v1458 = vand.u32 %v1224, 4294901760
        %v1459 = vsub.f32 %v1224, %v1458
        %v1460 = vand.u32 %v1459, 4294901760
        %v1461 = vsub.f32 %v1459, %v1460
        %v1462 = vand.u32 %v1461, 4294901760
        %1463 = vmatpush1.msra.mxu0 %v1462
        %1464 = vmatprep.subr.mxu0 0.0
        %v1465 = vand.u32 %v1223, 4294901760
        %v1466 = vsub.f32 %v1223, %v1465
        %v1467 = vand.u32 %v1466, 4294901760
        %v1468 = vsub.f32 %v1466, %v1467
        %v1469 = vand.u32 %v1468, 4294901760
        %1470 = vmatpush1.msra.mxu0 %v1469
        %1471 = vmatprep.subr.mxu0 0.0
        %v1472 = vand.u32 %v1222, 4294901760
        %v1473 = vsub.f32 %v1222, %v1472
        %v1474 = vand.u32 %v1473, 4294901760
        %v1475 = vsub.f32 %v1473, %v1474
        %v1476 = vand.u32 %v1475, 4294901760
        %1477 = vmatpush1.msra.mxu0 %v1476
        %1478 = vmatprep.subr.mxu0 0.0
        %v1479 = vand.u32 %v1221, 4294901760
        %v1480 = vsub.f32 %v1221, %v1479
        %v1481 = vand.u32 %v1480, 4294901760
        %v1482 = vsub.f32 %v1480, %v1481
        %v1483 = vand.u32 %v1482, 4294901760
        %1484 = vmatpush1.msra.mxu0 %v1483
        %1485 = vmatprep.subr.mxu0 0.0
        %v1486 = vand.u32 %v1220, 4294901760
        %v1487 = vsub.f32 %v1220, %v1486
        %v1488 = vand.u32 %v1487, 4294901760
        %v1489 = vsub.f32 %v1487, %v1488
        %v1490 = vand.u32 %v1489, 4294901760
        %1491 = vmatpush1.msra.mxu0 %v1490
        %1492 = vmatprep.subr.mxu0 0.0
        %1493 = vmatpush2.msra.mxu0 0.0
        %1494 = vmatprep.subr.mxu0 0.0
        %1495 = vmatpush2.msra.mxu0 0.0
        %1496 = vmatprep.subr.mxu0 0.0
        %1497 = vmatpush2.msra.mxu0 0.0
        %1498 = vmatprep.subr.mxu0 0.0
        %1499 = vmatpush2.msra.mxu0 0.0
        %1500 = vmatprep.subr.mxu0 0.0
        %1501 = vmatpush2.msra.mxu0 0.0
        %1502 = vmatprep.subr.mxu0 0.0
        %1503 = vmatpush2.msra.mxu0 0.0
        %1504 = vmatprep.subr.mxu0 0.0
        %1505 = vmatpush2.msra.mxu0 0.0
        %1506 = vmatprep.subr.mxu0 0.0
        %1507 = vmatpush2.msra.mxu0 0.0
        %1508 = vmatprep.subr.mxu0 0.0
        %1509 = vmatpush2.msra.mxu0 0.0
        %1510 = vmatprep.subr.mxu0 0.0
        %1511 = vmatpush2.msra.mxu0 0.0
        %1512 = vmatprep.subr.mxu0 0.0
        %1513 = vmatpush2.msra.mxu0 0.0
        %1514 = vmatprep.subr.mxu0 0.0
        %1515 = vmatpush2.msra.mxu0 0.0
        %1516 = vmatprep.subr.mxu0 0.0
        %1517 = vmatpush2.msra.mxu0 0.0
        %1518 = vmatprep.subr.mxu0 0.0
        %1519 = vmatpush2.msra.mxu0 0.0
        %1520 = vmatprep.subr.mxu0 0.0
        %1521 = vmatpush2.msra.mxu0 0.0
        %1522 = vmatprep.subr.mxu0 0.0
        %1523 = vmatpush2.msra.mxu0 0.0
        %1524 = vmatprep.mubr.f32.mxu0 0.0
        %v1525 = vand.u32 %v1238, 4294901760
        %1526 = vmatmul.mubr.f32.gmra.mxu0 %v1525
        %v1527 = vpop.f32.mrf.mxu0
        %v1528 = vadd.f32 %v1342, %v1527
        %v1529 = vpop.f32.mrf.mxu0
        %1530 = vmatprep.mubr.f32.mxu0 0.0
        %v1531 = vand.u32 %v1241, 4294901760
        %1532 = vmatmul.mubr.f32.gmra.mxu0 %v1531
        %v1533 = vpop.f32.mrf.mxu0
        %v1534 = vadd.f32 %v1352, %v1533
        %v1535 = vpop.f32.mrf.mxu0
        %1536 = vmatprep.mubr.f32.mxu0 0.0
        %v1537 = vand.u32 %v1244, 4294901760
        %1538 = vmatmul.mubr.f32.gmra.mxu0 %v1537
        %v1539 = vpop.f32.mrf.mxu0
        %v1540 = vadd.f32 %v1362, %v1539
        %v1541 = vpop.f32.mrf.mxu0
        %1542 = vmatprep.mubr.f32.mxu0 0.0
        %v1543 = vand.u32 %v1247, 4294901760
        %1544 = vmatmul.mubr.f32.gmra.mxu0 %v1543
        %v1545 = vpop.f32.mrf.mxu0
        %v1546 = vadd.f32 %v1372, %v1545
        %v1547 = vpop.f32.mrf.mxu0
        %1548 = vmatprep.mubr.f32.mxu0 0.0
        %v1549 = vand.u32 %v1250, 4294901760
        %1550 = vmatmul.mubr.f32.gmra.mxu0 %v1549
        %v1551 = vpop.f32.mrf.mxu0
        %v1552 = vadd.f32 %v1382, %v1551
        %v1553 = vpop.f32.mrf.mxu0
        %1554 = vmatprep.mubr.f32.mxu0 0.0
        %v1555 = vand.u32 %v1253, 4294901760
        %1556 = vmatmul.mubr.f32.gmra.mxu0 %v1555
        %v1557 = vpop.f32.mrf.mxu0
        %v1558 = vadd.f32 %v1392, %v1557
        %v1559 = vpop.f32.mrf.mxu0
        %1560 = vmatprep.mubr.f32.mxu0 0.0
        %v1561 = vand.u32 %v1256, 4294901760
        %1562 = vmatmul.mubr.f32.gmra.mxu0 %v1561
        %v1563 = vpop.f32.mrf.mxu0
        %v1564 = vadd.f32 %v1402, %v1563
        %v1565 = vpop.f32.mrf.mxu0
        %1566 = vmatprep.mubr.f32.mxu0 0.0
        %v1567 = vand.u32 %v1259, 4294901760
        %1568 = vmatmul.mubr.f32.gmra.mxu0 %v1567
        %v1569 = vpop.f32.mrf.mxu0
        %v1570 = vadd.f32 %v1412, %v1569
        %v1571 = vpop.f32.mrf.mxu0
        %1572 = vdwg.mxu0
        %1573 = vmatprep.subr.mxu0 0.0
        %1574 = vmatpush1.msra.mxu0 0.0
        %1575 = vmatprep.subr.mxu0 0.0
        %1576 = vmatpush1.msra.mxu0 0.0
        %1577 = vmatprep.subr.mxu0 0.0
        %1578 = vmatpush1.msra.mxu0 0.0
        %1579 = vmatprep.subr.mxu0 0.0
        %1580 = vmatpush1.msra.mxu0 0.0
        %1581 = vmatprep.subr.mxu0 0.0
        %1582 = vmatpush1.msra.mxu0 0.0
        %1583 = vmatprep.subr.mxu0 0.0
        %1584 = vmatpush1.msra.mxu0 0.0
        %1585 = vmatprep.subr.mxu0 0.0
        %1586 = vmatpush1.msra.mxu0 0.0
        %1587 = vmatprep.subr.mxu0 0.0
        %v1588 = vand.u32 %v1228, 4294901760
        %v1589 = vsub.f32 %v1228, %v1588
        %1590 = vmatpush1.msra.mxu0 %v1589
        %1591 = vmatprep.subr.mxu0 0.0
        %v1592 = vand.u32 %v1227, 4294901760
        %v1593 = vsub.f32 %v1227, %v1592
        %1594 = vmatpush1.msra.mxu0 %v1593
        %1595 = vmatprep.subr.mxu0 0.0
        %v1596 = vand.u32 %v1226, 4294901760
        %v1597 = vsub.f32 %v1226, %v1596
        %1598 = vmatpush1.msra.mxu0 %v1597
        %1599 = vmatprep.subr.mxu0 0.0
        %v1600 = vand.u32 %v1225, 4294901760
        %v1601 = vsub.f32 %v1225, %v1600
        %1602 = vmatpush1.msra.mxu0 %v1601
        %1603 = vmatprep.subr.mxu0 0.0
        %v1604 = vand.u32 %v1224, 4294901760
        %v1605 = vsub.f32 %v1224, %v1604
        %1606 = vmatpush1.msra.mxu0 %v1605
        %1607 = vmatprep.subr.mxu0 0.0
        %v1608 = vand.u32 %v1223, 4294901760
        %v1609 = vsub.f32 %v1223, %v1608
        %1610 = vmatpush1.msra.mxu0 %v1609
        %1611 = vmatprep.subr.mxu0 0.0
        %v1612 = vand.u32 %v1222, 4294901760
        %v1613 = vsub.f32 %v1222, %v1612
        %1614 = vmatpush1.msra.mxu0 %v1613
        %1615 = vmatprep.subr.mxu0 0.0
        %v1616 = vand.u32 %v1221, 4294901760
        %v1617 = vsub.f32 %v1221, %v1616
        %1618 = vmatpush1.msra.mxu0 %v1617
        %1619 = vmatprep.subr.mxu0 0.0
        %v1620 = vand.u32 %v1220, 4294901760
        %v1621 = vsub.f32 %v1220, %v1620
        %1622 = vmatpush1.msra.mxu0 %v1621
        %1623 = vmatprep.subr.mxu0 0.0
        %1624 = vmatpush2.msra.mxu0 0.0
        %1625 = vmatprep.subr.mxu0 0.0
        %1626 = vmatpush2.msra.mxu0 0.0
        %1627 = vmatprep.subr.mxu0 0.0
        %1628 = vmatpush2.msra.mxu0 0.0
        %1629 = vmatprep.subr.mxu0 0.0
        %1630 = vmatpush2.msra.mxu0 0.0
        %1631 = vmatprep.subr.mxu0 0.0
        %1632 = vmatpush2.msra.mxu0 0.0
        %1633 = vmatprep.subr.mxu0 0.0
        %1634 = vmatpush2.msra.mxu0 0.0
        %1635 = vmatprep.subr.mxu0 0.0
        %1636 = vmatpush2.msra.mxu0 0.0
        %1637 = vmatprep.subr.mxu0 0.0
        %1638 = vmatpush2.msra.mxu0 0.0
        %1639 = vmatprep.subr.mxu0 0.0
        %1640 = vmatpush2.msra.mxu0 0.0
        %1641 = vmatprep.subr.mxu0 0.0
        %1642 = vmatpush2.msra.mxu0 0.0
        %1643 = vmatprep.subr.mxu0 0.0
        %1644 = vmatpush2.msra.mxu0 0.0
        %1645 = vmatprep.subr.mxu0 0.0
        %1646 = vmatpush2.msra.mxu0 0.0
        %1647 = vmatprep.subr.mxu0 0.0
        %1648 = vmatpush2.msra.mxu0 0.0
        %1649 = vmatprep.subr.mxu0 0.0
        %1650 = vmatpush2.msra.mxu0 0.0
        %1651 = vmatprep.subr.mxu0 0.0
        %1652 = vmatpush2.msra.mxu0 0.0
        %1653 = vmatprep.subr.mxu0 0.0
        %1654 = vmatpush2.msra.mxu0 0.0
        %1655 = vmatprep.mubr.f32.mxu0 0.0
        %v1656 = vand.u32 %v1238, 4294901760
        %v1657 = vsub.f32 %v1238, %v1656
        %1658 = vmatmul.mubr.f32.gmra.mxu0 %v1657
        %v1659 = vpop.f32.mrf.mxu0
        %v1660 = vadd.f32 %v1528, %v1659
        %v1661 = vpop.f32.mrf.mxu0
        %1662 = vmatprep.mubr.f32.mxu0 0.0
        %v1663 = vand.u32 %v1241, 4294901760
        %v1664 = vsub.f32 %v1241, %v1663
        %1665 = vmatmul.mubr.f32.gmra.mxu0 %v1664
        %v1666 = vpop.f32.mrf.mxu0
        %v1667 = vadd.f32 %v1534, %v1666
        %v1668 = vpop.f32.mrf.mxu0
        %1669 = vmatprep.mubr.f32.mxu0 0.0
        %v1670 = vand.u32 %v1244, 4294901760
        %v1671 = vsub.f32 %v1244, %v1670
        %1672 = vmatmul.mubr.f32.gmra.mxu0 %v1671
        %v1673 = vpop.f32.mrf.mxu0
        %v1674 = vadd.f32 %v1540, %v1673
        %v1675 = vpop.f32.mrf.mxu0
        %1676 = vmatprep.mubr.f32.mxu0 0.0
        %v1677 = vand.u32 %v1247, 4294901760
        %v1678 = vsub.f32 %v1247, %v1677
        %1679 = vmatmul.mubr.f32.gmra.mxu0 %v1678
        %v1680 = vpop.f32.mrf.mxu0
        %v1681 = vadd.f32 %v1546, %v1680
        %v1682 = vpop.f32.mrf.mxu0
        %1683 = vmatprep.mubr.f32.mxu0 0.0
        %v1684 = vand.u32 %v1250, 4294901760
        %v1685 = vsub.f32 %v1250, %v1684
        %1686 = vmatmul.mubr.f32.gmra.mxu0 %v1685
        %v1687 = vpop.f32.mrf.mxu0
        %v1688 = vadd.f32 %v1552, %v1687
        %v1689 = vpop.f32.mrf.mxu0
        %1690 = vmatprep.mubr.f32.mxu0 0.0
        %v1691 = vand.u32 %v1253, 4294901760
        %v1692 = vsub.f32 %v1253, %v1691
        %1693 = vmatmul.mubr.f32.gmra.mxu0 %v1692
        %v1694 = vpop.f32.mrf.mxu0
        %v1695 = vadd.f32 %v1558, %v1694
        %v1696 = vpop.f32.mrf.mxu0
        %1697 = vmatprep.mubr.f32.mxu0 0.0
        %v1698 = vand.u32 %v1256, 4294901760
        %v1699 = vsub.f32 %v1256, %v1698
        %1700 = vmatmul.mubr.f32.gmra.mxu0 %v1699
        %v1701 = vpop.f32.mrf.mxu0
        %v1702 = vadd.f32 %v1564, %v1701
        %v1703 = vpop.f32.mrf.mxu0
        %1704 = vmatprep.mubr.f32.mxu0 0.0
        %v1705 = vand.u32 %v1259, 4294901760
        %v1706 = vsub.f32 %v1259, %v1705
        %1707 = vmatmul.mubr.f32.gmra.mxu0 %v1706
        %v1708 = vpop.f32.mrf.mxu0
        %v1709 = vadd.f32 %v1570, %v1708
        %v1710 = vpop.f32.mrf.mxu0
        %1711 = vdwg.mxu0
        %1712 = vmatprep.subr.mxu0 0.0
        %1713 = vmatpush1.msra.mxu0 0.0
        %1714 = vmatprep.subr.mxu0 0.0
        %1715 = vmatpush1.msra.mxu0 0.0
        %1716 = vmatprep.subr.mxu0 0.0
        %1717 = vmatpush1.msra.mxu0 0.0
        %1718 = vmatprep.subr.mxu0 0.0
        %1719 = vmatpush1.msra.mxu0 0.0
        %1720 = vmatprep.subr.mxu0 0.0
        %1721 = vmatpush1.msra.mxu0 0.0
        %1722 = vmatprep.subr.mxu0 0.0
        %1723 = vmatpush1.msra.mxu0 0.0
        %1724 = vmatprep.subr.mxu0 0.0
        %1725 = vmatpush1.msra.mxu0 0.0
        %1726 = vmatprep.subr.mxu0 0.0
        %v1727 = vand.u32 %v1228, 4294901760
        %1728 = vmatpush1.msra.mxu0 %v1727
        %1729 = vmatprep.subr.mxu0 0.0
        %v1730 = vand.u32 %v1227, 4294901760
        %1731 = vmatpush1.msra.mxu0 %v1730
        %1732 = vmatprep.subr.mxu0 0.0
        %v1733 = vand.u32 %v1226, 4294901760
        %1734 = vmatpush1.msra.mxu0 %v1733
        %1735 = vmatprep.subr.mxu0 0.0
        %v1736 = vand.u32 %v1225, 4294901760
        %1737 = vmatpush1.msra.mxu0 %v1736
        %1738 = vmatprep.subr.mxu0 0.0
        %v1739 = vand.u32 %v1224, 4294901760
        %1740 = vmatpush1.msra.mxu0 %v1739
        %1741 = vmatprep.subr.mxu0 0.0
        %v1742 = vand.u32 %v1223, 4294901760
        %1743 = vmatpush1.msra.mxu0 %v1742
        %1744 = vmatprep.subr.mxu0 0.0
        %v1745 = vand.u32 %v1222, 4294901760
        %1746 = vmatpush1.msra.mxu0 %v1745
        %1747 = vmatprep.subr.mxu0 0.0
        %v1748 = vand.u32 %v1221, 4294901760
        %1749 = vmatpush1.msra.mxu0 %v1748
        %1750 = vmatprep.subr.mxu0 0.0
        %v1751 = vand.u32 %v1220, 4294901760
        %1752 = vmatpush1.msra.mxu0 %v1751
        %1753 = vmatprep.subr.mxu0 0.0
        %1754 = vmatpush2.msra.mxu0 0.0
        %1755 = vmatprep.subr.mxu0 0.0
        %1756 = vmatpush2.msra.mxu0 0.0
        %1757 = vmatprep.subr.mxu0 0.0
        %1758 = vmatpush2.msra.mxu0 0.0
        %1759 = vmatprep.subr.mxu0 0.0
        %1760 = vmatpush2.msra.mxu0 0.0
        %1761 = vmatprep.subr.mxu0 0.0
        %1762 = vmatpush2.msra.mxu0 0.0
        %1763 = vmatprep.subr.mxu0 0.0
        %1764 = vmatpush2.msra.mxu0 0.0
        %1765 = vmatprep.subr.mxu0 0.0
        %1766 = vmatpush2.msra.mxu0 0.0
        %1767 = vmatprep.subr.mxu0 0.0
        %1768 = vmatpush2.msra.mxu0 0.0
        %1769 = vmatprep.subr.mxu0 0.0
        %1770 = vmatpush2.msra.mxu0 0.0
        %1771 = vmatprep.subr.mxu0 0.0
        %1772 = vmatpush2.msra.mxu0 0.0
        %1773 = vmatprep.subr.mxu0 0.0
        %1774 = vmatpush2.msra.mxu0 0.0
        %1775 = vmatprep.subr.mxu0 0.0
        %1776 = vmatpush2.msra.mxu0 0.0
        %1777 = vmatprep.subr.mxu0 0.0
        %1778 = vmatpush2.msra.mxu0 0.0
        %1779 = vmatprep.subr.mxu0 0.0
        %1780 = vmatpush2.msra.mxu0 0.0
        %1781 = vmatprep.subr.mxu0 0.0
        %1782 = vmatpush2.msra.mxu0 0.0
        %1783 = vmatprep.subr.mxu0 0.0
        %1784 = vmatpush2.msra.mxu0 0.0
        %1785 = vmatprep.mubr.f32.mxu0 0.0
        %v1786 = vand.u32 %v1238, 4294901760
        %v1787 = vsub.f32 %v1238, %v1786
        %v1788 = vand.u32 %v1787, 4294901760
        %1789 = vmatmul.mubr.f32.gmra.mxu0 %v1788
        %v1790 = vpop.f32.mrf.mxu0
        %v1791 = vadd.f32 %v1660, %v1790
        %v1792 = vpop.f32.mrf.mxu0
        %1793 = vmatprep.mubr.f32.mxu0 0.0
        %v1794 = vand.u32 %v1241, 4294901760
        %v1795 = vsub.f32 %v1241, %v1794
        %v1796 = vand.u32 %v1795, 4294901760
        %1797 = vmatmul.mubr.f32.gmra.mxu0 %v1796
        %v1798 = vpop.f32.mrf.mxu0
        %v1799 = vadd.f32 %v1667, %v1798
        %v1800 = vpop.f32.mrf.mxu0
        %1801 = vmatprep.mubr.f32.mxu0 0.0
        %v1802 = vand.u32 %v1244, 4294901760
        %v1803 = vsub.f32 %v1244, %v1802
        %v1804 = vand.u32 %v1803, 4294901760
        %1805 = vmatmul.mubr.f32.gmra.mxu0 %v1804
        %v1806 = vpop.f32.mrf.mxu0
        %v1807 = vadd.f32 %v1674, %v1806
        %v1808 = vpop.f32.mrf.mxu0
        %1809 = vmatprep.mubr.f32.mxu0 0.0
        %v1810 = vand.u32 %v1247, 4294901760
        %v1811 = vsub.f32 %v1247, %v1810
        %v1812 = vand.u32 %v1811, 4294901760
        %1813 = vmatmul.mubr.f32.gmra.mxu0 %v1812
        %v1814 = vpop.f32.mrf.mxu0
        %v1815 = vadd.f32 %v1681, %v1814
        %v1816 = vpop.f32.mrf.mxu0
        %1817 = vmatprep.mubr.f32.mxu0 0.0
        %v1818 = vand.u32 %v1250, 4294901760
        %v1819 = vsub.f32 %v1250, %v1818
        %v1820 = vand.u32 %v1819, 4294901760
        %1821 = vmatmul.mubr.f32.gmra.mxu0 %v1820
        %v1822 = vpop.f32.mrf.mxu0
        %v1823 = vadd.f32 %v1688, %v1822
        %v1824 = vpop.f32.mrf.mxu0
        %1825 = vmatprep.mubr.f32.mxu0 0.0
        %v1826 = vand.u32 %v1253, 4294901760
        %v1827 = vsub.f32 %v1253, %v1826
        %v1828 = vand.u32 %v1827, 4294901760
        %1829 = vmatmul.mubr.f32.gmra.mxu0 %v1828
        %v1830 = vpop.f32.mrf.mxu0
        %v1831 = vadd.f32 %v1695, %v1830
        %v1832 = vpop.f32.mrf.mxu0
        %1833 = vmatprep.mubr.f32.mxu0 0.0
        %v1834 = vand.u32 %v1256, 4294901760
        %v1835 = vsub.f32 %v1256, %v1834
        %v1836 = vand.u32 %v1835, 4294901760
        %1837 = vmatmul.mubr.f32.gmra.mxu0 %v1836
        %v1838 = vpop.f32.mrf.mxu0
        %v1839 = vadd.f32 %v1702, %v1838
        %v1840 = vpop.f32.mrf.mxu0
        %1841 = vmatprep.mubr.f32.mxu0 0.0
        %v1842 = vand.u32 %v1259, 4294901760
        %v1843 = vsub.f32 %v1259, %v1842
        %v1844 = vand.u32 %v1843, 4294901760
        %1845 = vmatmul.mubr.f32.gmra.mxu0 %v1844
        %v1846 = vpop.f32.mrf.mxu0
        %v1847 = vadd.f32 %v1709, %v1846
        %v1848 = vpop.f32.mrf.mxu0
        %1849 = vdwg.mxu0
        %1850 = vmatprep.subr.mxu0 0.0
        %1851 = vmatpush1.msra.mxu0 0.0
        %1852 = vmatprep.subr.mxu0 0.0
        %1853 = vmatpush1.msra.mxu0 0.0
        %1854 = vmatprep.subr.mxu0 0.0
        %1855 = vmatpush1.msra.mxu0 0.0
        %1856 = vmatprep.subr.mxu0 0.0
        %1857 = vmatpush1.msra.mxu0 0.0
        %1858 = vmatprep.subr.mxu0 0.0
        %1859 = vmatpush1.msra.mxu0 0.0
        %1860 = vmatprep.subr.mxu0 0.0
        %1861 = vmatpush1.msra.mxu0 0.0
        %1862 = vmatprep.subr.mxu0 0.0
        %1863 = vmatpush1.msra.mxu0 0.0
        %1864 = vmatprep.subr.mxu0 0.0
        %v1865 = vand.u32 %v1228, 4294901760
        %v1866 = vsub.f32 %v1228, %v1865
        %v1867 = vand.u32 %v1866, 4294901760
        %1868 = vmatpush1.msra.mxu0 %v1867
        %1869 = vmatprep.subr.mxu0 0.0
        %v1870 = vand.u32 %v1227, 4294901760
        %v1871 = vsub.f32 %v1227, %v1870
        %v1872 = vand.u32 %v1871, 4294901760
        %1873 = vmatpush1.msra.mxu0 %v1872
        %1874 = vmatprep.subr.mxu0 0.0
        %v1875 = vand.u32 %v1226, 4294901760
        %v1876 = vsub.f32 %v1226, %v1875
        %v1877 = vand.u32 %v1876, 4294901760
        %1878 = vmatpush1.msra.mxu0 %v1877
        %1879 = vmatprep.subr.mxu0 0.0
        %v1880 = vand.u32 %v1225, 4294901760
        %v1881 = vsub.f32 %v1225, %v1880
        %v1882 = vand.u32 %v1881, 4294901760
        %1883 = vmatpush1.msra.mxu0 %v1882
        %1884 = vmatprep.subr.mxu0 0.0
        %v1885 = vand.u32 %v1224, 4294901760
        %v1886 = vsub.f32 %v1224, %v1885
        %v1887 = vand.u32 %v1886, 4294901760
        %1888 = vmatpush1.msra.mxu0 %v1887
        %1889 = vmatprep.subr.mxu0 0.0
        %v1890 = vand.u32 %v1223, 4294901760
        %v1891 = vsub.f32 %v1223, %v1890
        %v1892 = vand.u32 %v1891, 4294901760
        %1893 = vmatpush1.msra.mxu0 %v1892
        %1894 = vmatprep.subr.mxu0 0.0
        %v1895 = vand.u32 %v1222, 4294901760
        %v1896 = vsub.f32 %v1222, %v1895
        %v1897 = vand.u32 %v1896, 4294901760
        %1898 = vmatpush1.msra.mxu0 %v1897
        %1899 = vmatprep.subr.mxu0 0.0
        %v1900 = vand.u32 %v1221, 4294901760
        %v1901 = vsub.f32 %v1221, %v1900
        %v1902 = vand.u32 %v1901, 4294901760
        %1903 = vmatpush1.msra.mxu0 %v1902
        %1904 = vmatprep.subr.mxu0 0.0
        %v1905 = vand.u32 %v1220, 4294901760
        %v1906 = vsub.f32 %v1220, %v1905
        %v1907 = vand.u32 %v1906, 4294901760
        %1908 = vmatpush1.msra.mxu0 %v1907
        %1909 = vmatprep.subr.mxu0 0.0
        %1910 = vmatpush2.msra.mxu0 0.0
        %1911 = vmatprep.subr.mxu0 0.0
        %1912 = vmatpush2.msra.mxu0 0.0
        %1913 = vmatprep.subr.mxu0 0.0
        %1914 = vmatpush2.msra.mxu0 0.0
        %1915 = vmatprep.subr.mxu0 0.0
        %1916 = vmatpush2.msra.mxu0 0.0
        %1917 = vmatprep.subr.mxu0 0.0
        %1918 = vmatpush2.msra.mxu0 0.0
        %1919 = vmatprep.subr.mxu0 0.0
        %1920 = vmatpush2.msra.mxu0 0.0
        %1921 = vmatprep.subr.mxu0 0.0
        %1922 = vmatpush2.msra.mxu0 0.0
        %1923 = vmatprep.subr.mxu0 0.0
        %1924 = vmatpush2.msra.mxu0 0.0
        %1925 = vmatprep.subr.mxu0 0.0
        %1926 = vmatpush2.msra.mxu0 0.0
        %1927 = vmatprep.subr.mxu0 0.0
        %1928 = vmatpush2.msra.mxu0 0.0
        %1929 = vmatprep.subr.mxu0 0.0
        %1930 = vmatpush2.msra.mxu0 0.0
        %1931 = vmatprep.subr.mxu0 0.0
        %1932 = vmatpush2.msra.mxu0 0.0
        %1933 = vmatprep.subr.mxu0 0.0
        %1934 = vmatpush2.msra.mxu0 0.0
        %1935 = vmatprep.subr.mxu0 0.0
        %1936 = vmatpush2.msra.mxu0 0.0
        %1937 = vmatprep.subr.mxu0 0.0
        %1938 = vmatpush2.msra.mxu0 0.0
        %1939 = vmatprep.subr.mxu0 0.0
        %1940 = vmatpush2.msra.mxu0 0.0
        %1941 = vmatprep.mubr.f32.mxu0 0.0
        %v1942 = vand.u32 %v1238, 4294901760
        %1943 = vmatmul.mubr.f32.gmra.mxu0 %v1942
        %v1944 = vpop.f32.mrf.mxu0
        %v1945 = vadd.f32 %v1791, %v1944
        %v1946 = vpop.f32.mrf.mxu0
        %1947 = vmatprep.mubr.f32.mxu0 0.0
        %v1948 = vand.u32 %v1241, 4294901760
        %1949 = vmatmul.mubr.f32.gmra.mxu0 %v1948
        %v1950 = vpop.f32.mrf.mxu0
        %v1951 = vadd.f32 %v1799, %v1950
        %v1952 = vpop.f32.mrf.mxu0
        %1953 = vmatprep.mubr.f32.mxu0 0.0
        %v1954 = vand.u32 %v1244, 4294901760
        %1955 = vmatmul.mubr.f32.gmra.mxu0 %v1954
        %v1956 = vpop.f32.mrf.mxu0
        %v1957 = vadd.f32 %v1807, %v1956
        %v1958 = vpop.f32.mrf.mxu0
        %1959 = vmatprep.mubr.f32.mxu0 0.0
        %v1960 = vand.u32 %v1247, 4294901760
        %1961 = vmatmul.mubr.f32.gmra.mxu0 %v1960
        %v1962 = vpop.f32.mrf.mxu0
        %v1963 = vadd.f32 %v1815, %v1962
        %v1964 = vpop.f32.mrf.mxu0
        %1965 = vmatprep.mubr.f32.mxu0 0.0
        %v1966 = vand.u32 %v1250, 4294901760
        %1967 = vmatmul.mubr.f32.gmra.mxu0 %v1966
        %v1968 = vpop.f32.mrf.mxu0
        %v1969 = vadd.f32 %v1823, %v1968
        %v1970 = vpop.f32.mrf.mxu0
        %1971 = vmatprep.mubr.f32.mxu0 0.0
        %v1972 = vand.u32 %v1253, 4294901760
        %1973 = vmatmul.mubr.f32.gmra.mxu0 %v1972
        %v1974 = vpop.f32.mrf.mxu0
        %v1975 = vadd.f32 %v1831, %v1974
        %v1976 = vpop.f32.mrf.mxu0
        %1977 = vmatprep.mubr.f32.mxu0 0.0
        %v1978 = vand.u32 %v1256, 4294901760
        %1979 = vmatmul.mubr.f32.gmra.mxu0 %v1978
        %v1980 = vpop.f32.mrf.mxu0
        %v1981 = vadd.f32 %v1839, %v1980
        %v1982 = vpop.f32.mrf.mxu0
        %1983 = vmatprep.mubr.f32.mxu0 0.0
        %v1984 = vand.u32 %v1259, 4294901760
        %1985 = vmatmul.mubr.f32.gmra.mxu0 %v1984
        %v1986 = vpop.f32.mrf.mxu0
        %v1987 = vadd.f32 %v1847, %v1986
        %v1988 = vpop.f32.mrf.mxu0
        %1989 = vdwg.mxu0
        %1990 = vmatprep.subr.mxu0 0.0
        %1991 = vmatpush1.msra.mxu0 0.0
        %1992 = vmatprep.subr.mxu0 0.0
        %1993 = vmatpush1.msra.mxu0 0.0
        %1994 = vmatprep.subr.mxu0 0.0
        %1995 = vmatpush1.msra.mxu0 0.0
        %1996 = vmatprep.subr.mxu0 0.0
        %1997 = vmatpush1.msra.mxu0 0.0
        %1998 = vmatprep.subr.mxu0 0.0
        %1999 = vmatpush1.msra.mxu0 0.0
        %2000 = vmatprep.subr.mxu0 0.0
        %2001 = vmatpush1.msra.mxu0 0.0
        %2002 = vmatprep.subr.mxu0 0.0
        %2003 = vmatpush1.msra.mxu0 0.0
        %2004 = vmatprep.subr.mxu0 0.0
        %v2005 = vand.u32 %v1228, 4294901760
        %2006 = vmatpush1.msra.mxu0 %v2005
        %2007 = vmatprep.subr.mxu0 0.0
        %v2008 = vand.u32 %v1227, 4294901760
        %2009 = vmatpush1.msra.mxu0 %v2008
        %2010 = vmatprep.subr.mxu0 0.0
        %v2011 = vand.u32 %v1226, 4294901760
        %2012 = vmatpush1.msra.mxu0 %v2011
        %2013 = vmatprep.subr.mxu0 0.0
        %v2014 = vand.u32 %v1225, 4294901760
        %2015 = vmatpush1.msra.mxu0 %v2014
        %2016 = vmatprep.subr.mxu0 0.0
        %v2017 = vand.u32 %v1224, 4294901760
        %2018 = vmatpush1.msra.mxu0 %v2017
        %2019 = vmatprep.subr.mxu0 0.0
        %v2020 = vand.u32 %v1223, 4294901760
        %2021 = vmatpush1.msra.mxu0 %v2020
        %2022 = vmatprep.subr.mxu0 0.0
        %v2023 = vand.u32 %v1222, 4294901760
        %2024 = vmatpush1.msra.mxu0 %v2023
        %2025 = vmatprep.subr.mxu0 0.0
        %v2026 = vand.u32 %v1221, 4294901760
        %2027 = vmatpush1.msra.mxu0 %v2026
        %2028 = vmatprep.subr.mxu0 0.0
        %v2029 = vand.u32 %v1220, 4294901760
        %2030 = vmatpush1.msra.mxu0 %v2029
        %2031 = vmatprep.subr.mxu0 0.0
        %2032 = vmatpush2.msra.mxu0 0.0
        %2033 = vmatprep.subr.mxu0 0.0
        %2034 = vmatpush2.msra.mxu0 0.0
        %2035 = vmatprep.subr.mxu0 0.0
        %2036 = vmatpush2.msra.mxu0 0.0
        %2037 = vmatprep.subr.mxu0 0.0
        %2038 = vmatpush2.msra.mxu0 0.0
        %2039 = vmatprep.subr.mxu0 0.0
        %2040 = vmatpush2.msra.mxu0 0.0
        %2041 = vmatprep.subr.mxu0 0.0
        %2042 = vmatpush2.msra.mxu0 0.0
        %2043 = vmatprep.subr.mxu0 0.0
        %2044 = vmatpush2.msra.mxu0 0.0
        %2045 = vmatprep.subr.mxu0 0.0
        %2046 = vmatpush2.msra.mxu0 0.0
        %2047 = vmatprep.subr.mxu0 0.0
        %2048 = vmatpush2.msra.mxu0 0.0
        %2049 = vmatprep.subr.mxu0 0.0
        %2050 = vmatpush2.msra.mxu0 0.0
        %2051 = vmatprep.subr.mxu0 0.0
        %2052 = vmatpush2.msra.mxu0 0.0
        %2053 = vmatprep.subr.mxu0 0.0
        %2054 = vmatpush2.msra.mxu0 0.0
        %2055 = vmatprep.subr.mxu0 0.0
        %2056 = vmatpush2.msra.mxu0 0.0
        %2057 = vmatprep.subr.mxu0 0.0
        %2058 = vmatpush2.msra.mxu0 0.0
        %2059 = vmatprep.subr.mxu0 0.0
        %2060 = vmatpush2.msra.mxu0 0.0
        %2061 = vmatprep.subr.mxu0 0.0
        %2062 = vmatpush2.msra.mxu0 0.0
        %2063 = vmatprep.mubr.f32.mxu0 0.0
        %v2064 = vand.u32 %v1238, 4294901760
        %2065 = vmatmul.mubr.f32.gmra.mxu0 %v2064
        %v2066 = vpop.f32.mrf.mxu0
        %v2067 = vadd.f32 %v1945, %v2066
        %v2068 = vpop.f32.mrf.mxu0
        %2069 = vmatprep.mubr.f32.mxu0 0.0
        %v2070 = vand.u32 %v1241, 4294901760
        %2071 = vmatmul.mubr.f32.gmra.mxu0 %v2070
        %v2072 = vpop.f32.mrf.mxu0
        %v2073 = vadd.f32 %v1951, %v2072
        %v2074 = vpop.f32.mrf.mxu0
        %2075 = vmatprep.mubr.f32.mxu0 0.0
        %v2076 = vand.u32 %v1244, 4294901760
        %2077 = vmatmul.mubr.f32.gmra.mxu0 %v2076
        %v2078 = vpop.f32.mrf.mxu0
        %v2079 = vadd.f32 %v1957, %v2078
        %v2080 = vpop.f32.mrf.mxu0
        %2081 = vmatprep.mubr.f32.mxu0 0.0
        %v2082 = vand.u32 %v1247, 4294901760
        %2083 = vmatmul.mubr.f32.gmra.mxu0 %v2082
        %v2084 = vpop.f32.mrf.mxu0
        %v2085 = vadd.f32 %v1963, %v2084
        %v2086 = vpop.f32.mrf.mxu0
        %2087 = vmatprep.mubr.f32.mxu0 0.0
        %v2088 = vand.u32 %v1250, 4294901760
        %2089 = vmatmul.mubr.f32.gmra.mxu0 %v2088
        %v2090 = vpop.f32.mrf.mxu0
        %v2091 = vadd.f32 %v1969, %v2090
        %v2092 = vpop.f32.mrf.mxu0
        %2093 = vmatprep.mubr.f32.mxu0 0.0
        %v2094 = vand.u32 %v1253, 4294901760
        %2095 = vmatmul.mubr.f32.gmra.mxu0 %v2094
        %v2096 = vpop.f32.mrf.mxu0
        %v2097 = vadd.f32 %v1975, %v2096
        %v2098 = vpop.f32.mrf.mxu0
        %2099 = vmatprep.mubr.f32.mxu0 0.0
        %v2100 = vand.u32 %v1256, 4294901760
        %2101 = vmatmul.mubr.f32.gmra.mxu0 %v2100
        %v2102 = vpop.f32.mrf.mxu0
        %v2103 = vadd.f32 %v1981, %v2102
        %v2104 = vpop.f32.mrf.mxu0
        %2105 = vmatprep.mubr.f32.mxu0 0.0
        %v2106 = vand.u32 %v1259, 4294901760
        %2107 = vmatmul.mubr.f32.gmra.mxu0 %v2106
        %v2108 = vpop.f32.mrf.mxu0
        %v2109 = vadd.f32 %v1987, %v2108
        %v2110 = vpop.f32.mrf.mxu0
        %2111 = vdwg.mxu0
        %v2112 = vmax.f32 %v2067, 0.0
        %v2113 = vmax.f32 %v2073, 0.0
        %v2114 = vmax.f32 %v2079, 0.0
        %v2115 = vmax.f32 %v2085, 0.0
        %v2116 = vmax.f32 %v2091, 0.0
        %v2117 = vmax.f32 %v2097, 0.0
        %v2118 = vmax.f32 %v2103, 0.0
        %v2119 = vmax.f32 %v2109, 0.0
        %2128 = vrot.lane.b32.xlu0 %v2112, 120
        %v2129 = vpop.permute.xlu0 %2128
        %2130 = vrot.lane.b32.xlu0 %v2113, 120
        %v2131 = vpop.permute.xlu0 %2130
        %2132 = vrot.lane.b32.xlu0 %v2114, 120
        %v2133 = vpop.permute.xlu0 %2132
        %2134 = vrot.lane.b32.xlu0 %v2115, 120
        %v2135 = vpop.permute.xlu0 %2134
        %2136 = vrot.lane.b32.xlu0 %v2116, 120
        %v2137 = vpop.permute.xlu0 %2136
        %2138 = vrot.lane.b32.xlu0 %v2117, 120
        %v2139 = vpop.permute.xlu0 %2138
        %2140 = vrot.lane.b32.xlu0 %v2118, 120
        %v2141 = vpop.permute.xlu0 %2140
        %2142 = vrot.lane.b32.xlu0 %v2119, 120
        %v2143 = vpop.permute.xlu0 %2142
        %v2152 = vadd.f32 %v2112, %v2129
        %v2153 = vadd.f32 %v2113, %v2131
        %v2154 = vadd.f32 %v2114, %v2133
        %v2155 = vadd.f32 %v2115, %v2135
        %v2156 = vadd.f32 %v2116, %v2137
        %v2157 = vadd.f32 %v2117, %v2139
        %v2158 = vadd.f32 %v2118, %v2141
        %v2159 = vadd.f32 %v2119, %v2143
        %v2160 = vsel %vm1013, %v2152, 0.0
        %v2161 = vsel %vm1013, %v2153, 0.0
        %v2162 = vadd.f32 %v2160, %v2161
        %v2163 = vsel %vm1013, %v2154, 0.0
        %v2164 = vadd.f32 %v2162, %v2163
        %v2165 = vsel %vm1013, %v2155, 0.0
        %v2166 = vadd.f32 %v2164, %v2165
        %v2167 = vsel %vm1013, %v2156, 0.0
        %v2168 = vadd.f32 %v2166, %v2167
        %v2169 = vsel %vm1013, %v2157, 0.0
        %v2170 = vadd.f32 %v2168, %v2169
        %v2171 = vsel %vm1013, %v2158, 0.0
        %v2172 = vadd.f32 %v2170, %v2171
        %v2173 = vsel %vm1013, %v2159, 0.0
        %v2174 = vadd.f32 %v2172, %v2173
        %v2175 = vrot.slane %v2174, 4
        %v2176 = vadd.f32 %v2174, %v2175
        %v2177 = vrot.slane %v2176, 2
        %v2178 = vadd.f32 %v2176, %v2177
        %v2179 = vrot.slane %v2178, 1
        %v2180 = vadd.f32 %v2178, %v2179
        %v2181 = vmul.f32 %v2180, 0.015625
        %v2182 = vld [vmem:[%s3] sm:$0xff]
        %v2183 = vld [vmem:[%s4] sm:$0x1]
        %v2185 = vsel %vm1013, %v2181, 0
        %2187 = vmatprep.subr.mxu0 0.0
        %2188 = vmatpush1.msra.mxu0 0.0
        %2189 = vmatprep.subr.mxu0 0.0
        %2190 = vmatpush1.msra.mxu0 0.0
        %2191 = vmatprep.subr.mxu0 0.0
        %2192 = vmatpush1.msra.mxu0 0.0
        %2193 = vmatprep.subr.mxu0 0.0
        %2194 = vmatpush1.msra.mxu0 0.0
        %2195 = vmatprep.subr.mxu0 0.0
        %2196 = vmatpush1.msra.mxu0 0.0
        %2197 = vmatprep.subr.mxu0 0.0
        %2198 = vmatpush1.msra.mxu0 0.0
        %2199 = vmatprep.subr.mxu0 0.0
        %2200 = vmatpush1.msra.mxu0 0.0
        %2201 = vmatprep.subr.mxu0 0.0
        %2202 = vmatpush1.msra.mxu0 0.0
        %2203 = vmatprep.subr.mxu0 0.0
        %2204 = vmatpush1.msra.mxu0 0.0
        %2205 = vmatprep.subr.mxu0 0.0
        %2206 = vmatpush1.msra.mxu0 0.0
        %2207 = vmatprep.subr.mxu0 0.0
        %2208 = vmatpush1.msra.mxu0 0.0
        %2209 = vmatprep.subr.mxu0 0.0
        %2210 = vmatpush1.msra.mxu0 0.0
        %2211 = vmatprep.subr.mxu0 0.0
        %2212 = vmatpush1.msra.mxu0 0.0
        %2213 = vmatprep.subr.mxu0 0.0
        %2214 = vmatpush1.msra.mxu0 0.0
        %2215 = vmatprep.subr.mxu0 0.0
        %2216 = vmatpush1.msra.mxu0 0.0
        %2217 = vmatprep.subr.mxu0 0.0
        %v2218 = vand.u32 %v2182, 4294901760
        %2219 = vmatpush1.msra.mxu0 %v2218
        %2220 = vmatprep.subr.mxu0 0.0
        %2221 = vmatpush2.msra.mxu0 0.0
        %2222 = vmatprep.subr.mxu0 0.0
        %2223 = vmatpush2.msra.mxu0 0.0
        %2224 = vmatprep.subr.mxu0 0.0
        %2225 = vmatpush2.msra.mxu0 0.0
        %2226 = vmatprep.subr.mxu0 0.0
        %2227 = vmatpush2.msra.mxu0 0.0
        %2228 = vmatprep.subr.mxu0 0.0
        %2229 = vmatpush2.msra.mxu0 0.0
        %2230 = vmatprep.subr.mxu0 0.0
        %2231 = vmatpush2.msra.mxu0 0.0
        %2232 = vmatprep.subr.mxu0 0.0
        %2233 = vmatpush2.msra.mxu0 0.0
        %2234 = vmatprep.subr.mxu0 0.0
        %2235 = vmatpush2.msra.mxu0 0.0
        %2236 = vmatprep.subr.mxu0 0.0
        %2237 = vmatpush2.msra.mxu0 0.0
        %2238 = vmatprep.subr.mxu0 0.0
        %2239 = vmatpush2.msra.mxu0 0.0
        %2240 = vmatprep.subr.mxu0 0.0
        %2241 = vmatpush2.msra.mxu0 0.0
        %2242 = vmatprep.subr.mxu0 0.0
        %2243 = vmatpush2.msra.mxu0 0.0
        %2244 = vmatprep.subr.mxu0 0.0
        %2245 = vmatpush2.msra.mxu0 0.0
        %2246 = vmatprep.subr.mxu0 0.0
        %2247 = vmatpush2.msra.mxu0 0.0
        %2248 = vmatprep.subr.mxu0 0.0
        %2249 = vmatpush2.msra.mxu0 0.0
        %2250 = vmatprep.subr.mxu0 0.0
        %2251 = vmatpush2.msra.mxu0 0.0
        %2252 = vmatprep.mubr.f32.mxu0 0.0
        %v2253 = vand.u32 %v2185, 4294901760
        %v2254 = vsub.f32 %v2185, %v2253
        %v2255 = vand.u32 %v2254, 4294901760
        %v2256 = vsub.f32 %v2254, %v2255
        %v2257 = vand.u32 %v2256, 4294901760
        %2258 = vmatmul.mubr.f32.gmra.mxu0 %v2257
        %v2259 = vpop.f32.mrf.mxu0
        %v2260 = vadd.f32 %v2183, %v2259
        %v2261 = vpop.f32.mrf.mxu0
        %2262 = vdwg.mxu0
        %2263 = vmatprep.subr.mxu0 0.0
        %2264 = vmatpush1.msra.mxu0 0.0
        %2265 = vmatprep.subr.mxu0 0.0
        %2266 = vmatpush1.msra.mxu0 0.0
        %2267 = vmatprep.subr.mxu0 0.0
        %2268 = vmatpush1.msra.mxu0 0.0
        %2269 = vmatprep.subr.mxu0 0.0
        %2270 = vmatpush1.msra.mxu0 0.0
        %2271 = vmatprep.subr.mxu0 0.0
        %2272 = vmatpush1.msra.mxu0 0.0
        %2273 = vmatprep.subr.mxu0 0.0
        %2274 = vmatpush1.msra.mxu0 0.0
        %2275 = vmatprep.subr.mxu0 0.0
        %2276 = vmatpush1.msra.mxu0 0.0
        %2277 = vmatprep.subr.mxu0 0.0
        %2278 = vmatpush1.msra.mxu0 0.0
        %2279 = vmatprep.subr.mxu0 0.0
        %2280 = vmatpush1.msra.mxu0 0.0
        %2281 = vmatprep.subr.mxu0 0.0
        %2282 = vmatpush1.msra.mxu0 0.0
        %2283 = vmatprep.subr.mxu0 0.0
        %2284 = vmatpush1.msra.mxu0 0.0
        %2285 = vmatprep.subr.mxu0 0.0
        %2286 = vmatpush1.msra.mxu0 0.0
        %2287 = vmatprep.subr.mxu0 0.0
        %2288 = vmatpush1.msra.mxu0 0.0
        %2289 = vmatprep.subr.mxu0 0.0
        %2290 = vmatpush1.msra.mxu0 0.0
        %2291 = vmatprep.subr.mxu0 0.0
        %2292 = vmatpush1.msra.mxu0 0.0
        %2293 = vmatprep.subr.mxu0 0.0
        %v2294 = vand.u32 %v2182, 4294901760
        %v2295 = vsub.f32 %v2182, %v2294
        %v2296 = vand.u32 %v2295, 4294901760
        %v2297 = vsub.f32 %v2295, %v2296
        %v2298 = vand.u32 %v2297, 4294901760
        %2299 = vmatpush1.msra.mxu0 %v2298
        %2300 = vmatprep.subr.mxu0 0.0
        %2301 = vmatpush2.msra.mxu0 0.0
        %2302 = vmatprep.subr.mxu0 0.0
        %2303 = vmatpush2.msra.mxu0 0.0
        %2304 = vmatprep.subr.mxu0 0.0
        %2305 = vmatpush2.msra.mxu0 0.0
        %2306 = vmatprep.subr.mxu0 0.0
        %2307 = vmatpush2.msra.mxu0 0.0
        %2308 = vmatprep.subr.mxu0 0.0
        %2309 = vmatpush2.msra.mxu0 0.0
        %2310 = vmatprep.subr.mxu0 0.0
        %2311 = vmatpush2.msra.mxu0 0.0
        %2312 = vmatprep.subr.mxu0 0.0
        %2313 = vmatpush2.msra.mxu0 0.0
        %2314 = vmatprep.subr.mxu0 0.0
        %2315 = vmatpush2.msra.mxu0 0.0
        %2316 = vmatprep.subr.mxu0 0.0
        %2317 = vmatpush2.msra.mxu0 0.0
        %2318 = vmatprep.subr.mxu0 0.0
        %2319 = vmatpush2.msra.mxu0 0.0
        %2320 = vmatprep.subr.mxu0 0.0
        %2321 = vmatpush2.msra.mxu0 0.0
        %2322 = vmatprep.subr.mxu0 0.0
        %2323 = vmatpush2.msra.mxu0 0.0
        %2324 = vmatprep.subr.mxu0 0.0
        %2325 = vmatpush2.msra.mxu0 0.0
        %2326 = vmatprep.subr.mxu0 0.0
        %2327 = vmatpush2.msra.mxu0 0.0
        %2328 = vmatprep.subr.mxu0 0.0
        %2329 = vmatpush2.msra.mxu0 0.0
        %2330 = vmatprep.subr.mxu0 0.0
        %2331 = vmatpush2.msra.mxu0 0.0
        %2332 = vmatprep.mubr.f32.mxu0 0.0
        %v2333 = vand.u32 %v2185, 4294901760
        %2334 = vmatmul.mubr.f32.gmra.mxu0 %v2333
        %v2335 = vpop.f32.mrf.mxu0
        %v2336 = vadd.f32 %v2260, %v2335
        %v2337 = vpop.f32.mrf.mxu0
        %2338 = vdwg.mxu0
        %2339 = vmatprep.subr.mxu0 0.0
        %2340 = vmatpush1.msra.mxu0 0.0
        %2341 = vmatprep.subr.mxu0 0.0
        %2342 = vmatpush1.msra.mxu0 0.0
        %2343 = vmatprep.subr.mxu0 0.0
        %2344 = vmatpush1.msra.mxu0 0.0
        %2345 = vmatprep.subr.mxu0 0.0
        %2346 = vmatpush1.msra.mxu0 0.0
        %2347 = vmatprep.subr.mxu0 0.0
        %2348 = vmatpush1.msra.mxu0 0.0
        %2349 = vmatprep.subr.mxu0 0.0
        %2350 = vmatpush1.msra.mxu0 0.0
        %2351 = vmatprep.subr.mxu0 0.0
        %2352 = vmatpush1.msra.mxu0 0.0
        %2353 = vmatprep.subr.mxu0 0.0
        %2354 = vmatpush1.msra.mxu0 0.0
        %2355 = vmatprep.subr.mxu0 0.0
        %2356 = vmatpush1.msra.mxu0 0.0
        %2357 = vmatprep.subr.mxu0 0.0
        %2358 = vmatpush1.msra.mxu0 0.0
        %2359 = vmatprep.subr.mxu0 0.0
        %2360 = vmatpush1.msra.mxu0 0.0
        %2361 = vmatprep.subr.mxu0 0.0
        %2362 = vmatpush1.msra.mxu0 0.0
        %2363 = vmatprep.subr.mxu0 0.0
        %2364 = vmatpush1.msra.mxu0 0.0
        %2365 = vmatprep.subr.mxu0 0.0
        %2366 = vmatpush1.msra.mxu0 0.0
        %2367 = vmatprep.subr.mxu0 0.0
        %2368 = vmatpush1.msra.mxu0 0.0
        %2369 = vmatprep.subr.mxu0 0.0
        %v2370 = vand.u32 %v2182, 4294901760
        %v2371 = vsub.f32 %v2182, %v2370
        %2372 = vmatpush1.msra.mxu0 %v2371
        %2373 = vmatprep.subr.mxu0 0.0
        %2374 = vmatpush2.msra.mxu0 0.0
        %2375 = vmatprep.subr.mxu0 0.0
        %2376 = vmatpush2.msra.mxu0 0.0
        %2377 = vmatprep.subr.mxu0 0.0
        %2378 = vmatpush2.msra.mxu0 0.0
        %2379 = vmatprep.subr.mxu0 0.0
        %2380 = vmatpush2.msra.mxu0 0.0
        %2381 = vmatprep.subr.mxu0 0.0
        %2382 = vmatpush2.msra.mxu0 0.0
        %2383 = vmatprep.subr.mxu0 0.0
        %2384 = vmatpush2.msra.mxu0 0.0
        %2385 = vmatprep.subr.mxu0 0.0
        %2386 = vmatpush2.msra.mxu0 0.0
        %2387 = vmatprep.subr.mxu0 0.0
        %2388 = vmatpush2.msra.mxu0 0.0
        %2389 = vmatprep.subr.mxu0 0.0
        %2390 = vmatpush2.msra.mxu0 0.0
        %2391 = vmatprep.subr.mxu0 0.0
        %2392 = vmatpush2.msra.mxu0 0.0
        %2393 = vmatprep.subr.mxu0 0.0
        %2394 = vmatpush2.msra.mxu0 0.0
        %2395 = vmatprep.subr.mxu0 0.0
        %2396 = vmatpush2.msra.mxu0 0.0
        %2397 = vmatprep.subr.mxu0 0.0
        %2398 = vmatpush2.msra.mxu0 0.0
        %2399 = vmatprep.subr.mxu0 0.0
        %2400 = vmatpush2.msra.mxu0 0.0
        %2401 = vmatprep.subr.mxu0 0.0
        %2402 = vmatpush2.msra.mxu0 0.0
        %2403 = vmatprep.subr.mxu0 0.0
        %2404 = vmatpush2.msra.mxu0 0.0
        %2405 = vmatprep.mubr.f32.mxu0 0.0
        %v2406 = vand.u32 %v2185, 4294901760
        %v2407 = vsub.f32 %v2185, %v2406
        %2408 = vmatmul.mubr.f32.gmra.mxu0 %v2407
        %v2409 = vpop.f32.mrf.mxu0
        %v2410 = vadd.f32 %v2336, %v2409
        %v2411 = vpop.f32.mrf.mxu0
        %2412 = vdwg.mxu0
        %2413 = vmatprep.subr.mxu0 0.0
        %2414 = vmatpush1.msra.mxu0 0.0
        %2415 = vmatprep.subr.mxu0 0.0
        %2416 = vmatpush1.msra.mxu0 0.0
        %2417 = vmatprep.subr.mxu0 0.0
        %2418 = vmatpush1.msra.mxu0 0.0
        %2419 = vmatprep.subr.mxu0 0.0
        %2420 = vmatpush1.msra.mxu0 0.0
        %2421 = vmatprep.subr.mxu0 0.0
        %2422 = vmatpush1.msra.mxu0 0.0
        %2423 = vmatprep.subr.mxu0 0.0
        %2424 = vmatpush1.msra.mxu0 0.0
        %2425 = vmatprep.subr.mxu0 0.0
        %2426 = vmatpush1.msra.mxu0 0.0
        %2427 = vmatprep.subr.mxu0 0.0
        %2428 = vmatpush1.msra.mxu0 0.0
        %2429 = vmatprep.subr.mxu0 0.0
        %2430 = vmatpush1.msra.mxu0 0.0
        %2431 = vmatprep.subr.mxu0 0.0
        %2432 = vmatpush1.msra.mxu0 0.0
        %2433 = vmatprep.subr.mxu0 0.0
        %2434 = vmatpush1.msra.mxu0 0.0
        %2435 = vmatprep.subr.mxu0 0.0
        %2436 = vmatpush1.msra.mxu0 0.0
        %2437 = vmatprep.subr.mxu0 0.0
        %2438 = vmatpush1.msra.mxu0 0.0
        %2439 = vmatprep.subr.mxu0 0.0
        %2440 = vmatpush1.msra.mxu0 0.0
        %2441 = vmatprep.subr.mxu0 0.0
        %2442 = vmatpush1.msra.mxu0 0.0
        %2443 = vmatprep.subr.mxu0 0.0
        %v2444 = vand.u32 %v2182, 4294901760
        %2445 = vmatpush1.msra.mxu0 %v2444
        %2446 = vmatprep.subr.mxu0 0.0
        %2447 = vmatpush2.msra.mxu0 0.0
        %2448 = vmatprep.subr.mxu0 0.0
        %2449 = vmatpush2.msra.mxu0 0.0
        %2450 = vmatprep.subr.mxu0 0.0
        %2451 = vmatpush2.msra.mxu0 0.0
        %2452 = vmatprep.subr.mxu0 0.0
        %2453 = vmatpush2.msra.mxu0 0.0
        %2454 = vmatprep.subr.mxu0 0.0
        %2455 = vmatpush2.msra.mxu0 0.0
        %2456 = vmatprep.subr.mxu0 0.0
        %2457 = vmatpush2.msra.mxu0 0.0
        %2458 = vmatprep.subr.mxu0 0.0
        %2459 = vmatpush2.msra.mxu0 0.0
        %2460 = vmatprep.subr.mxu0 0.0
        %2461 = vmatpush2.msra.mxu0 0.0
        %2462 = vmatprep.subr.mxu0 0.0
        %2463 = vmatpush2.msra.mxu0 0.0
        %2464 = vmatprep.subr.mxu0 0.0
        %2465 = vmatpush2.msra.mxu0 0.0
        %2466 = vmatprep.subr.mxu0 0.0
        %2467 = vmatpush2.msra.mxu0 0.0
        %2468 = vmatprep.subr.mxu0 0.0
        %2469 = vmatpush2.msra.mxu0 0.0
        %2470 = vmatprep.subr.mxu0 0.0
        %2471 = vmatpush2.msra.mxu0 0.0
        %2472 = vmatprep.subr.mxu0 0.0
        %2473 = vmatpush2.msra.mxu0 0.0
        %2474 = vmatprep.subr.mxu0 0.0
        %2475 = vmatpush2.msra.mxu0 0.0
        %2476 = vmatprep.subr.mxu0 0.0
        %2477 = vmatpush2.msra.mxu0 0.0
        %2478 = vmatprep.mubr.f32.mxu0 0.0
        %v2479 = vand.u32 %v2185, 4294901760
        %v2480 = vsub.f32 %v2185, %v2479
        %v2481 = vand.u32 %v2480, 4294901760
        %2482 = vmatmul.mubr.f32.gmra.mxu0 %v2481
        %v2483 = vpop.f32.mrf.mxu0
        %v2484 = vadd.f32 %v2410, %v2483
        %v2485 = vpop.f32.mrf.mxu0
        %2486 = vdwg.mxu0
        %2487 = vmatprep.subr.mxu0 0.0
        %2488 = vmatpush1.msra.mxu0 0.0
        %2489 = vmatprep.subr.mxu0 0.0
        %2490 = vmatpush1.msra.mxu0 0.0
        %2491 = vmatprep.subr.mxu0 0.0
        %2492 = vmatpush1.msra.mxu0 0.0
        %2493 = vmatprep.subr.mxu0 0.0
        %2494 = vmatpush1.msra.mxu0 0.0
        %2495 = vmatprep.subr.mxu0 0.0
        %2496 = vmatpush1.msra.mxu0 0.0
        %2497 = vmatprep.subr.mxu0 0.0
        %2498 = vmatpush1.msra.mxu0 0.0
        %2499 = vmatprep.subr.mxu0 0.0
        %2500 = vmatpush1.msra.mxu0 0.0
        %2501 = vmatprep.subr.mxu0 0.0
        %2502 = vmatpush1.msra.mxu0 0.0
        %2503 = vmatprep.subr.mxu0 0.0
        %2504 = vmatpush1.msra.mxu0 0.0
        %2505 = vmatprep.subr.mxu0 0.0
        %2506 = vmatpush1.msra.mxu0 0.0
        %2507 = vmatprep.subr.mxu0 0.0
        %2508 = vmatpush1.msra.mxu0 0.0
        %2509 = vmatprep.subr.mxu0 0.0
        %2510 = vmatpush1.msra.mxu0 0.0
        %2511 = vmatprep.subr.mxu0 0.0
        %2512 = vmatpush1.msra.mxu0 0.0
        %2513 = vmatprep.subr.mxu0 0.0
        %2514 = vmatpush1.msra.mxu0 0.0
        %2515 = vmatprep.subr.mxu0 0.0
        %2516 = vmatpush1.msra.mxu0 0.0
        %2517 = vmatprep.subr.mxu0 0.0
        %v2518 = vand.u32 %v2182, 4294901760
        %v2519 = vsub.f32 %v2182, %v2518
        %v2520 = vand.u32 %v2519, 4294901760
        %2521 = vmatpush1.msra.mxu0 %v2520
        %2522 = vmatprep.subr.mxu0 0.0
        %2523 = vmatpush2.msra.mxu0 0.0
        %2524 = vmatprep.subr.mxu0 0.0
        %2525 = vmatpush2.msra.mxu0 0.0
        %2526 = vmatprep.subr.mxu0 0.0
        %2527 = vmatpush2.msra.mxu0 0.0
        %2528 = vmatprep.subr.mxu0 0.0
        %2529 = vmatpush2.msra.mxu0 0.0
        %2530 = vmatprep.subr.mxu0 0.0
        %2531 = vmatpush2.msra.mxu0 0.0
        %2532 = vmatprep.subr.mxu0 0.0
        %2533 = vmatpush2.msra.mxu0 0.0
        %2534 = vmatprep.subr.mxu0 0.0
        %2535 = vmatpush2.msra.mxu0 0.0
        %2536 = vmatprep.subr.mxu0 0.0
        %2537 = vmatpush2.msra.mxu0 0.0
        %2538 = vmatprep.subr.mxu0 0.0
        %2539 = vmatpush2.msra.mxu0 0.0
        %2540 = vmatprep.subr.mxu0 0.0
        %2541 = vmatpush2.msra.mxu0 0.0
        %2542 = vmatprep.subr.mxu0 0.0
        %2543 = vmatpush2.msra.mxu0 0.0
        %2544 = vmatprep.subr.mxu0 0.0
        %2545 = vmatpush2.msra.mxu0 0.0
        %2546 = vmatprep.subr.mxu0 0.0
        %2547 = vmatpush2.msra.mxu0 0.0
        %2548 = vmatprep.subr.mxu0 0.0
        %2549 = vmatpush2.msra.mxu0 0.0
        %2550 = vmatprep.subr.mxu0 0.0
        %2551 = vmatpush2.msra.mxu0 0.0
        %2552 = vmatprep.subr.mxu0 0.0
        %2553 = vmatpush2.msra.mxu0 0.0
        %2554 = vmatprep.mubr.f32.mxu0 0.0
        %v2555 = vand.u32 %v2185, 4294901760
        %2556 = vmatmul.mubr.f32.gmra.mxu0 %v2555
        %v2557 = vpop.f32.mrf.mxu0
        %v2558 = vadd.f32 %v2484, %v2557
        %v2559 = vpop.f32.mrf.mxu0
        %2560 = vdwg.mxu0
        %2561 = vmatprep.subr.mxu0 0.0
        %2562 = vmatpush1.msra.mxu0 0.0
        %2563 = vmatprep.subr.mxu0 0.0
        %2564 = vmatpush1.msra.mxu0 0.0
        %2565 = vmatprep.subr.mxu0 0.0
        %2566 = vmatpush1.msra.mxu0 0.0
        %2567 = vmatprep.subr.mxu0 0.0
        %2568 = vmatpush1.msra.mxu0 0.0
        %2569 = vmatprep.subr.mxu0 0.0
        %2570 = vmatpush1.msra.mxu0 0.0
        %2571 = vmatprep.subr.mxu0 0.0
        %2572 = vmatpush1.msra.mxu0 0.0
        %2573 = vmatprep.subr.mxu0 0.0
        %2574 = vmatpush1.msra.mxu0 0.0
        %2575 = vmatprep.subr.mxu0 0.0
        %2576 = vmatpush1.msra.mxu0 0.0
        %2577 = vmatprep.subr.mxu0 0.0
        %2578 = vmatpush1.msra.mxu0 0.0
        %2579 = vmatprep.subr.mxu0 0.0
        %2580 = vmatpush1.msra.mxu0 0.0
        %2581 = vmatprep.subr.mxu0 0.0
        %2582 = vmatpush1.msra.mxu0 0.0
        %2583 = vmatprep.subr.mxu0 0.0
        %2584 = vmatpush1.msra.mxu0 0.0
        %2585 = vmatprep.subr.mxu0 0.0
        %2586 = vmatpush1.msra.mxu0 0.0
        %2587 = vmatprep.subr.mxu0 0.0
        %2588 = vmatpush1.msra.mxu0 0.0
        %2589 = vmatprep.subr.mxu0 0.0
        %2590 = vmatpush1.msra.mxu0 0.0
        %2591 = vmatprep.subr.mxu0 0.0
        %v2592 = vand.u32 %v2182, 4294901760
        %2593 = vmatpush1.msra.mxu0 %v2592
        %2594 = vmatprep.subr.mxu0 0.0
        %2595 = vmatpush2.msra.mxu0 0.0
        %2596 = vmatprep.subr.mxu0 0.0
        %2597 = vmatpush2.msra.mxu0 0.0
        %2598 = vmatprep.subr.mxu0 0.0
        %2599 = vmatpush2.msra.mxu0 0.0
        %2600 = vmatprep.subr.mxu0 0.0
        %2601 = vmatpush2.msra.mxu0 0.0
        %2602 = vmatprep.subr.mxu0 0.0
        %2603 = vmatpush2.msra.mxu0 0.0
        %2604 = vmatprep.subr.mxu0 0.0
        %2605 = vmatpush2.msra.mxu0 0.0
        %2606 = vmatprep.subr.mxu0 0.0
        %2607 = vmatpush2.msra.mxu0 0.0
        %2608 = vmatprep.subr.mxu0 0.0
        %2609 = vmatpush2.msra.mxu0 0.0
        %2610 = vmatprep.subr.mxu0 0.0
        %2611 = vmatpush2.msra.mxu0 0.0
        %2612 = vmatprep.subr.mxu0 0.0
        %2613 = vmatpush2.msra.mxu0 0.0
        %2614 = vmatprep.subr.mxu0 0.0
        %2615 = vmatpush2.msra.mxu0 0.0
        %2616 = vmatprep.subr.mxu0 0.0
        %2617 = vmatpush2.msra.mxu0 0.0
        %2618 = vmatprep.subr.mxu0 0.0
        %2619 = vmatpush2.msra.mxu0 0.0
        %2620 = vmatprep.subr.mxu0 0.0
        %2621 = vmatpush2.msra.mxu0 0.0
        %2622 = vmatprep.subr.mxu0 0.0
        %2623 = vmatpush2.msra.mxu0 0.0
        %2624 = vmatprep.subr.mxu0 0.0
        %2625 = vmatpush2.msra.mxu0 0.0
        %2626 = vmatprep.mubr.f32.mxu0 0.0
        %v2627 = vand.u32 %v2185, 4294901760
        %2628 = vmatmul.mubr.f32.gmra.mxu0 %v2627
        %v2629 = vpop.f32.mrf.mxu0
        %v2630 = vadd.f32 %v2558, %v2629
        %v2631 = vpop.f32.mrf.mxu0
        %2632 = vdwg.mxu0
        %v2633 = vmax.f32 %v2630, 0.0
        %v2634 = vld [vmem:[%s5] sm:$0xff]
        %v2635 = vld [vmem:[%s5 + $0x8] sm:$0xff]
        %v2636 = vld [vmem:[%s5 + $0x10] sm:$0xff]
        %v2637 = vld [vmem:[%s5 + $0x18] sm:$0xff]
        %v2639 = vsel %vm1067, %v2633, 0
        %2641 = vmatprep.subr.mxu0 0.0
        %2642 = vmatpush1.msra.mxu0 0.0
        %2643 = vmatprep.subr.mxu0 0.0
        %2644 = vmatpush1.msra.mxu0 0.0
        %2645 = vmatprep.subr.mxu0 0.0
        %2646 = vmatpush1.msra.mxu0 0.0
        %2647 = vmatprep.subr.mxu0 0.0
        %2648 = vmatpush1.msra.mxu0 0.0
        %2649 = vmatprep.subr.mxu0 0.0
        %2650 = vmatpush1.msra.mxu0 0.0
        %2651 = vmatprep.subr.mxu0 0.0
        %2652 = vmatpush1.msra.mxu0 0.0
        %2653 = vmatprep.subr.mxu0 0.0
        %2654 = vmatpush1.msra.mxu0 0.0
        %2655 = vmatprep.subr.mxu0 0.0
        %2656 = vmatpush1.msra.mxu0 0.0
        %2657 = vmatprep.subr.mxu0 0.0
        %2658 = vmatpush1.msra.mxu0 0.0
        %2659 = vmatprep.subr.mxu0 0.0
        %2660 = vmatpush1.msra.mxu0 0.0
        %2661 = vmatprep.subr.mxu0 0.0
        %2662 = vmatpush1.msra.mxu0 0.0
        %2663 = vmatprep.subr.mxu0 0.0
        %2664 = vmatpush1.msra.mxu0 0.0
        %2665 = vmatprep.subr.mxu0 0.0
        %v2666 = vand.u32 %v2637, 4294901760
        %2667 = vmatpush1.msra.mxu0 %v2666
        %2668 = vmatprep.subr.mxu0 0.0
        %v2669 = vand.u32 %v2636, 4294901760
        %2670 = vmatpush1.msra.mxu0 %v2669
        %2671 = vmatprep.subr.mxu0 0.0
        %v2672 = vand.u32 %v2635, 4294901760
        %2673 = vmatpush1.msra.mxu0 %v2672
        %2674 = vmatprep.subr.mxu0 0.0
        %v2675 = vand.u32 %v2634, 4294901760
        %2676 = vmatpush1.msra.mxu0 %v2675
        %2677 = vmatprep.subr.mxu0 0.0
        %2678 = vmatpush2.msra.mxu0 0.0
        %2679 = vmatprep.subr.mxu0 0.0
        %2680 = vmatpush2.msra.mxu0 0.0
        %2681 = vmatprep.subr.mxu0 0.0
        %2682 = vmatpush2.msra.mxu0 0.0
        %2683 = vmatprep.subr.mxu0 0.0
        %2684 = vmatpush2.msra.mxu0 0.0
        %2685 = vmatprep.subr.mxu0 0.0
        %2686 = vmatpush2.msra.mxu0 0.0
        %2687 = vmatprep.subr.mxu0 0.0
        %2688 = vmatpush2.msra.mxu0 0.0
        %2689 = vmatprep.subr.mxu0 0.0
        %2690 = vmatpush2.msra.mxu0 0.0
        %2691 = vmatprep.subr.mxu0 0.0
        %2692 = vmatpush2.msra.mxu0 0.0
        %2693 = vmatprep.subr.mxu0 0.0
        %2694 = vmatpush2.msra.mxu0 0.0
        %2695 = vmatprep.subr.mxu0 0.0
        %2696 = vmatpush2.msra.mxu0 0.0
        %2697 = vmatprep.subr.mxu0 0.0
        %2698 = vmatpush2.msra.mxu0 0.0
        %2699 = vmatprep.subr.mxu0 0.0
        %2700 = vmatpush2.msra.mxu0 0.0
        %2701 = vmatprep.subr.mxu0 0.0
        %2702 = vmatpush2.msra.mxu0 0.0
        %2703 = vmatprep.subr.mxu0 0.0
        %2704 = vmatpush2.msra.mxu0 0.0
        %2705 = vmatprep.subr.mxu0 0.0
        %2706 = vmatpush2.msra.mxu0 0.0
        %2707 = vmatprep.subr.mxu0 0.0
        %2708 = vmatpush2.msra.mxu0 0.0
        %2709 = vmatprep.mubr.f32.mxu0 0.0
        %v2710 = vand.u32 %v2639, 4294901760
        %v2711 = vsub.f32 %v2639, %v2710
        %v2712 = vand.u32 %v2711, 4294901760
        %v2713 = vsub.f32 %v2711, %v2712
        %v2714 = vand.u32 %v2713, 4294901760
        %2715 = vmatmul.mubr.f32.gmra.mxu0 %v2714
        %v2716 = vpop.f32.mrf.mxu0
        %v2717 = vadd.f32 0.0, %v2716
        %v2718 = vpop.f32.mrf.mxu0
        %2719 = vdwg.mxu0
        %2720 = vmatprep.subr.mxu0 0.0
        %2721 = vmatpush1.msra.mxu0 0.0
        %2722 = vmatprep.subr.mxu0 0.0
        %2723 = vmatpush1.msra.mxu0 0.0
        %2724 = vmatprep.subr.mxu0 0.0
        %2725 = vmatpush1.msra.mxu0 0.0
        %2726 = vmatprep.subr.mxu0 0.0
        %2727 = vmatpush1.msra.mxu0 0.0
        %2728 = vmatprep.subr.mxu0 0.0
        %2729 = vmatpush1.msra.mxu0 0.0
        %2730 = vmatprep.subr.mxu0 0.0
        %2731 = vmatpush1.msra.mxu0 0.0
        %2732 = vmatprep.subr.mxu0 0.0
        %2733 = vmatpush1.msra.mxu0 0.0
        %2734 = vmatprep.subr.mxu0 0.0
        %2735 = vmatpush1.msra.mxu0 0.0
        %2736 = vmatprep.subr.mxu0 0.0
        %2737 = vmatpush1.msra.mxu0 0.0
        %2738 = vmatprep.subr.mxu0 0.0
        %2739 = vmatpush1.msra.mxu0 0.0
        %2740 = vmatprep.subr.mxu0 0.0
        %2741 = vmatpush1.msra.mxu0 0.0
        %2742 = vmatprep.subr.mxu0 0.0
        %2743 = vmatpush1.msra.mxu0 0.0
        %2744 = vmatprep.subr.mxu0 0.0
        %v2745 = vand.u32 %v2637, 4294901760
        %v2746 = vsub.f32 %v2637, %v2745
        %v2747 = vand.u32 %v2746, 4294901760
        %v2748 = vsub.f32 %v2746, %v2747
        %v2749 = vand.u32 %v2748, 4294901760
        %2750 = vmatpush1.msra.mxu0 %v2749
        %2751 = vmatprep.subr.mxu0 0.0
        %v2752 = vand.u32 %v2636, 4294901760
        %v2753 = vsub.f32 %v2636, %v2752
        %v2754 = vand.u32 %v2753, 4294901760
        %v2755 = vsub.f32 %v2753, %v2754
        %v2756 = vand.u32 %v2755, 4294901760
        %2757 = vmatpush1.msra.mxu0 %v2756
        %2758 = vmatprep.subr.mxu0 0.0
        %v2759 = vand.u32 %v2635, 4294901760
        %v2760 = vsub.f32 %v2635, %v2759
        %v2761 = vand.u32 %v2760, 4294901760
        %v2762 = vsub.f32 %v2760, %v2761
        %v2763 = vand.u32 %v2762, 4294901760
        %2764 = vmatpush1.msra.mxu0 %v2763
        %2765 = vmatprep.subr.mxu0 0.0
        %v2766 = vand.u32 %v2634, 4294901760
        %v2767 = vsub.f32 %v2634, %v2766
        %v2768 = vand.u32 %v2767, 4294901760
        %v2769 = vsub.f32 %v2767, %v2768
        %v2770 = vand.u32 %v2769, 4294901760
        %2771 = vmatpush1.msra.mxu0 %v2770
        %2772 = vmatprep.subr.mxu0 0.0
        %2773 = vmatpush2.msra.mxu0 0.0
        %2774 = vmatprep.subr.mxu0 0.0
        %2775 = vmatpush2.msra.mxu0 0.0
        %2776 = vmatprep.subr.mxu0 0.0
        %2777 = vmatpush2.msra.mxu0 0.0
        %2778 = vmatprep.subr.mxu0 0.0
        %2779 = vmatpush2.msra.mxu0 0.0
        %2780 = vmatprep.subr.mxu0 0.0
        %2781 = vmatpush2.msra.mxu0 0.0
        %2782 = vmatprep.subr.mxu0 0.0
        %2783 = vmatpush2.msra.mxu0 0.0
        %2784 = vmatprep.subr.mxu0 0.0
        %2785 = vmatpush2.msra.mxu0 0.0
        %2786 = vmatprep.subr.mxu0 0.0
        %2787 = vmatpush2.msra.mxu0 0.0
        %2788 = vmatprep.subr.mxu0 0.0
        %2789 = vmatpush2.msra.mxu0 0.0
        %2790 = vmatprep.subr.mxu0 0.0
        %2791 = vmatpush2.msra.mxu0 0.0
        %2792 = vmatprep.subr.mxu0 0.0
        %2793 = vmatpush2.msra.mxu0 0.0
        %2794 = vmatprep.subr.mxu0 0.0
        %2795 = vmatpush2.msra.mxu0 0.0
        %2796 = vmatprep.subr.mxu0 0.0
        %2797 = vmatpush2.msra.mxu0 0.0
        %2798 = vmatprep.subr.mxu0 0.0
        %2799 = vmatpush2.msra.mxu0 0.0
        %2800 = vmatprep.subr.mxu0 0.0
        %2801 = vmatpush2.msra.mxu0 0.0
        %2802 = vmatprep.subr.mxu0 0.0
        %2803 = vmatpush2.msra.mxu0 0.0
        %2804 = vmatprep.mubr.f32.mxu0 0.0
        %v2805 = vand.u32 %v2639, 4294901760
        %2806 = vmatmul.mubr.f32.gmra.mxu0 %v2805
        %v2807 = vpop.f32.mrf.mxu0
        %v2808 = vadd.f32 %v2717, %v2807
        %v2809 = vpop.f32.mrf.mxu0
        %2810 = vdwg.mxu0
        %2811 = vmatprep.subr.mxu0 0.0
        %2812 = vmatpush1.msra.mxu0 0.0
        %2813 = vmatprep.subr.mxu0 0.0
        %2814 = vmatpush1.msra.mxu0 0.0
        %2815 = vmatprep.subr.mxu0 0.0
        %2816 = vmatpush1.msra.mxu0 0.0
        %2817 = vmatprep.subr.mxu0 0.0
        %2818 = vmatpush1.msra.mxu0 0.0
        %2819 = vmatprep.subr.mxu0 0.0
        %2820 = vmatpush1.msra.mxu0 0.0
        %2821 = vmatprep.subr.mxu0 0.0
        %2822 = vmatpush1.msra.mxu0 0.0
        %2823 = vmatprep.subr.mxu0 0.0
        %2824 = vmatpush1.msra.mxu0 0.0
        %2825 = vmatprep.subr.mxu0 0.0
        %2826 = vmatpush1.msra.mxu0 0.0
        %2827 = vmatprep.subr.mxu0 0.0
        %2828 = vmatpush1.msra.mxu0 0.0
        %2829 = vmatprep.subr.mxu0 0.0
        %2830 = vmatpush1.msra.mxu0 0.0
        %2831 = vmatprep.subr.mxu0 0.0
        %2832 = vmatpush1.msra.mxu0 0.0
        %2833 = vmatprep.subr.mxu0 0.0
        %2834 = vmatpush1.msra.mxu0 0.0
        %2835 = vmatprep.subr.mxu0 0.0
        %v2836 = vand.u32 %v2637, 4294901760
        %v2837 = vsub.f32 %v2637, %v2836
        %2838 = vmatpush1.msra.mxu0 %v2837
        %2839 = vmatprep.subr.mxu0 0.0
        %v2840 = vand.u32 %v2636, 4294901760
        %v2841 = vsub.f32 %v2636, %v2840
        %2842 = vmatpush1.msra.mxu0 %v2841
        %2843 = vmatprep.subr.mxu0 0.0
        %v2844 = vand.u32 %v2635, 4294901760
        %v2845 = vsub.f32 %v2635, %v2844
        %2846 = vmatpush1.msra.mxu0 %v2845
        %2847 = vmatprep.subr.mxu0 0.0
        %v2848 = vand.u32 %v2634, 4294901760
        %v2849 = vsub.f32 %v2634, %v2848
        %2850 = vmatpush1.msra.mxu0 %v2849
        %2851 = vmatprep.subr.mxu0 0.0
        %2852 = vmatpush2.msra.mxu0 0.0
        %2853 = vmatprep.subr.mxu0 0.0
        %2854 = vmatpush2.msra.mxu0 0.0
        %2855 = vmatprep.subr.mxu0 0.0
        %2856 = vmatpush2.msra.mxu0 0.0
        %2857 = vmatprep.subr.mxu0 0.0
        %2858 = vmatpush2.msra.mxu0 0.0
        %2859 = vmatprep.subr.mxu0 0.0
        %2860 = vmatpush2.msra.mxu0 0.0
        %2861 = vmatprep.subr.mxu0 0.0
        %2862 = vmatpush2.msra.mxu0 0.0
        %2863 = vmatprep.subr.mxu0 0.0
        %2864 = vmatpush2.msra.mxu0 0.0
        %2865 = vmatprep.subr.mxu0 0.0
        %2866 = vmatpush2.msra.mxu0 0.0
        %2867 = vmatprep.subr.mxu0 0.0
        %2868 = vmatpush2.msra.mxu0 0.0
        %2869 = vmatprep.subr.mxu0 0.0
        %2870 = vmatpush2.msra.mxu0 0.0
        %2871 = vmatprep.subr.mxu0 0.0
        %2872 = vmatpush2.msra.mxu0 0.0
        %2873 = vmatprep.subr.mxu0 0.0
        %2874 = vmatpush2.msra.mxu0 0.0
        %2875 = vmatprep.subr.mxu0 0.0
        %2876 = vmatpush2.msra.mxu0 0.0
        %2877 = vmatprep.subr.mxu0 0.0
        %2878 = vmatpush2.msra.mxu0 0.0
        %2879 = vmatprep.subr.mxu0 0.0
        %2880 = vmatpush2.msra.mxu0 0.0
        %2881 = vmatprep.subr.mxu0 0.0
        %2882 = vmatpush2.msra.mxu0 0.0
        %2883 = vmatprep.mubr.f32.mxu0 0.0
        %v2884 = vand.u32 %v2639, 4294901760
        %v2885 = vsub.f32 %v2639, %v2884
        %2886 = vmatmul.mubr.f32.gmra.mxu0 %v2885
        %v2887 = vpop.f32.mrf.mxu0
        %v2888 = vadd.f32 %v2808, %v2887
        %v2889 = vpop.f32.mrf.mxu0
        %2890 = vdwg.mxu0
        %2891 = vmatprep.subr.mxu0 0.0
        %2892 = vmatpush1.msra.mxu0 0.0
        %2893 = vmatprep.subr.mxu0 0.0
        %2894 = vmatpush1.msra.mxu0 0.0
        %2895 = vmatprep.subr.mxu0 0.0
        %2896 = vmatpush1.msra.mxu0 0.0
        %2897 = vmatprep.subr.mxu0 0.0
        %2898 = vmatpush1.msra.mxu0 0.0
        %2899 = vmatprep.subr.mxu0 0.0
        %2900 = vmatpush1.msra.mxu0 0.0
        %2901 = vmatprep.subr.mxu0 0.0
        %2902 = vmatpush1.msra.mxu0 0.0
        %2903 = vmatprep.subr.mxu0 0.0
        %2904 = vmatpush1.msra.mxu0 0.0
        %2905 = vmatprep.subr.mxu0 0.0
        %2906 = vmatpush1.msra.mxu0 0.0
        %2907 = vmatprep.subr.mxu0 0.0
        %2908 = vmatpush1.msra.mxu0 0.0
        %2909 = vmatprep.subr.mxu0 0.0
        %2910 = vmatpush1.msra.mxu0 0.0
        %2911 = vmatprep.subr.mxu0 0.0
        %2912 = vmatpush1.msra.mxu0 0.0
        %2913 = vmatprep.subr.mxu0 0.0
        %2914 = vmatpush1.msra.mxu0 0.0
        %2915 = vmatprep.subr.mxu0 0.0
        %v2916 = vand.u32 %v2637, 4294901760
        %2917 = vmatpush1.msra.mxu0 %v2916
        %2918 = vmatprep.subr.mxu0 0.0
        %v2919 = vand.u32 %v2636, 4294901760
        %2920 = vmatpush1.msra.mxu0 %v2919
        %2921 = vmatprep.subr.mxu0 0.0
        %v2922 = vand.u32 %v2635, 4294901760
        %2923 = vmatpush1.msra.mxu0 %v2922
        %2924 = vmatprep.subr.mxu0 0.0
        %v2925 = vand.u32 %v2634, 4294901760
        %2926 = vmatpush1.msra.mxu0 %v2925
        %2927 = vmatprep.subr.mxu0 0.0
        %2928 = vmatpush2.msra.mxu0 0.0
        %2929 = vmatprep.subr.mxu0 0.0
        %2930 = vmatpush2.msra.mxu0 0.0
        %2931 = vmatprep.subr.mxu0 0.0
        %2932 = vmatpush2.msra.mxu0 0.0
        %2933 = vmatprep.subr.mxu0 0.0
        %2934 = vmatpush2.msra.mxu0 0.0
        %2935 = vmatprep.subr.mxu0 0.0
        %2936 = vmatpush2.msra.mxu0 0.0
        %2937 = vmatprep.subr.mxu0 0.0
        %2938 = vmatpush2.msra.mxu0 0.0
        %2939 = vmatprep.subr.mxu0 0.0
        %2940 = vmatpush2.msra.mxu0 0.0
        %2941 = vmatprep.subr.mxu0 0.0
        %2942 = vmatpush2.msra.mxu0 0.0
        %2943 = vmatprep.subr.mxu0 0.0
        %2944 = vmatpush2.msra.mxu0 0.0
        %2945 = vmatprep.subr.mxu0 0.0
        %2946 = vmatpush2.msra.mxu0 0.0
        %2947 = vmatprep.subr.mxu0 0.0
        %2948 = vmatpush2.msra.mxu0 0.0
        %2949 = vmatprep.subr.mxu0 0.0
        %2950 = vmatpush2.msra.mxu0 0.0
        %2951 = vmatprep.subr.mxu0 0.0
        %2952 = vmatpush2.msra.mxu0 0.0
        %2953 = vmatprep.subr.mxu0 0.0
        %2954 = vmatpush2.msra.mxu0 0.0
        %2955 = vmatprep.subr.mxu0 0.0
        %2956 = vmatpush2.msra.mxu0 0.0
        %2957 = vmatprep.subr.mxu0 0.0
        %2958 = vmatpush2.msra.mxu0 0.0
        %2959 = vmatprep.mubr.f32.mxu0 0.0
        %v2960 = vand.u32 %v2639, 4294901760
        %v2961 = vsub.f32 %v2639, %v2960
        %v2962 = vand.u32 %v2961, 4294901760
        %2963 = vmatmul.mubr.f32.gmra.mxu0 %v2962
        %v2964 = vpop.f32.mrf.mxu0
        %v2965 = vadd.f32 %v2888, %v2964
        %v2966 = vpop.f32.mrf.mxu0
        %2967 = vdwg.mxu0
        %2968 = vmatprep.subr.mxu0 0.0
        %2969 = vmatpush1.msra.mxu0 0.0
        %2970 = vmatprep.subr.mxu0 0.0
        %2971 = vmatpush1.msra.mxu0 0.0
        %2972 = vmatprep.subr.mxu0 0.0
        %2973 = vmatpush1.msra.mxu0 0.0
        %2974 = vmatprep.subr.mxu0 0.0
        %2975 = vmatpush1.msra.mxu0 0.0
        %2976 = vmatprep.subr.mxu0 0.0
        %2977 = vmatpush1.msra.mxu0 0.0
        %2978 = vmatprep.subr.mxu0 0.0
        %2979 = vmatpush1.msra.mxu0 0.0
        %2980 = vmatprep.subr.mxu0 0.0
        %2981 = vmatpush1.msra.mxu0 0.0
        %2982 = vmatprep.subr.mxu0 0.0
        %2983 = vmatpush1.msra.mxu0 0.0
        %2984 = vmatprep.subr.mxu0 0.0
        %2985 = vmatpush1.msra.mxu0 0.0
        %2986 = vmatprep.subr.mxu0 0.0
        %2987 = vmatpush1.msra.mxu0 0.0
        %2988 = vmatprep.subr.mxu0 0.0
        %2989 = vmatpush1.msra.mxu0 0.0
        %2990 = vmatprep.subr.mxu0 0.0
        %2991 = vmatpush1.msra.mxu0 0.0
        %2992 = vmatprep.subr.mxu0 0.0
        %v2993 = vand.u32 %v2637, 4294901760
        %v2994 = vsub.f32 %v2637, %v2993
        %v2995 = vand.u32 %v2994, 4294901760
        %2996 = vmatpush1.msra.mxu0 %v2995
        %2997 = vmatprep.subr.mxu0 0.0
        %v2998 = vand.u32 %v2636, 4294901760
        %v2999 = vsub.f32 %v2636, %v2998
        %v3000 = vand.u32 %v2999, 4294901760
        %3001 = vmatpush1.msra.mxu0 %v3000
        %3002 = vmatprep.subr.mxu0 0.0
        %v3003 = vand.u32 %v2635, 4294901760
        %v3004 = vsub.f32 %v2635, %v3003
        %v3005 = vand.u32 %v3004, 4294901760
        %3006 = vmatpush1.msra.mxu0 %v3005
        %3007 = vmatprep.subr.mxu0 0.0
        %v3008 = vand.u32 %v2634, 4294901760
        %v3009 = vsub.f32 %v2634, %v3008
        %v3010 = vand.u32 %v3009, 4294901760
        %3011 = vmatpush1.msra.mxu0 %v3010
        %3012 = vmatprep.subr.mxu0 0.0
        %3013 = vmatpush2.msra.mxu0 0.0
        %3014 = vmatprep.subr.mxu0 0.0
        %3015 = vmatpush2.msra.mxu0 0.0
        %3016 = vmatprep.subr.mxu0 0.0
        %3017 = vmatpush2.msra.mxu0 0.0
        %3018 = vmatprep.subr.mxu0 0.0
        %3019 = vmatpush2.msra.mxu0 0.0
        %3020 = vmatprep.subr.mxu0 0.0
        %3021 = vmatpush2.msra.mxu0 0.0
        %3022 = vmatprep.subr.mxu0 0.0
        %3023 = vmatpush2.msra.mxu0 0.0
        %3024 = vmatprep.subr.mxu0 0.0
        %3025 = vmatpush2.msra.mxu0 0.0
        %3026 = vmatprep.subr.mxu0 0.0
        %3027 = vmatpush2.msra.mxu0 0.0
        %3028 = vmatprep.subr.mxu0 0.0
        %3029 = vmatpush2.msra.mxu0 0.0
        %3030 = vmatprep.subr.mxu0 0.0
        %3031 = vmatpush2.msra.mxu0 0.0
        %3032 = vmatprep.subr.mxu0 0.0
        %3033 = vmatpush2.msra.mxu0 0.0
        %3034 = vmatprep.subr.mxu0 0.0
        %3035 = vmatpush2.msra.mxu0 0.0
        %3036 = vmatprep.subr.mxu0 0.0
        %3037 = vmatpush2.msra.mxu0 0.0
        %3038 = vmatprep.subr.mxu0 0.0
        %3039 = vmatpush2.msra.mxu0 0.0
        %3040 = vmatprep.subr.mxu0 0.0
        %3041 = vmatpush2.msra.mxu0 0.0
        %3042 = vmatprep.subr.mxu0 0.0
        %3043 = vmatpush2.msra.mxu0 0.0
        %3044 = vmatprep.mubr.f32.mxu0 0.0
        %v3045 = vand.u32 %v2639, 4294901760
        %3046 = vmatmul.mubr.f32.gmra.mxu0 %v3045
        %v3047 = vpop.f32.mrf.mxu0
        %v3048 = vadd.f32 %v2965, %v3047
        %v3049 = vpop.f32.mrf.mxu0
        %3050 = vdwg.mxu0
        %3051 = vmatprep.subr.mxu0 0.0
        %3052 = vmatpush1.msra.mxu0 0.0
        %3053 = vmatprep.subr.mxu0 0.0
        %3054 = vmatpush1.msra.mxu0 0.0
        %3055 = vmatprep.subr.mxu0 0.0
        %3056 = vmatpush1.msra.mxu0 0.0
        %3057 = vmatprep.subr.mxu0 0.0
        %3058 = vmatpush1.msra.mxu0 0.0
        %3059 = vmatprep.subr.mxu0 0.0
        %3060 = vmatpush1.msra.mxu0 0.0
        %3061 = vmatprep.subr.mxu0 0.0
        %3062 = vmatpush1.msra.mxu0 0.0
        %3063 = vmatprep.subr.mxu0 0.0
        %3064 = vmatpush1.msra.mxu0 0.0
        %3065 = vmatprep.subr.mxu0 0.0
        %3066 = vmatpush1.msra.mxu0 0.0
        %3067 = vmatprep.subr.mxu0 0.0
        %3068 = vmatpush1.msra.mxu0 0.0
        %3069 = vmatprep.subr.mxu0 0.0
        %3070 = vmatpush1.msra.mxu0 0.0
        %3071 = vmatprep.subr.mxu0 0.0
        %3072 = vmatpush1.msra.mxu0 0.0
        %3073 = vmatprep.subr.mxu0 0.0
        %3074 = vmatpush1.msra.mxu0 0.0
        %3075 = vmatprep.subr.mxu0 0.0
        %v3076 = vand.u32 %v2637, 4294901760
        %3077 = vmatpush1.msra.mxu0 %v3076
        %3078 = vmatprep.subr.mxu0 0.0
        %v3079 = vand.u32 %v2636, 4294901760
        %3080 = vmatpush1.msra.mxu0 %v3079
        %3081 = vmatprep.subr.mxu0 0.0
        %v3082 = vand.u32 %v2635, 4294901760
        %3083 = vmatpush1.msra.mxu0 %v3082
        %3084 = vmatprep.subr.mxu0 0.0
        %v3085 = vand.u32 %v2634, 4294901760
        %3086 = vmatpush1.msra.mxu0 %v3085
        %3087 = vmatprep.subr.mxu0 0.0
        %3088 = vmatpush2.msra.mxu0 0.0
        %3089 = vmatprep.subr.mxu0 0.0
        %3090 = vmatpush2.msra.mxu0 0.0
        %3091 = vmatprep.subr.mxu0 0.0
        %3092 = vmatpush2.msra.mxu0 0.0
        %3093 = vmatprep.subr.mxu0 0.0
        %3094 = vmatpush2.msra.mxu0 0.0
        %3095 = vmatprep.subr.mxu0 0.0
        %3096 = vmatpush2.msra.mxu0 0.0
        %3097 = vmatprep.subr.mxu0 0.0
        %3098 = vmatpush2.msra.mxu0 0.0
        %3099 = vmatprep.subr.mxu0 0.0
        %3100 = vmatpush2.msra.mxu0 0.0
        %3101 = vmatprep.subr.mxu0 0.0
        %3102 = vmatpush2.msra.mxu0 0.0
        %3103 = vmatprep.subr.mxu0 0.0
        %3104 = vmatpush2.msra.mxu0 0.0
        %3105 = vmatprep.subr.mxu0 0.0
        %3106 = vmatpush2.msra.mxu0 0.0
        %3107 = vmatprep.subr.mxu0 0.0
        %3108 = vmatpush2.msra.mxu0 0.0
        %3109 = vmatprep.subr.mxu0 0.0
        %3110 = vmatpush2.msra.mxu0 0.0
        %3111 = vmatprep.subr.mxu0 0.0
        %3112 = vmatpush2.msra.mxu0 0.0
        %3113 = vmatprep.subr.mxu0 0.0
        %3114 = vmatpush2.msra.mxu0 0.0
        %3115 = vmatprep.subr.mxu0 0.0
        %3116 = vmatpush2.msra.mxu0 0.0
        %3117 = vmatprep.subr.mxu0 0.0
        %3118 = vmatpush2.msra.mxu0 0.0
        %3119 = vmatprep.mubr.f32.mxu0 0.0
        %v3120 = vand.u32 %v2639, 4294901760
        %3121 = vmatmul.mubr.f32.gmra.mxu0 %v3120
        %v3122 = vpop.f32.mrf.mxu0
        %v3123 = vadd.f32 %v3048, %v3122
        %v3124 = vpop.f32.mrf.mxu0
        %3125 = vdwg.mxu0
        %v3126 = vmul.f32 %v3123, 1.442695
        %v3127 = vpow.pop %v3126
        %v3128 = vld [vmem:[%s6] sm:$0xff]
        %v3129 = vld [vmem:[%s6 + $0x8] sm:$0xff]
        %v3130 = vld [vmem:[%s6 + $0x10] sm:$0xff]
        %v3131 = vld [vmem:[%s6 + $0x18] sm:$0xff]
        %3132 = vmatprep.subr.mxu0 0.0
        %3133 = vmatpush1.msra.mxu0 0.0
        %3134 = vmatprep.subr.mxu0 0.0
        %3135 = vmatpush1.msra.mxu0 0.0
        %3136 = vmatprep.subr.mxu0 0.0
        %3137 = vmatpush1.msra.mxu0 0.0
        %3138 = vmatprep.subr.mxu0 0.0
        %3139 = vmatpush1.msra.mxu0 0.0
        %3140 = vmatprep.subr.mxu0 0.0
        %3141 = vmatpush1.msra.mxu0 0.0
        %3142 = vmatprep.subr.mxu0 0.0
        %3143 = vmatpush1.msra.mxu0 0.0
        %3144 = vmatprep.subr.mxu0 0.0
        %3145 = vmatpush1.msra.mxu0 0.0
        %3146 = vmatprep.subr.mxu0 0.0
        %3147 = vmatpush1.msra.mxu0 0.0
        %3148 = vmatprep.subr.mxu0 0.0
        %3149 = vmatpush1.msra.mxu0 0.0
        %3150 = vmatprep.subr.mxu0 0.0
        %3151 = vmatpush1.msra.mxu0 0.0
        %3152 = vmatprep.subr.mxu0 0.0
        %3153 = vmatpush1.msra.mxu0 0.0
        %3154 = vmatprep.subr.mxu0 0.0
        %3155 = vmatpush1.msra.mxu0 0.0
        %3156 = vmatprep.subr.mxu0 0.0
        %v3157 = vand.u32 %v3131, 4294901760
        %3158 = vmatpush1.msra.mxu0 %v3157
        %3159 = vmatprep.subr.mxu0 0.0
        %v3160 = vand.u32 %v3130, 4294901760
        %3161 = vmatpush1.msra.mxu0 %v3160
        %3162 = vmatprep.subr.mxu0 0.0
        %v3163 = vand.u32 %v3129, 4294901760
        %3164 = vmatpush1.msra.mxu0 %v3163
        %3165 = vmatprep.subr.mxu0 0.0
        %v3166 = vand.u32 %v3128, 4294901760
        %3167 = vmatpush1.msra.mxu0 %v3166
        %3168 = vmatprep.subr.mxu0 0.0
        %3169 = vmatpush2.msra.mxu0 0.0
        %3170 = vmatprep.subr.mxu0 0.0
        %3171 = vmatpush2.msra.mxu0 0.0
        %3172 = vmatprep.subr.mxu0 0.0
        %3173 = vmatpush2.msra.mxu0 0.0
        %3174 = vmatprep.subr.mxu0 0.0
        %3175 = vmatpush2.msra.mxu0 0.0
        %3176 = vmatprep.subr.mxu0 0.0
        %3177 = vmatpush2.msra.mxu0 0.0
        %3178 = vmatprep.subr.mxu0 0.0
        %3179 = vmatpush2.msra.mxu0 0.0
        %3180 = vmatprep.subr.mxu0 0.0
        %3181 = vmatpush2.msra.mxu0 0.0
        %3182 = vmatprep.subr.mxu0 0.0
        %3183 = vmatpush2.msra.mxu0 0.0
        %3184 = vmatprep.subr.mxu0 0.0
        %3185 = vmatpush2.msra.mxu0 0.0
        %3186 = vmatprep.subr.mxu0 0.0
        %3187 = vmatpush2.msra.mxu0 0.0
        %3188 = vmatprep.subr.mxu0 0.0
        %3189 = vmatpush2.msra.mxu0 0.0
        %3190 = vmatprep.subr.mxu0 0.0
        %3191 = vmatpush2.msra.mxu0 0.0
        %3192 = vmatprep.subr.mxu0 0.0
        %3193 = vmatpush2.msra.mxu0 0.0
        %3194 = vmatprep.subr.mxu0 0.0
        %3195 = vmatpush2.msra.mxu0 0.0
        %3196 = vmatprep.subr.mxu0 0.0
        %3197 = vmatpush2.msra.mxu0 0.0
        %3198 = vmatprep.subr.mxu0 0.0
        %3199 = vmatpush2.msra.mxu0 0.0
        %3200 = vmatprep.mubr.f32.mxu0 0.0
        %v3201 = vand.u32 %v2639, 4294901760
        %v3202 = vsub.f32 %v2639, %v3201
        %v3203 = vand.u32 %v3202, 4294901760
        %v3204 = vsub.f32 %v3202, %v3203
        %v3205 = vand.u32 %v3204, 4294901760
        %3206 = vmatmul.mubr.f32.gmra.mxu0 %v3205
        %v3207 = vpop.f32.mrf.mxu0
        %v3208 = vadd.f32 0.0, %v3207
        %v3209 = vpop.f32.mrf.mxu0
        %3210 = vdwg.mxu0
        %3211 = vmatprep.subr.mxu0 0.0
        %3212 = vmatpush1.msra.mxu0 0.0
        %3213 = vmatprep.subr.mxu0 0.0
        %3214 = vmatpush1.msra.mxu0 0.0
        %3215 = vmatprep.subr.mxu0 0.0
        %3216 = vmatpush1.msra.mxu0 0.0
        %3217 = vmatprep.subr.mxu0 0.0
        %3218 = vmatpush1.msra.mxu0 0.0
        %3219 = vmatprep.subr.mxu0 0.0
        %3220 = vmatpush1.msra.mxu0 0.0
        %3221 = vmatprep.subr.mxu0 0.0
        %3222 = vmatpush1.msra.mxu0 0.0
        %3223 = vmatprep.subr.mxu0 0.0
        %3224 = vmatpush1.msra.mxu0 0.0
        %3225 = vmatprep.subr.mxu0 0.0
        %3226 = vmatpush1.msra.mxu0 0.0
        %3227 = vmatprep.subr.mxu0 0.0
        %3228 = vmatpush1.msra.mxu0 0.0
        %3229 = vmatprep.subr.mxu0 0.0
        %3230 = vmatpush1.msra.mxu0 0.0
        %3231 = vmatprep.subr.mxu0 0.0
        %3232 = vmatpush1.msra.mxu0 0.0
        %3233 = vmatprep.subr.mxu0 0.0
        %3234 = vmatpush1.msra.mxu0 0.0
        %3235 = vmatprep.subr.mxu0 0.0
        %v3236 = vand.u32 %v3131, 4294901760
        %v3237 = vsub.f32 %v3131, %v3236
        %v3238 = vand.u32 %v3237, 4294901760
        %v3239 = vsub.f32 %v3237, %v3238
        %v3240 = vand.u32 %v3239, 4294901760
        %3241 = vmatpush1.msra.mxu0 %v3240
        %3242 = vmatprep.subr.mxu0 0.0
        %v3243 = vand.u32 %v3130, 4294901760
        %v3244 = vsub.f32 %v3130, %v3243
        %v3245 = vand.u32 %v3244, 4294901760
        %v3246 = vsub.f32 %v3244, %v3245
        %v3247 = vand.u32 %v3246, 4294901760
        %3248 = vmatpush1.msra.mxu0 %v3247
        %3249 = vmatprep.subr.mxu0 0.0
        %v3250 = vand.u32 %v3129, 4294901760
        %v3251 = vsub.f32 %v3129, %v3250
        %v3252 = vand.u32 %v3251, 4294901760
        %v3253 = vsub.f32 %v3251, %v3252
        %v3254 = vand.u32 %v3253, 4294901760
        %3255 = vmatpush1.msra.mxu0 %v3254
        %3256 = vmatprep.subr.mxu0 0.0
        %v3257 = vand.u32 %v3128, 4294901760
        %v3258 = vsub.f32 %v3128, %v3257
        %v3259 = vand.u32 %v3258, 4294901760
        %v3260 = vsub.f32 %v3258, %v3259
        %v3261 = vand.u32 %v3260, 4294901760
        %3262 = vmatpush1.msra.mxu0 %v3261
        %3263 = vmatprep.subr.mxu0 0.0
        %3264 = vmatpush2.msra.mxu0 0.0
        %3265 = vmatprep.subr.mxu0 0.0
        %3266 = vmatpush2.msra.mxu0 0.0
        %3267 = vmatprep.subr.mxu0 0.0
        %3268 = vmatpush2.msra.mxu0 0.0
        %3269 = vmatprep.subr.mxu0 0.0
        %3270 = vmatpush2.msra.mxu0 0.0
        %3271 = vmatprep.subr.mxu0 0.0
        %3272 = vmatpush2.msra.mxu0 0.0
        %3273 = vmatprep.subr.mxu0 0.0
        %3274 = vmatpush2.msra.mxu0 0.0
        %3275 = vmatprep.subr.mxu0 0.0
        %3276 = vmatpush2.msra.mxu0 0.0
        %3277 = vmatprep.subr.mxu0 0.0
        %3278 = vmatpush2.msra.mxu0 0.0
        %3279 = vmatprep.subr.mxu0 0.0
        %3280 = vmatpush2.msra.mxu0 0.0
        %3281 = vmatprep.subr.mxu0 0.0
        %3282 = vmatpush2.msra.mxu0 0.0
        %3283 = vmatprep.subr.mxu0 0.0
        %3284 = vmatpush2.msra.mxu0 0.0
        %3285 = vmatprep.subr.mxu0 0.0
        %3286 = vmatpush2.msra.mxu0 0.0
        %3287 = vmatprep.subr.mxu0 0.0
        %3288 = vmatpush2.msra.mxu0 0.0
        %3289 = vmatprep.subr.mxu0 0.0
        %3290 = vmatpush2.msra.mxu0 0.0
        %3291 = vmatprep.subr.mxu0 0.0
        %3292 = vmatpush2.msra.mxu0 0.0
        %3293 = vmatprep.subr.mxu0 0.0
        %3294 = vmatpush2.msra.mxu0 0.0
        %3295 = vmatprep.mubr.f32.mxu0 0.0
        %v3296 = vand.u32 %v2639, 4294901760
        %3297 = vmatmul.mubr.f32.gmra.mxu0 %v3296
        %v3298 = vpop.f32.mrf.mxu0
        %v3299 = vadd.f32 %v3208, %v3298
        %v3300 = vpop.f32.mrf.mxu0
        %3301 = vdwg.mxu0
        %3302 = vmatprep.subr.mxu0 0.0
        %3303 = vmatpush1.msra.mxu0 0.0
        %3304 = vmatprep.subr.mxu0 0.0
        %3305 = vmatpush1.msra.mxu0 0.0
        %3306 = vmatprep.subr.mxu0 0.0
        %3307 = vmatpush1.msra.mxu0 0.0
        %3308 = vmatprep.subr.mxu0 0.0
        %3309 = vmatpush1.msra.mxu0 0.0
        %3310 = vmatprep.subr.mxu0 0.0
        %3311 = vmatpush1.msra.mxu0 0.0
        %3312 = vmatprep.subr.mxu0 0.0
        %3313 = vmatpush1.msra.mxu0 0.0
        %3314 = vmatprep.subr.mxu0 0.0
        %3315 = vmatpush1.msra.mxu0 0.0
        %3316 = vmatprep.subr.mxu0 0.0
        %3317 = vmatpush1.msra.mxu0 0.0
        %3318 = vmatprep.subr.mxu0 0.0
        %3319 = vmatpush1.msra.mxu0 0.0
        %3320 = vmatprep.subr.mxu0 0.0
        %3321 = vmatpush1.msra.mxu0 0.0
        %3322 = vmatprep.subr.mxu0 0.0
        %3323 = vmatpush1.msra.mxu0 0.0
        %3324 = vmatprep.subr.mxu0 0.0
        %3325 = vmatpush1.msra.mxu0 0.0
        %3326 = vmatprep.subr.mxu0 0.0
        %v3327 = vand.u32 %v3131, 4294901760
        %v3328 = vsub.f32 %v3131, %v3327
        %3329 = vmatpush1.msra.mxu0 %v3328
        %3330 = vmatprep.subr.mxu0 0.0
        %v3331 = vand.u32 %v3130, 4294901760
        %v3332 = vsub.f32 %v3130, %v3331
        %3333 = vmatpush1.msra.mxu0 %v3332
        %3334 = vmatprep.subr.mxu0 0.0
        %v3335 = vand.u32 %v3129, 4294901760
        %v3336 = vsub.f32 %v3129, %v3335
        %3337 = vmatpush1.msra.mxu0 %v3336
        %3338 = vmatprep.subr.mxu0 0.0
        %v3339 = vand.u32 %v3128, 4294901760
        %v3340 = vsub.f32 %v3128, %v3339
        %3341 = vmatpush1.msra.mxu0 %v3340
        %3342 = vmatprep.subr.mxu0 0.0
        %3343 = vmatpush2.msra.mxu0 0.0
        %3344 = vmatprep.subr.mxu0 0.0
        %3345 = vmatpush2.msra.mxu0 0.0
        %3346 = vmatprep.subr.mxu0 0.0
        %3347 = vmatpush2.msra.mxu0 0.0
        %3348 = vmatprep.subr.mxu0 0.0
        %3349 = vmatpush2.msra.mxu0 0.0
        %3350 = vmatprep.subr.mxu0 0.0
        %3351 = vmatpush2.msra.mxu0 0.0
        %3352 = vmatprep.subr.mxu0 0.0
        %3353 = vmatpush2.msra.mxu0 0.0
        %3354 = vmatprep.subr.mxu0 0.0
        %3355 = vmatpush2.msra.mxu0 0.0
        %3356 = vmatprep.subr.mxu0 0.0
        %3357 = vmatpush2.msra.mxu0 0.0
        %3358 = vmatprep.subr.mxu0 0.0
        %3359 = vmatpush2.msra.mxu0 0.0
        %3360 = vmatprep.subr.mxu0 0.0
        %3361 = vmatpush2.msra.mxu0 0.0
        %3362 = vmatprep.subr.mxu0 0.0
        %3363 = vmatpush2.msra.mxu0 0.0
        %3364 = vmatprep.subr.mxu0 0.0
        %3365 = vmatpush2.msra.mxu0 0.0
        %3366 = vmatprep.subr.mxu0 0.0
        %3367 = vmatpush2.msra.mxu0 0.0
        %3368 = vmatprep.subr.mxu0 0.0
        %3369 = vmatpush2.msra.mxu0 0.0
        %3370 = vmatprep.subr.mxu0 0.0
        %3371 = vmatpush2.msra.mxu0 0.0
        %3372 = vmatprep.subr.mxu0 0.0
        %3373 = vmatpush2.msra.mxu0 0.0
        %3374 = vmatprep.mubr.f32.mxu0 0.0
        %v3375 = vand.u32 %v2639, 4294901760
        %v3376 = vsub.f32 %v2639, %v3375
        %3377 = vmatmul.mubr.f32.gmra.mxu0 %v3376
        %v3378 = vpop.f32.mrf.mxu0
        %v3379 = vadd.f32 %v3299, %v3378
        %v3380 = vpop.f32.mrf.mxu0
        %3381 = vdwg.mxu0
        %3382 = vmatprep.subr.mxu0 0.0
        %3383 = vmatpush1.msra.mxu0 0.0
        %3384 = vmatprep.subr.mxu0 0.0
        %3385 = vmatpush1.msra.mxu0 0.0
        %3386 = vmatprep.subr.mxu0 0.0
        %3387 = vmatpush1.msra.mxu0 0.0
        %3388 = vmatprep.subr.mxu0 0.0
        %3389 = vmatpush1.msra.mxu0 0.0
        %3390 = vmatprep.subr.mxu0 0.0
        %3391 = vmatpush1.msra.mxu0 0.0
        %3392 = vmatprep.subr.mxu0 0.0
        %3393 = vmatpush1.msra.mxu0 0.0
        %3394 = vmatprep.subr.mxu0 0.0
        %3395 = vmatpush1.msra.mxu0 0.0
        %3396 = vmatprep.subr.mxu0 0.0
        %3397 = vmatpush1.msra.mxu0 0.0
        %3398 = vmatprep.subr.mxu0 0.0
        %3399 = vmatpush1.msra.mxu0 0.0
        %3400 = vmatprep.subr.mxu0 0.0
        %3401 = vmatpush1.msra.mxu0 0.0
        %3402 = vmatprep.subr.mxu0 0.0
        %3403 = vmatpush1.msra.mxu0 0.0
        %3404 = vmatprep.subr.mxu0 0.0
        %3405 = vmatpush1.msra.mxu0 0.0
        %3406 = vmatprep.subr.mxu0 0.0
        %v3407 = vand.u32 %v3131, 4294901760
        %3408 = vmatpush1.msra.mxu0 %v3407
        %3409 = vmatprep.subr.mxu0 0.0
        %v3410 = vand.u32 %v3130, 4294901760
        %3411 = vmatpush1.msra.mxu0 %v3410
        %3412 = vmatprep.subr.mxu0 0.0
        %v3413 = vand.u32 %v3129, 4294901760
        %3414 = vmatpush1.msra.mxu0 %v3413
        %3415 = vmatprep.subr.mxu0 0.0
        %v3416 = vand.u32 %v3128, 4294901760
        %3417 = vmatpush1.msra.mxu0 %v3416
        %3418 = vmatprep.subr.mxu0 0.0
        %3419 = vmatpush2.msra.mxu0 0.0
        %3420 = vmatprep.subr.mxu0 0.0
        %3421 = vmatpush2.msra.mxu0 0.0
        %3422 = vmatprep.subr.mxu0 0.0
        %3423 = vmatpush2.msra.mxu0 0.0
        %3424 = vmatprep.subr.mxu0 0.0
        %3425 = vmatpush2.msra.mxu0 0.0
        %3426 = vmatprep.subr.mxu0 0.0
        %3427 = vmatpush2.msra.mxu0 0.0
        %3428 = vmatprep.subr.mxu0 0.0
        %3429 = vmatpush2.msra.mxu0 0.0
        %3430 = vmatprep.subr.mxu0 0.0
        %3431 = vmatpush2.msra.mxu0 0.0
        %3432 = vmatprep.subr.mxu0 0.0
        %3433 = vmatpush2.msra.mxu0 0.0
        %3434 = vmatprep.subr.mxu0 0.0
        %3435 = vmatpush2.msra.mxu0 0.0
        %3436 = vmatprep.subr.mxu0 0.0
        %3437 = vmatpush2.msra.mxu0 0.0
        %3438 = vmatprep.subr.mxu0 0.0
        %3439 = vmatpush2.msra.mxu0 0.0
        %3440 = vmatprep.subr.mxu0 0.0
        %3441 = vmatpush2.msra.mxu0 0.0
        %3442 = vmatprep.subr.mxu0 0.0
        %3443 = vmatpush2.msra.mxu0 0.0
        %3444 = vmatprep.subr.mxu0 0.0
        %3445 = vmatpush2.msra.mxu0 0.0
        %3446 = vmatprep.subr.mxu0 0.0
        %3447 = vmatpush2.msra.mxu0 0.0
        %3448 = vmatprep.subr.mxu0 0.0
        %3449 = vmatpush2.msra.mxu0 0.0
        %3450 = vmatprep.mubr.f32.mxu0 0.0
        %v3451 = vand.u32 %v2639, 4294901760
        %v3452 = vsub.f32 %v2639, %v3451
        %v3453 = vand.u32 %v3452, 4294901760
        %3454 = vmatmul.mubr.f32.gmra.mxu0 %v3453
        %v3455 = vpop.f32.mrf.mxu0
        %v3456 = vadd.f32 %v3379, %v3455
        %v3457 = vpop.f32.mrf.mxu0
        %3458 = vdwg.mxu0
        %3459 = vmatprep.subr.mxu0 0.0
        %3460 = vmatpush1.msra.mxu0 0.0
        %3461 = vmatprep.subr.mxu0 0.0
        %3462 = vmatpush1.msra.mxu0 0.0
        %3463 = vmatprep.subr.mxu0 0.0
        %3464 = vmatpush1.msra.mxu0 0.0
        %3465 = vmatprep.subr.mxu0 0.0
        %3466 = vmatpush1.msra.mxu0 0.0
        %3467 = vmatprep.subr.mxu0 0.0
        %3468 = vmatpush1.msra.mxu0 0.0
        %3469 = vmatprep.subr.mxu0 0.0
        %3470 = vmatpush1.msra.mxu0 0.0
        %3471 = vmatprep.subr.mxu0 0.0
        %3472 = vmatpush1.msra.mxu0 0.0
        %3473 = vmatprep.subr.mxu0 0.0
        %3474 = vmatpush1.msra.mxu0 0.0
        %3475 = vmatprep.subr.mxu0 0.0
        %3476 = vmatpush1.msra.mxu0 0.0
        %3477 = vmatprep.subr.mxu0 0.0
        %3478 = vmatpush1.msra.mxu0 0.0
        %3479 = vmatprep.subr.mxu0 0.0
        %3480 = vmatpush1.msra.mxu0 0.0
        %3481 = vmatprep.subr.mxu0 0.0
        %3482 = vmatpush1.msra.mxu0 0.0
        %3483 = vmatprep.subr.mxu0 0.0
        %v3484 = vand.u32 %v3131, 4294901760
        %v3485 = vsub.f32 %v3131, %v3484
        %v3486 = vand.u32 %v3485, 4294901760
        %3487 = vmatpush1.msra.mxu0 %v3486
        %3488 = vmatprep.subr.mxu0 0.0
        %v3489 = vand.u32 %v3130, 4294901760
        %v3490 = vsub.f32 %v3130, %v3489
        %v3491 = vand.u32 %v3490, 4294901760
        %3492 = vmatpush1.msra.mxu0 %v3491
        %3493 = vmatprep.subr.mxu0 0.0
        %v3494 = vand.u32 %v3129, 4294901760
        %v3495 = vsub.f32 %v3129, %v3494
        %v3496 = vand.u32 %v3495, 4294901760
        %3497 = vmatpush1.msra.mxu0 %v3496
        %3498 = vmatprep.subr.mxu0 0.0
        %v3499 = vand.u32 %v3128, 4294901760
        %v3500 = vsub.f32 %v3128, %v3499
        %v3501 = vand.u32 %v3500, 4294901760
        %3502 = vmatpush1.msra.mxu0 %v3501
        %3503 = vmatprep.subr.mxu0 0.0
        %3504 = vmatpush2.msra.mxu0 0.0
        %3505 = vmatprep.subr.mxu0 0.0
        %3506 = vmatpush2.msra.mxu0 0.0
        %3507 = vmatprep.subr.mxu0 0.0
        %3508 = vmatpush2.msra.mxu0 0.0
        %3509 = vmatprep.subr.mxu0 0.0
        %3510 = vmatpush2.msra.mxu0 0.0
        %3511 = vmatprep.subr.mxu0 0.0
        %3512 = vmatpush2.msra.mxu0 0.0
        %3513 = vmatprep.subr.mxu0 0.0
        %3514 = vmatpush2.msra.mxu0 0.0
        %3515 = vmatprep.subr.mxu0 0.0
        %3516 = vmatpush2.msra.mxu0 0.0
        %3517 = vmatprep.subr.mxu0 0.0
        %3518 = vmatpush2.msra.mxu0 0.0
        %3519 = vmatprep.subr.mxu0 0.0
        %3520 = vmatpush2.msra.mxu0 0.0
        %3521 = vmatprep.subr.mxu0 0.0
        %3522 = vmatpush2.msra.mxu0 0.0
        %3523 = vmatprep.subr.mxu0 0.0
        %3524 = vmatpush2.msra.mxu0 0.0
        %3525 = vmatprep.subr.mxu0 0.0
        %3526 = vmatpush2.msra.mxu0 0.0
        %3527 = vmatprep.subr.mxu0 0.0
        %3528 = vmatpush2.msra.mxu0 0.0
        %3529 = vmatprep.subr.mxu0 0.0
        %3530 = vmatpush2.msra.mxu0 0.0
        %3531 = vmatprep.subr.mxu0 0.0
        %3532 = vmatpush2.msra.mxu0 0.0
        %3533 = vmatprep.subr.mxu0 0.0
        %3534 = vmatpush2.msra.mxu0 0.0
        %3535 = vmatprep.mubr.f32.mxu0 0.0
        %v3536 = vand.u32 %v2639, 4294901760
        %3537 = vmatmul.mubr.f32.gmra.mxu0 %v3536
        %v3538 = vpop.f32.mrf.mxu0
        %v3539 = vadd.f32 %v3456, %v3538
        %v3540 = vpop.f32.mrf.mxu0
        %3541 = vdwg.mxu0
        %3542 = vmatprep.subr.mxu0 0.0
        %3543 = vmatpush1.msra.mxu0 0.0
        %3544 = vmatprep.subr.mxu0 0.0
        %3545 = vmatpush1.msra.mxu0 0.0
        %3546 = vmatprep.subr.mxu0 0.0
        %3547 = vmatpush1.msra.mxu0 0.0
        %3548 = vmatprep.subr.mxu0 0.0
        %3549 = vmatpush1.msra.mxu0 0.0
        %3550 = vmatprep.subr.mxu0 0.0
        %3551 = vmatpush1.msra.mxu0 0.0
        %3552 = vmatprep.subr.mxu0 0.0
        %3553 = vmatpush1.msra.mxu0 0.0
        %3554 = vmatprep.subr.mxu0 0.0
        %3555 = vmatpush1.msra.mxu0 0.0
        %3556 = vmatprep.subr.mxu0 0.0
        %3557 = vmatpush1.msra.mxu0 0.0
        %3558 = vmatprep.subr.mxu0 0.0
        %3559 = vmatpush1.msra.mxu0 0.0
        %3560 = vmatprep.subr.mxu0 0.0
        %3561 = vmatpush1.msra.mxu0 0.0
        %3562 = vmatprep.subr.mxu0 0.0
        %3563 = vmatpush1.msra.mxu0 0.0
        %3564 = vmatprep.subr.mxu0 0.0
        %3565 = vmatpush1.msra.mxu0 0.0
        %3566 = vmatprep.subr.mxu0 0.0
        %v3567 = vand.u32 %v3131, 4294901760
        %3568 = vmatpush1.msra.mxu0 %v3567
        %3569 = vmatprep.subr.mxu0 0.0
        %v3570 = vand.u32 %v3130, 4294901760
        %3571 = vmatpush1.msra.mxu0 %v3570
        %3572 = vmatprep.subr.mxu0 0.0
        %v3573 = vand.u32 %v3129, 4294901760
        %3574 = vmatpush1.msra.mxu0 %v3573
        %3575 = vmatprep.subr.mxu0 0.0
        %v3576 = vand.u32 %v3128, 4294901760
        %3577 = vmatpush1.msra.mxu0 %v3576
        %3578 = vmatprep.subr.mxu0 0.0
        %3579 = vmatpush2.msra.mxu0 0.0
        %3580 = vmatprep.subr.mxu0 0.0
        %3581 = vmatpush2.msra.mxu0 0.0
        %3582 = vmatprep.subr.mxu0 0.0
        %3583 = vmatpush2.msra.mxu0 0.0
        %3584 = vmatprep.subr.mxu0 0.0
        %3585 = vmatpush2.msra.mxu0 0.0
        %3586 = vmatprep.subr.mxu0 0.0
        %3587 = vmatpush2.msra.mxu0 0.0
        %3588 = vmatprep.subr.mxu0 0.0
        %3589 = vmatpush2.msra.mxu0 0.0
        %3590 = vmatprep.subr.mxu0 0.0
        %3591 = vmatpush2.msra.mxu0 0.0
        %3592 = vmatprep.subr.mxu0 0.0
        %3593 = vmatpush2.msra.mxu0 0.0
        %3594 = vmatprep.subr.mxu0 0.0
        %3595 = vmatpush2.msra.mxu0 0.0
        %3596 = vmatprep.subr.mxu0 0.0
        %3597 = vmatpush2.msra.mxu0 0.0
        %3598 = vmatprep.subr.mxu0 0.0
        %3599 = vmatpush2.msra.mxu0 0.0
        %3600 = vmatprep.subr.mxu0 0.0
        %3601 = vmatpush2.msra.mxu0 0.0
        %3602 = vmatprep.subr.mxu0 0.0
        %3603 = vmatpush2.msra.mxu0 0.0
        %3604 = vmatprep.subr.mxu0 0.0
        %3605 = vmatpush2.msra.mxu0 0.0
        %3606 = vmatprep.subr.mxu0 0.0
        %3607 = vmatpush2.msra.mxu0 0.0
        %3608 = vmatprep.subr.mxu0 0.0
        %3609 = vmatpush2.msra.mxu0 0.0
        %3610 = vmatprep.mubr.f32.mxu0 0.0
        %v3611 = vand.u32 %v2639, 4294901760
        %3612 = vmatmul.mubr.f32.gmra.mxu0 %v3611
        %v3613 = vpop.f32.mrf.mxu0
        %v3614 = vadd.f32 %v3539, %v3613
        %v3615 = vpop.f32.mrf.mxu0
        %3616 = vdwg.mxu0
        %v3617 = vmul.f32 %v3614, 1.442695
        %v3618 = vpow.pop %v3617
        %v3619 = vadd.f32 %v3127, %v3618
        %v3620 = vrcp.pop %v3619
        %v3621 = vmul.f32 %v3127, %v3620
        %v3622 = vsub.f32 1.0, %v3621
        %v3623 = vld [vmem:[%s7] sm:$0x1]
        %v3625 = vlaneseq
        %v3626 = vshrl.u32 %v3625, 7
        %v3627 = vsub.s32 0, %v3626
        %v3628 = vrot.slane %v3623, %v3627
        %v3630 = vmul.f32 %v2152, %v3628
        %v3631 = vmul.f32 %v2153, %v3628
        %v3632 = vmul.f32 %v2154, %v3628
        %v3633 = vmul.f32 %v2155, %v3628
        %v3634 = vmul.f32 %v2156, %v3628
        %v3635 = vmul.f32 %v2157, %v3628
        %v3636 = vmul.f32 %v2158, %v3628
        %v3637 = vmul.f32 %v2159, %v3628
        %v3638 = vsel %vm1013, %v3630, 0.0
        %3639 = vadd.xlane.f32.xlu0 %v3638
        %v3640 = vpop.xlane.xlu0 %3639
        %v3641 = vsel %vm1013, %v3631, 0.0
        %3642 = vadd.xlane.f32.xlu0 %v3641
        %v3643 = vpop.xlane.xlu0 %3642
        %v3644 = vsel %vm1013, %v3632, 0.0
        %3645 = vadd.xlane.f32.xlu0 %v3644
        %v3646 = vpop.xlane.xlu0 %3645
        %v3647 = vsel %vm1013, %v3633, 0.0
        %3648 = vadd.xlane.f32.xlu0 %v3647
        %v3649 = vpop.xlane.xlu0 %3648
        %v3650 = vsel %vm1013, %v3634, 0.0
        %3651 = vadd.xlane.f32.xlu0 %v3650
        %v3652 = vpop.xlane.xlu0 %3651
        %v3653 = vsel %vm1013, %v3635, 0.0
        %3654 = vadd.xlane.f32.xlu0 %v3653
        %v3655 = vpop.xlane.xlu0 %3654
        %v3656 = vsel %vm1013, %v3636, 0.0
        %3657 = vadd.xlane.f32.xlu0 %v3656
        %v3658 = vpop.xlane.xlu0 %3657
        %v3659 = vsel %vm1013, %v3637, 0.0
        %3660 = vadd.xlane.f32.xlu0 %v3659
        %v3661 = vpop.xlane.xlu0 %3660
        %v3662 = vsub.f32 0.0, %v3640
        %v3663 = vsub.f32 0.0, %v3643
        %v3664 = vsub.f32 0.0, %v3646
        %v3665 = vsub.f32 0.0, %v3649
        %v3666 = vsub.f32 0.0, %v3652
        %v3667 = vsub.f32 0.0, %v3655
        %v3668 = vsub.f32 0.0, %v3658
        %v3669 = vsub.f32 0.0, %v3661
        %v3670 = vmul.f32 %v3662, 1.442695
        %v3671 = vpow.pop %v3670
        %v3672 = vmul.f32 %v3663, 1.442695
        %v3673 = vpow.pop %v3672
        %v3674 = vmul.f32 %v3664, 1.442695
        %v3675 = vpow.pop %v3674
        %v3676 = vmul.f32 %v3665, 1.442695
        %v3677 = vpow.pop %v3676
        %v3678 = vmul.f32 %v3666, 1.442695
        %v3679 = vpow.pop %v3678
        %v3680 = vmul.f32 %v3667, 1.442695
        %v3681 = vpow.pop %v3680
        %v3682 = vmul.f32 %v3668, 1.442695
        %v3683 = vpow.pop %v3682
        %v3684 = vmul.f32 %v3669, 1.442695
        %v3685 = vpow.pop %v3684
        %v3686 = vadd.f32 %v3671, 1.0
        %v3687 = vadd.f32 %v3673, 1.0
        %v3688 = vadd.f32 %v3675, 1.0
        %v3689 = vadd.f32 %v3677, 1.0
        %v3690 = vadd.f32 %v3679, 1.0
        %v3691 = vadd.f32 %v3681, 1.0
        %v3692 = vadd.f32 %v3683, 1.0
        %v3693 = vadd.f32 %v3685, 1.0
        %v3694 = vrcp.pop %v3686
        %v3695 = vmul.f32 1.0, %v3694
        %v3696 = vrcp.pop %v3687
        %v3697 = vmul.f32 1.0, %v3696
        %v3698 = vrcp.pop %v3688
        %v3699 = vmul.f32 1.0, %v3698
        %v3700 = vrcp.pop %v3689
        %v3701 = vmul.f32 1.0, %v3700
        %v3702 = vrcp.pop %v3690
        %v3703 = vmul.f32 1.0, %v3702
        %v3704 = vrcp.pop %v3691
        %v3705 = vmul.f32 1.0, %v3704
        %v3706 = vrcp.pop %v3692
        %v3707 = vmul.f32 1.0, %v3706
        %v3708 = vrcp.pop %v3693
        %v3709 = vmul.f32 1.0, %v3708
        %v3710 = vld [vmem:[%s387] sm:$0xff]
        %v3719 = vlaneseq
        %v3720 = vand.u32 %v3719, 127
        %v3721 = vlaneseq
        %v3722 = vshrl.u32 %v3721, 7
        %v3723 = vsub.s32 %v3720, %v3722
        %v3724 = vrot.slane %v3695, %v3723
        %v3725 = vlaneseq
        %v3726 = vshrl.u32 %v3725, 7
        %v3727 = vsub.s32 %v3720, %v3726
        %v3728 = vrot.slane %v3697, %v3727
        %v3729 = vlaneseq
        %v3730 = vshrl.u32 %v3729, 7
        %v3731 = vsub.s32 %v3720, %v3730
        %v3732 = vrot.slane %v3699, %v3731
        %v3733 = vlaneseq
        %v3734 = vshrl.u32 %v3733, 7
        %v3735 = vsub.s32 %v3720, %v3734
        %v3736 = vrot.slane %v3701, %v3735
        %v3737 = vlaneseq
        %v3738 = vshrl.u32 %v3737, 7
        %v3739 = vsub.s32 %v3720, %v3738
        %v3740 = vrot.slane %v3703, %v3739
        %v3741 = vlaneseq
        %v3742 = vshrl.u32 %v3741, 7
        %v3743 = vsub.s32 %v3720, %v3742
        %v3744 = vrot.slane %v3705, %v3743
        %v3745 = vlaneseq
        %v3746 = vshrl.u32 %v3745, 7
        %v3747 = vsub.s32 %v3720, %v3746
        %v3748 = vrot.slane %v3707, %v3747
        %v3749 = vlaneseq
        %v3750 = vshrl.u32 %v3749, 7
        %v3751 = vsub.s32 %v3720, %v3750
        %v3752 = vrot.slane %v3709, %v3751
        %vm3753 = vcmask 1041409
        %v3754 = vsel %vm3753, %v3728, %v3724
        %vm3755 = vcmask 1042434
        %v3756 = vsel %vm3755, %v3732, %v3754
        %vm3757 = vcmask 1043459
        %v3758 = vsel %vm3757, %v3736, %v3756
        %vm3759 = vcmask 1044484
        %v3760 = vsel %vm3759, %v3740, %v3758
        %vm3761 = vcmask 1045509
        %v3762 = vsel %vm3761, %v3744, %v3760
        %vm3763 = vcmask 1046534
        %v3764 = vsel %vm3763, %v3748, %v3762
        %vm3765 = vcmask 1047559
        %v3766 = vsel %vm3765, %v3752, %v3764
        %v3767 = vsel %vm1013, %v3766, 0
        %3769 = vmatprep.subr.mxu0 0.0
        %3770 = vmatpush1.msra.mxu0 0.0
        %3771 = vmatprep.subr.mxu0 0.0
        %3772 = vmatpush1.msra.mxu0 0.0
        %3773 = vmatprep.subr.mxu0 0.0
        %3774 = vmatpush1.msra.mxu0 0.0
        %3775 = vmatprep.subr.mxu0 0.0
        %3776 = vmatpush1.msra.mxu0 0.0
        %3777 = vmatprep.subr.mxu0 0.0
        %3778 = vmatpush1.msra.mxu0 0.0
        %3779 = vmatprep.subr.mxu0 0.0
        %3780 = vmatpush1.msra.mxu0 0.0
        %3781 = vmatprep.subr.mxu0 0.0
        %3782 = vmatpush1.msra.mxu0 0.0
        %3783 = vmatprep.subr.mxu0 0.0
        %3784 = vmatpush1.msra.mxu0 0.0
        %3785 = vmatprep.subr.mxu0 0.0
        %3786 = vmatpush1.msra.mxu0 0.0
        %3787 = vmatprep.subr.mxu0 0.0
        %3788 = vmatpush1.msra.mxu0 0.0
        %3789 = vmatprep.subr.mxu0 0.0
        %3790 = vmatpush1.msra.mxu0 0.0
        %3791 = vmatprep.subr.mxu0 0.0
        %3792 = vmatpush1.msra.mxu0 0.0
        %3793 = vmatprep.subr.mxu0 0.0
        %3794 = vmatpush1.msra.mxu0 0.0
        %3795 = vmatprep.subr.mxu0 0.0
        %3796 = vmatpush1.msra.mxu0 0.0
        %3797 = vmatprep.subr.mxu0 0.0
        %3798 = vmatpush1.msra.mxu0 0.0
        %3799 = vmatprep.subr.mxu0 0.0
        %v3800 = vand.u32 %v3710, 4294901760
        %3801 = vmatpush1.msra.mxu0 %v3800
        %3802 = vmatprep.subr.mxu0 0.0
        %3803 = vmatpush2.msra.mxu0 0.0
        %3804 = vmatprep.subr.mxu0 0.0
        %3805 = vmatpush2.msra.mxu0 0.0
        %3806 = vmatprep.subr.mxu0 0.0
        %3807 = vmatpush2.msra.mxu0 0.0
        %3808 = vmatprep.subr.mxu0 0.0
        %3809 = vmatpush2.msra.mxu0 0.0
        %3810 = vmatprep.subr.mxu0 0.0
        %3811 = vmatpush2.msra.mxu0 0.0
        %3812 = vmatprep.subr.mxu0 0.0
        %3813 = vmatpush2.msra.mxu0 0.0
        %3814 = vmatprep.subr.mxu0 0.0
        %3815 = vmatpush2.msra.mxu0 0.0
        %3816 = vmatprep.subr.mxu0 0.0
        %3817 = vmatpush2.msra.mxu0 0.0
        %3818 = vmatprep.subr.mxu0 0.0
        %3819 = vmatpush2.msra.mxu0 0.0
        %3820 = vmatprep.subr.mxu0 0.0
        %3821 = vmatpush2.msra.mxu0 0.0
        %3822 = vmatprep.subr.mxu0 0.0
        %3823 = vmatpush2.msra.mxu0 0.0
        %3824 = vmatprep.subr.mxu0 0.0
        %3825 = vmatpush2.msra.mxu0 0.0
        %3826 = vmatprep.subr.mxu0 0.0
        %3827 = vmatpush2.msra.mxu0 0.0
        %3828 = vmatprep.subr.mxu0 0.0
        %3829 = vmatpush2.msra.mxu0 0.0
        %3830 = vmatprep.subr.mxu0 0.0
        %3831 = vmatpush2.msra.mxu0 0.0
        %3832 = vmatprep.subr.mxu0 0.0
        %3833 = vmatpush2.msra.mxu0 0.0
        %3834 = vmatprep.mubr.f32.mxu0 0.0
        %v3835 = vand.u32 %v3767, 4294901760
        %v3836 = vsub.f32 %v3767, %v3835
        %v3837 = vand.u32 %v3836, 4294901760
        %v3838 = vsub.f32 %v3836, %v3837
        %v3839 = vand.u32 %v3838, 4294901760
        %3840 = vmatmul.mubr.f32.gmra.mxu0 %v3839
        %v3841 = vpop.f32.mrf.mxu0
        %v3842 = vadd.f32 0.0, %v3841
        %v3843 = vpop.f32.mrf.mxu0
        %3844 = vdwg.mxu0
        %3845 = vmatprep.subr.mxu0 0.0
        %3846 = vmatpush1.msra.mxu0 0.0
        %3847 = vmatprep.subr.mxu0 0.0
        %3848 = vmatpush1.msra.mxu0 0.0
        %3849 = vmatprep.subr.mxu0 0.0
        %3850 = vmatpush1.msra.mxu0 0.0
        %3851 = vmatprep.subr.mxu0 0.0
        %3852 = vmatpush1.msra.mxu0 0.0
        %3853 = vmatprep.subr.mxu0 0.0
        %3854 = vmatpush1.msra.mxu0 0.0
        %3855 = vmatprep.subr.mxu0 0.0
        %3856 = vmatpush1.msra.mxu0 0.0
        %3857 = vmatprep.subr.mxu0 0.0
        %3858 = vmatpush1.msra.mxu0 0.0
        %3859 = vmatprep.subr.mxu0 0.0
        %3860 = vmatpush1.msra.mxu0 0.0
        %3861 = vmatprep.subr.mxu0 0.0
        %3862 = vmatpush1.msra.mxu0 0.0
        %3863 = vmatprep.subr.mxu0 0.0
        %3864 = vmatpush1.msra.mxu0 0.0
        %3865 = vmatprep.subr.mxu0 0.0
        %3866 = vmatpush1.msra.mxu0 0.0
        %3867 = vmatprep.subr.mxu0 0.0
        %3868 = vmatpush1.msra.mxu0 0.0
        %3869 = vmatprep.subr.mxu0 0.0
        %3870 = vmatpush1.msra.mxu0 0.0
        %3871 = vmatprep.subr.mxu0 0.0
        %3872 = vmatpush1.msra.mxu0 0.0
        %3873 = vmatprep.subr.mxu0 0.0
        %3874 = vmatpush1.msra.mxu0 0.0
        %3875 = vmatprep.subr.mxu0 0.0
        %v3876 = vand.u32 %v3710, 4294901760
        %v3877 = vsub.f32 %v3710, %v3876
        %v3878 = vand.u32 %v3877, 4294901760
        %v3879 = vsub.f32 %v3877, %v3878
        %v3880 = vand.u32 %v3879, 4294901760
        %3881 = vmatpush1.msra.mxu0 %v3880
        %3882 = vmatprep.subr.mxu0 0.0
        %3883 = vmatpush2.msra.mxu0 0.0
        %3884 = vmatprep.subr.mxu0 0.0
        %3885 = vmatpush2.msra.mxu0 0.0
        %3886 = vmatprep.subr.mxu0 0.0
        %3887 = vmatpush2.msra.mxu0 0.0
        %3888 = vmatprep.subr.mxu0 0.0
        %3889 = vmatpush2.msra.mxu0 0.0
        %3890 = vmatprep.subr.mxu0 0.0
        %3891 = vmatpush2.msra.mxu0 0.0
        %3892 = vmatprep.subr.mxu0 0.0
        %3893 = vmatpush2.msra.mxu0 0.0
        %3894 = vmatprep.subr.mxu0 0.0
        %3895 = vmatpush2.msra.mxu0 0.0
        %3896 = vmatprep.subr.mxu0 0.0
        %3897 = vmatpush2.msra.mxu0 0.0
        %3898 = vmatprep.subr.mxu0 0.0
        %3899 = vmatpush2.msra.mxu0 0.0
        %3900 = vmatprep.subr.mxu0 0.0
        %3901 = vmatpush2.msra.mxu0 0.0
        %3902 = vmatprep.subr.mxu0 0.0
        %3903 = vmatpush2.msra.mxu0 0.0
        %3904 = vmatprep.subr.mxu0 0.0
        %3905 = vmatpush2.msra.mxu0 0.0
        %3906 = vmatprep.subr.mxu0 0.0
        %3907 = vmatpush2.msra.mxu0 0.0
        %3908 = vmatprep.subr.mxu0 0.0
        %3909 = vmatpush2.msra.mxu0 0.0
        %3910 = vmatprep.subr.mxu0 0.0
        %3911 = vmatpush2.msra.mxu0 0.0
        %3912 = vmatprep.subr.mxu0 0.0
        %3913 = vmatpush2.msra.mxu0 0.0
        %3914 = vmatprep.mubr.f32.mxu0 0.0
        %v3915 = vand.u32 %v3767, 4294901760
        %3916 = vmatmul.mubr.f32.gmra.mxu0 %v3915
        %v3917 = vpop.f32.mrf.mxu0
        %v3918 = vadd.f32 %v3842, %v3917
        %v3919 = vpop.f32.mrf.mxu0
        %3920 = vdwg.mxu0
        %3921 = vmatprep.subr.mxu0 0.0
        %3922 = vmatpush1.msra.mxu0 0.0
        %3923 = vmatprep.subr.mxu0 0.0
        %3924 = vmatpush1.msra.mxu0 0.0
        %3925 = vmatprep.subr.mxu0 0.0
        %3926 = vmatpush1.msra.mxu0 0.0
        %3927 = vmatprep.subr.mxu0 0.0
        %3928 = vmatpush1.msra.mxu0 0.0
        %3929 = vmatprep.subr.mxu0 0.0
        %3930 = vmatpush1.msra.mxu0 0.0
        %3931 = vmatprep.subr.mxu0 0.0
        %3932 = vmatpush1.msra.mxu0 0.0
        %3933 = vmatprep.subr.mxu0 0.0
        %3934 = vmatpush1.msra.mxu0 0.0
        %3935 = vmatprep.subr.mxu0 0.0
        %3936 = vmatpush1.msra.mxu0 0.0
        %3937 = vmatprep.subr.mxu0 0.0
        %3938 = vmatpush1.msra.mxu0 0.0
        %3939 = vmatprep.subr.mxu0 0.0
        %3940 = vmatpush1.msra.mxu0 0.0
        %3941 = vmatprep.subr.mxu0 0.0
        %3942 = vmatpush1.msra.mxu0 0.0
        %3943 = vmatprep.subr.mxu0 0.0
        %3944 = vmatpush1.msra.mxu0 0.0
        %3945 = vmatprep.subr.mxu0 0.0
        %3946 = vmatpush1.msra.mxu0 0.0
        %3947 = vmatprep.subr.mxu0 0.0
        %3948 = vmatpush1.msra.mxu0 0.0
        %3949 = vmatprep.subr.mxu0 0.0
        %3950 = vmatpush1.msra.mxu0 0.0
        %3951 = vmatprep.subr.mxu0 0.0
        %v3952 = vand.u32 %v3710, 4294901760
        %v3953 = vsub.f32 %v3710, %v3952
        %3954 = vmatpush1.msra.mxu0 %v3953
        %3955 = vmatprep.subr.mxu0 0.0
        %3956 = vmatpush2.msra.mxu0 0.0
        %3957 = vmatprep.subr.mxu0 0.0
        %3958 = vmatpush2.msra.mxu0 0.0
        %3959 = vmatprep.subr.mxu0 0.0
        %3960 = vmatpush2.msra.mxu0 0.0
        %3961 = vmatprep.subr.mxu0 0.0
        %3962 = vmatpush2.msra.mxu0 0.0
        %3963 = vmatprep.subr.mxu0 0.0
        %3964 = vmatpush2.msra.mxu0 0.0
        %3965 = vmatprep.subr.mxu0 0.0
        %3966 = vmatpush2.msra.mxu0 0.0
        %3967 = vmatprep.subr.mxu0 0.0
        %3968 = vmatpush2.msra.mxu0 0.0
        %3969 = vmatprep.subr.mxu0 0.0
        %3970 = vmatpush2.msra.mxu0 0.0
        %3971 = vmatprep.subr.mxu0 0.0
        %3972 = vmatpush2.msra.mxu0 0.0
        %3973 = vmatprep.subr.mxu0 0.0
        %3974 = vmatpush2.msra.mxu0 0.0
        %3975 = vmatprep.subr.mxu0 0.0
        %3976 = vmatpush2.msra.mxu0 0.0
        %3977 = vmatprep.subr.mxu0 0.0
        %3978 = vmatpush2.msra.mxu0 0.0
        %3979 = vmatprep.subr.mxu0 0.0
        %3980 = vmatpush2.msra.mxu0 0.0
        %3981 = vmatprep.subr.mxu0 0.0
        %3982 = vmatpush2.msra.mxu0 0.0
        %3983 = vmatprep.subr.mxu0 0.0
        %3984 = vmatpush2.msra.mxu0 0.0
        %3985 = vmatprep.subr.mxu0 0.0
        %3986 = vmatpush2.msra.mxu0 0.0
        %3987 = vmatprep.mubr.f32.mxu0 0.0
        %v3988 = vand.u32 %v3767, 4294901760
        %v3989 = vsub.f32 %v3767, %v3988
        %3990 = vmatmul.mubr.f32.gmra.mxu0 %v3989
        %v3991 = vpop.f32.mrf.mxu0
        %v3992 = vadd.f32 %v3918, %v3991
        %v3993 = vpop.f32.mrf.mxu0
        %3994 = vdwg.mxu0
        %3995 = vmatprep.subr.mxu0 0.0
        %3996 = vmatpush1.msra.mxu0 0.0
        %3997 = vmatprep.subr.mxu0 0.0
        %3998 = vmatpush1.msra.mxu0 0.0
        %3999 = vmatprep.subr.mxu0 0.0
        %4000 = vmatpush1.msra.mxu0 0.0
        %4001 = vmatprep.subr.mxu0 0.0
        %4002 = vmatpush1.msra.mxu0 0.0
        %4003 = vmatprep.subr.mxu0 0.0
        %4004 = vmatpush1.msra.mxu0 0.0
        %4005 = vmatprep.subr.mxu0 0.0
        %4006 = vmatpush1.msra.mxu0 0.0
        %4007 = vmatprep.subr.mxu0 0.0
        %4008 = vmatpush1.msra.mxu0 0.0
        %4009 = vmatprep.subr.mxu0 0.0
        %4010 = vmatpush1.msra.mxu0 0.0
        %4011 = vmatprep.subr.mxu0 0.0
        %4012 = vmatpush1.msra.mxu0 0.0
        %4013 = vmatprep.subr.mxu0 0.0
        %4014 = vmatpush1.msra.mxu0 0.0
        %4015 = vmatprep.subr.mxu0 0.0
        %4016 = vmatpush1.msra.mxu0 0.0
        %4017 = vmatprep.subr.mxu0 0.0
        %4018 = vmatpush1.msra.mxu0 0.0
        %4019 = vmatprep.subr.mxu0 0.0
        %4020 = vmatpush1.msra.mxu0 0.0
        %4021 = vmatprep.subr.mxu0 0.0
        %4022 = vmatpush1.msra.mxu0 0.0
        %4023 = vmatprep.subr.mxu0 0.0
        %4024 = vmatpush1.msra.mxu0 0.0
        %4025 = vmatprep.subr.mxu0 0.0
        %v4026 = vand.u32 %v3710, 4294901760
        %4027 = vmatpush1.msra.mxu0 %v4026
        %4028 = vmatprep.subr.mxu0 0.0
        %4029 = vmatpush2.msra.mxu0 0.0
        %4030 = vmatprep.subr.mxu0 0.0
        %4031 = vmatpush2.msra.mxu0 0.0
        %4032 = vmatprep.subr.mxu0 0.0
        %4033 = vmatpush2.msra.mxu0 0.0
        %4034 = vmatprep.subr.mxu0 0.0
        %4035 = vmatpush2.msra.mxu0 0.0
        %4036 = vmatprep.subr.mxu0 0.0
        %4037 = vmatpush2.msra.mxu0 0.0
        %4038 = vmatprep.subr.mxu0 0.0
        %4039 = vmatpush2.msra.mxu0 0.0
        %4040 = vmatprep.subr.mxu0 0.0
        %4041 = vmatpush2.msra.mxu0 0.0
        %4042 = vmatprep.subr.mxu0 0.0
        %4043 = vmatpush2.msra.mxu0 0.0
        %4044 = vmatprep.subr.mxu0 0.0
        %4045 = vmatpush2.msra.mxu0 0.0
        %4046 = vmatprep.subr.mxu0 0.0
        %4047 = vmatpush2.msra.mxu0 0.0
        %4048 = vmatprep.subr.mxu0 0.0
        %4049 = vmatpush2.msra.mxu0 0.0
        %4050 = vmatprep.subr.mxu0 0.0
        %4051 = vmatpush2.msra.mxu0 0.0
        %4052 = vmatprep.subr.mxu0 0.0
        %4053 = vmatpush2.msra.mxu0 0.0
        %4054 = vmatprep.subr.mxu0 0.0
        %4055 = vmatpush2.msra.mxu0 0.0
        %4056 = vmatprep.subr.mxu0 0.0
        %4057 = vmatpush2.msra.mxu0 0.0
        %4058 = vmatprep.subr.mxu0 0.0
        %4059 = vmatpush2.msra.mxu0 0.0
        %4060 = vmatprep.mubr.f32.mxu0 0.0
        %v4061 = vand.u32 %v3767, 4294901760
        %v4062 = vsub.f32 %v3767, %v4061
        %v4063 = vand.u32 %v4062, 4294901760
        %4064 = vmatmul.mubr.f32.gmra.mxu0 %v4063
        %v4065 = vpop.f32.mrf.mxu0
        %v4066 = vadd.f32 %v3992, %v4065
        %v4067 = vpop.f32.mrf.mxu0
        %4068 = vdwg.mxu0
        %4069 = vmatprep.subr.mxu0 0.0
        %4070 = vmatpush1.msra.mxu0 0.0
        %4071 = vmatprep.subr.mxu0 0.0
        %4072 = vmatpush1.msra.mxu0 0.0
        %4073 = vmatprep.subr.mxu0 0.0
        %4074 = vmatpush1.msra.mxu0 0.0
        %4075 = vmatprep.subr.mxu0 0.0
        %4076 = vmatpush1.msra.mxu0 0.0
        %4077 = vmatprep.subr.mxu0 0.0
        %4078 = vmatpush1.msra.mxu0 0.0
        %4079 = vmatprep.subr.mxu0 0.0
        %4080 = vmatpush1.msra.mxu0 0.0
        %4081 = vmatprep.subr.mxu0 0.0
        %4082 = vmatpush1.msra.mxu0 0.0
        %4083 = vmatprep.subr.mxu0 0.0
        %4084 = vmatpush1.msra.mxu0 0.0
        %4085 = vmatprep.subr.mxu0 0.0
        %4086 = vmatpush1.msra.mxu0 0.0
        %4087 = vmatprep.subr.mxu0 0.0
        %4088 = vmatpush1.msra.mxu0 0.0
        %4089 = vmatprep.subr.mxu0 0.0
        %4090 = vmatpush1.msra.mxu0 0.0
        %4091 = vmatprep.subr.mxu0 0.0
        %4092 = vmatpush1.msra.mxu0 0.0
        %4093 = vmatprep.subr.mxu0 0.0
        %4094 = vmatpush1.msra.mxu0 0.0
        %4095 = vmatprep.subr.mxu0 0.0
        %4096 = vmatpush1.msra.mxu0 0.0
        %4097 = vmatprep.subr.mxu0 0.0
        %4098 = vmatpush1.msra.mxu0 0.0
        %4099 = vmatprep.subr.mxu0 0.0
        %v4100 = vand.u32 %v3710, 4294901760
        %v4101 = vsub.f32 %v3710, %v4100
        %v4102 = vand.u32 %v4101, 4294901760
        %4103 = vmatpush1.msra.mxu0 %v4102
        %4104 = vmatprep.subr.mxu0 0.0
        %4105 = vmatpush2.msra.mxu0 0.0
        %4106 = vmatprep.subr.mxu0 0.0
        %4107 = vmatpush2.msra.mxu0 0.0
        %4108 = vmatprep.subr.mxu0 0.0
        %4109 = vmatpush2.msra.mxu0 0.0
        %4110 = vmatprep.subr.mxu0 0.0
        %4111 = vmatpush2.msra.mxu0 0.0
        %4112 = vmatprep.subr.mxu0 0.0
        %4113 = vmatpush2.msra.mxu0 0.0
        %4114 = vmatprep.subr.mxu0 0.0
        %4115 = vmatpush2.msra.mxu0 0.0
        %4116 = vmatprep.subr.mxu0 0.0
        %4117 = vmatpush2.msra.mxu0 0.0
        %4118 = vmatprep.subr.mxu0 0.0
        %4119 = vmatpush2.msra.mxu0 0.0
        %4120 = vmatprep.subr.mxu0 0.0
        %4121 = vmatpush2.msra.mxu0 0.0
        %4122 = vmatprep.subr.mxu0 0.0
        %4123 = vmatpush2.msra.mxu0 0.0
        %4124 = vmatprep.subr.mxu0 0.0
        %4125 = vmatpush2.msra.mxu0 0.0
        %4126 = vmatprep.subr.mxu0 0.0
        %4127 = vmatpush2.msra.mxu0 0.0
        %4128 = vmatprep.subr.mxu0 0.0
        %4129 = vmatpush2.msra.mxu0 0.0
        %4130 = vmatprep.subr.mxu0 0.0
        %4131 = vmatpush2.msra.mxu0 0.0
        %4132 = vmatprep.subr.mxu0 0.0
        %4133 = vmatpush2.msra.mxu0 0.0
        %4134 = vmatprep.subr.mxu0 0.0
        %4135 = vmatpush2.msra.mxu0 0.0
        %4136 = vmatprep.mubr.f32.mxu0 0.0
        %v4137 = vand.u32 %v3767, 4294901760
        %4138 = vmatmul.mubr.f32.gmra.mxu0 %v4137
        %v4139 = vpop.f32.mrf.mxu0
        %v4140 = vadd.f32 %v4066, %v4139
        %v4141 = vpop.f32.mrf.mxu0
        %4142 = vdwg.mxu0
        %4143 = vmatprep.subr.mxu0 0.0
        %4144 = vmatpush1.msra.mxu0 0.0
        %4145 = vmatprep.subr.mxu0 0.0
        %4146 = vmatpush1.msra.mxu0 0.0
        %4147 = vmatprep.subr.mxu0 0.0
        %4148 = vmatpush1.msra.mxu0 0.0
        %4149 = vmatprep.subr.mxu0 0.0
        %4150 = vmatpush1.msra.mxu0 0.0
        %4151 = vmatprep.subr.mxu0 0.0
        %4152 = vmatpush1.msra.mxu0 0.0
        %4153 = vmatprep.subr.mxu0 0.0
        %4154 = vmatpush1.msra.mxu0 0.0
        %4155 = vmatprep.subr.mxu0 0.0
        %4156 = vmatpush1.msra.mxu0 0.0
        %4157 = vmatprep.subr.mxu0 0.0
        %4158 = vmatpush1.msra.mxu0 0.0
        %4159 = vmatprep.subr.mxu0 0.0
        %4160 = vmatpush1.msra.mxu0 0.0
        %4161 = vmatprep.subr.mxu0 0.0
        %4162 = vmatpush1.msra.mxu0 0.0
        %4163 = vmatprep.subr.mxu0 0.0
        %4164 = vmatpush1.msra.mxu0 0.0
        %4165 = vmatprep.subr.mxu0 0.0
        %4166 = vmatpush1.msra.mxu0 0.0
        %4167 = vmatprep.subr.mxu0 0.0
        %4168 = vmatpush1.msra.mxu0 0.0
        %4169 = vmatprep.subr.mxu0 0.0
        %4170 = vmatpush1.msra.mxu0 0.0
        %4171 = vmatprep.subr.mxu0 0.0
        %4172 = vmatpush1.msra.mxu0 0.0
        %4173 = vmatprep.subr.mxu0 0.0
        %v4174 = vand.u32 %v3710, 4294901760
        %4175 = vmatpush1.msra.mxu0 %v4174
        %4176 = vmatprep.subr.mxu0 0.0
        %4177 = vmatpush2.msra.mxu0 0.0
        %4178 = vmatprep.subr.mxu0 0.0
        %4179 = vmatpush2.msra.mxu0 0.0
        %4180 = vmatprep.subr.mxu0 0.0
        %4181 = vmatpush2.msra.mxu0 0.0
        %4182 = vmatprep.subr.mxu0 0.0
        %4183 = vmatpush2.msra.mxu0 0.0
        %4184 = vmatprep.subr.mxu0 0.0
        %4185 = vmatpush2.msra.mxu0 0.0
        %4186 = vmatprep.subr.mxu0 0.0
        %4187 = vmatpush2.msra.mxu0 0.0
        %4188 = vmatprep.subr.mxu0 0.0
        %4189 = vmatpush2.msra.mxu0 0.0
        %4190 = vmatprep.subr.mxu0 0.0
        %4191 = vmatpush2.msra.mxu0 0.0
        %4192 = vmatprep.subr.mxu0 0.0
        %4193 = vmatpush2.msra.mxu0 0.0
        %4194 = vmatprep.subr.mxu0 0.0
        %4195 = vmatpush2.msra.mxu0 0.0
        %4196 = vmatprep.subr.mxu0 0.0
        %4197 = vmatpush2.msra.mxu0 0.0
        %4198 = vmatprep.subr.mxu0 0.0
        %4199 = vmatpush2.msra.mxu0 0.0
        %4200 = vmatprep.subr.mxu0 0.0
        %4201 = vmatpush2.msra.mxu0 0.0
        %4202 = vmatprep.subr.mxu0 0.0
        %4203 = vmatpush2.msra.mxu0 0.0
        %4204 = vmatprep.subr.mxu0 0.0
        %4205 = vmatpush2.msra.mxu0 0.0
        %4206 = vmatprep.subr.mxu0 0.0
        %4207 = vmatpush2.msra.mxu0 0.0
        %4208 = vmatprep.mubr.f32.mxu0 0.0
        %v4209 = vand.u32 %v3767, 4294901760
        %4210 = vmatmul.mubr.f32.gmra.mxu0 %v4209
        %v4211 = vpop.f32.mrf.mxu0
        %v4212 = vadd.f32 %v4140, %v4211
        %v4213 = vpop.f32.mrf.mxu0
        %4214 = vdwg.mxu0
        %v4215 = vld [vmem:[%s391] sm:$0xff]
        %4216 = vmatprep.subr.mxu0 0.0
        %4217 = vmatpush1.msra.mxu0 0.0
        %4218 = vmatprep.subr.mxu0 0.0
        %4219 = vmatpush1.msra.mxu0 0.0
        %4220 = vmatprep.subr.mxu0 0.0
        %4221 = vmatpush1.msra.mxu0 0.0
        %4222 = vmatprep.subr.mxu0 0.0
        %4223 = vmatpush1.msra.mxu0 0.0
        %4224 = vmatprep.subr.mxu0 0.0
        %4225 = vmatpush1.msra.mxu0 0.0
        %4226 = vmatprep.subr.mxu0 0.0
        %4227 = vmatpush1.msra.mxu0 0.0
        %4228 = vmatprep.subr.mxu0 0.0
        %4229 = vmatpush1.msra.mxu0 0.0
        %4230 = vmatprep.subr.mxu0 0.0
        %4231 = vmatpush1.msra.mxu0 0.0
        %4232 = vmatprep.subr.mxu0 0.0
        %4233 = vmatpush1.msra.mxu0 0.0
        %4234 = vmatprep.subr.mxu0 0.0
        %4235 = vmatpush1.msra.mxu0 0.0
        %4236 = vmatprep.subr.mxu0 0.0
        %4237 = vmatpush1.msra.mxu0 0.0
        %4238 = vmatprep.subr.mxu0 0.0
        %4239 = vmatpush1.msra.mxu0 0.0
        %4240 = vmatprep.subr.mxu0 0.0
        %4241 = vmatpush1.msra.mxu0 0.0
        %4242 = vmatprep.subr.mxu0 0.0
        %4243 = vmatpush1.msra.mxu0 0.0
        %4244 = vmatprep.subr.mxu0 0.0
        %4245 = vmatpush1.msra.mxu0 0.0
        %4246 = vmatprep.subr.mxu0 0.0
        %v4247 = vand.u32 %v4215, 4294901760
        %4248 = vmatpush1.msra.mxu0 %v4247
        %4249 = vmatprep.subr.mxu0 0.0
        %4250 = vmatpush2.msra.mxu0 0.0
        %4251 = vmatprep.subr.mxu0 0.0
        %4252 = vmatpush2.msra.mxu0 0.0
        %4253 = vmatprep.subr.mxu0 0.0
        %4254 = vmatpush2.msra.mxu0 0.0
        %4255 = vmatprep.subr.mxu0 0.0
        %4256 = vmatpush2.msra.mxu0 0.0
        %4257 = vmatprep.subr.mxu0 0.0
        %4258 = vmatpush2.msra.mxu0 0.0
        %4259 = vmatprep.subr.mxu0 0.0
        %4260 = vmatpush2.msra.mxu0 0.0
        %4261 = vmatprep.subr.mxu0 0.0
        %4262 = vmatpush2.msra.mxu0 0.0
        %4263 = vmatprep.subr.mxu0 0.0
        %4264 = vmatpush2.msra.mxu0 0.0
        %4265 = vmatprep.subr.mxu0 0.0
        %4266 = vmatpush2.msra.mxu0 0.0
        %4267 = vmatprep.subr.mxu0 0.0
        %4268 = vmatpush2.msra.mxu0 0.0
        %4269 = vmatprep.subr.mxu0 0.0
        %4270 = vmatpush2.msra.mxu0 0.0
        %4271 = vmatprep.subr.mxu0 0.0
        %4272 = vmatpush2.msra.mxu0 0.0
        %4273 = vmatprep.subr.mxu0 0.0
        %4274 = vmatpush2.msra.mxu0 0.0
        %4275 = vmatprep.subr.mxu0 0.0
        %4276 = vmatpush2.msra.mxu0 0.0
        %4277 = vmatprep.subr.mxu0 0.0
        %4278 = vmatpush2.msra.mxu0 0.0
        %4279 = vmatprep.subr.mxu0 0.0
        %4280 = vmatpush2.msra.mxu0 0.0
        %4281 = vmatprep.mubr.f32.mxu0 0.0
        %v4282 = vand.u32 %v3767, 4294901760
        %v4283 = vsub.f32 %v3767, %v4282
        %v4284 = vand.u32 %v4283, 4294901760
        %v4285 = vsub.f32 %v4283, %v4284
        %v4286 = vand.u32 %v4285, 4294901760
        %4287 = vmatmul.mubr.f32.gmra.mxu0 %v4286
        %v4288 = vpop.f32.mrf.mxu0
        %v4289 = vadd.f32 0.0, %v4288
        %v4290 = vpop.f32.mrf.mxu0
        %4291 = vdwg.mxu0
        %4292 = vmatprep.subr.mxu0 0.0
        %4293 = vmatpush1.msra.mxu0 0.0
        %4294 = vmatprep.subr.mxu0 0.0
        %4295 = vmatpush1.msra.mxu0 0.0
        %4296 = vmatprep.subr.mxu0 0.0
        %4297 = vmatpush1.msra.mxu0 0.0
        %4298 = vmatprep.subr.mxu0 0.0
        %4299 = vmatpush1.msra.mxu0 0.0
        %4300 = vmatprep.subr.mxu0 0.0
        %4301 = vmatpush1.msra.mxu0 0.0
        %4302 = vmatprep.subr.mxu0 0.0
        %4303 = vmatpush1.msra.mxu0 0.0
        %4304 = vmatprep.subr.mxu0 0.0
        %4305 = vmatpush1.msra.mxu0 0.0
        %4306 = vmatprep.subr.mxu0 0.0
        %4307 = vmatpush1.msra.mxu0 0.0
        %4308 = vmatprep.subr.mxu0 0.0
        %4309 = vmatpush1.msra.mxu0 0.0
        %4310 = vmatprep.subr.mxu0 0.0
        %4311 = vmatpush1.msra.mxu0 0.0
        %4312 = vmatprep.subr.mxu0 0.0
        %4313 = vmatpush1.msra.mxu0 0.0
        %4314 = vmatprep.subr.mxu0 0.0
        %4315 = vmatpush1.msra.mxu0 0.0
        %4316 = vmatprep.subr.mxu0 0.0
        %4317 = vmatpush1.msra.mxu0 0.0
        %4318 = vmatprep.subr.mxu0 0.0
        %4319 = vmatpush1.msra.mxu0 0.0
        %4320 = vmatprep.subr.mxu0 0.0
        %4321 = vmatpush1.msra.mxu0 0.0
        %4322 = vmatprep.subr.mxu0 0.0
        %v4323 = vand.u32 %v4215, 4294901760
        %v4324 = vsub.f32 %v4215, %v4323
        %v4325 = vand.u32 %v4324, 4294901760
        %v4326 = vsub.f32 %v4324, %v4325
        %v4327 = vand.u32 %v4326, 4294901760
        %4328 = vmatpush1.msra.mxu0 %v4327
        %4329 = vmatprep.subr.mxu0 0.0
        %4330 = vmatpush2.msra.mxu0 0.0
        %4331 = vmatprep.subr.mxu0 0.0
        %4332 = vmatpush2.msra.mxu0 0.0
        %4333 = vmatprep.subr.mxu0 0.0
        %4334 = vmatpush2.msra.mxu0 0.0
        %4335 = vmatprep.subr.mxu0 0.0
        %4336 = vmatpush2.msra.mxu0 0.0
        %4337 = vmatprep.subr.mxu0 0.0
        %4338 = vmatpush2.msra.mxu0 0.0
        %4339 = vmatprep.subr.mxu0 0.0
        %4340 = vmatpush2.msra.mxu0 0.0
        %4341 = vmatprep.subr.mxu0 0.0
        %4342 = vmatpush2.msra.mxu0 0.0
        %4343 = vmatprep.subr.mxu0 0.0
        %4344 = vmatpush2.msra.mxu0 0.0
        %4345 = vmatprep.subr.mxu0 0.0
        %4346 = vmatpush2.msra.mxu0 0.0
        %4347 = vmatprep.subr.mxu0 0.0
        %4348 = vmatpush2.msra.mxu0 0.0
        %4349 = vmatprep.subr.mxu0 0.0
        %4350 = vmatpush2.msra.mxu0 0.0
        %4351 = vmatprep.subr.mxu0 0.0
        %4352 = vmatpush2.msra.mxu0 0.0
        %4353 = vmatprep.subr.mxu0 0.0
        %4354 = vmatpush2.msra.mxu0 0.0
        %4355 = vmatprep.subr.mxu0 0.0
        %4356 = vmatpush2.msra.mxu0 0.0
        %4357 = vmatprep.subr.mxu0 0.0
        %4358 = vmatpush2.msra.mxu0 0.0
        %4359 = vmatprep.subr.mxu0 0.0
        %4360 = vmatpush2.msra.mxu0 0.0
        %4361 = vmatprep.mubr.f32.mxu0 0.0
        %v4362 = vand.u32 %v3767, 4294901760
        %4363 = vmatmul.mubr.f32.gmra.mxu0 %v4362
        %v4364 = vpop.f32.mrf.mxu0
        %v4365 = vadd.f32 %v4289, %v4364
        %v4366 = vpop.f32.mrf.mxu0
        %4367 = vdwg.mxu0
        %4368 = vmatprep.subr.mxu0 0.0
        %4369 = vmatpush1.msra.mxu0 0.0
        %4370 = vmatprep.subr.mxu0 0.0
        %4371 = vmatpush1.msra.mxu0 0.0
        %4372 = vmatprep.subr.mxu0 0.0
        %4373 = vmatpush1.msra.mxu0 0.0
        %4374 = vmatprep.subr.mxu0 0.0
        %4375 = vmatpush1.msra.mxu0 0.0
        %4376 = vmatprep.subr.mxu0 0.0
        %4377 = vmatpush1.msra.mxu0 0.0
        %4378 = vmatprep.subr.mxu0 0.0
        %4379 = vmatpush1.msra.mxu0 0.0
        %4380 = vmatprep.subr.mxu0 0.0
        %4381 = vmatpush1.msra.mxu0 0.0
        %4382 = vmatprep.subr.mxu0 0.0
        %4383 = vmatpush1.msra.mxu0 0.0
        %4384 = vmatprep.subr.mxu0 0.0
        %4385 = vmatpush1.msra.mxu0 0.0
        %4386 = vmatprep.subr.mxu0 0.0
        %4387 = vmatpush1.msra.mxu0 0.0
        %4388 = vmatprep.subr.mxu0 0.0
        %4389 = vmatpush1.msra.mxu0 0.0
        %4390 = vmatprep.subr.mxu0 0.0
        %4391 = vmatpush1.msra.mxu0 0.0
        %4392 = vmatprep.subr.mxu0 0.0
        %4393 = vmatpush1.msra.mxu0 0.0
        %4394 = vmatprep.subr.mxu0 0.0
        %4395 = vmatpush1.msra.mxu0 0.0
        %4396 = vmatprep.subr.mxu0 0.0
        %4397 = vmatpush1.msra.mxu0 0.0
        %4398 = vmatprep.subr.mxu0 0.0
        %v4399 = vand.u32 %v4215, 4294901760
        %v4400 = vsub.f32 %v4215, %v4399
        %4401 = vmatpush1.msra.mxu0 %v4400
        %4402 = vmatprep.subr.mxu0 0.0
        %4403 = vmatpush2.msra.mxu0 0.0
        %4404 = vmatprep.subr.mxu0 0.0
        %4405 = vmatpush2.msra.mxu0 0.0
        %4406 = vmatprep.subr.mxu0 0.0
        %4407 = vmatpush2.msra.mxu0 0.0
        %4408 = vmatprep.subr.mxu0 0.0
        %4409 = vmatpush2.msra.mxu0 0.0
        %4410 = vmatprep.subr.mxu0 0.0
        %4411 = vmatpush2.msra.mxu0 0.0
        %4412 = vmatprep.subr.mxu0 0.0
        %4413 = vmatpush2.msra.mxu0 0.0
        %4414 = vmatprep.subr.mxu0 0.0
        %4415 = vmatpush2.msra.mxu0 0.0
        %4416 = vmatprep.subr.mxu0 0.0
        %4417 = vmatpush2.msra.mxu0 0.0
        %4418 = vmatprep.subr.mxu0 0.0
        %4419 = vmatpush2.msra.mxu0 0.0
        %4420 = vmatprep.subr.mxu0 0.0
        %4421 = vmatpush2.msra.mxu0 0.0
        %4422 = vmatprep.subr.mxu0 0.0
        %4423 = vmatpush2.msra.mxu0 0.0
        %4424 = vmatprep.subr.mxu0 0.0
        %4425 = vmatpush2.msra.mxu0 0.0
        %4426 = vmatprep.subr.mxu0 0.0
        %4427 = vmatpush2.msra.mxu0 0.0
        %4428 = vmatprep.subr.mxu0 0.0
        %4429 = vmatpush2.msra.mxu0 0.0
        %4430 = vmatprep.subr.mxu0 0.0
        %4431 = vmatpush2.msra.mxu0 0.0
        %4432 = vmatprep.subr.mxu0 0.0
        %4433 = vmatpush2.msra.mxu0 0.0
        %4434 = vmatprep.mubr.f32.mxu0 0.0
        %v4435 = vand.u32 %v3767, 4294901760
        %v4436 = vsub.f32 %v3767, %v4435
        %4437 = vmatmul.mubr.f32.gmra.mxu0 %v4436
        %v4438 = vpop.f32.mrf.mxu0
        %v4439 = vadd.f32 %v4365, %v4438
        %v4440 = vpop.f32.mrf.mxu0
        %4441 = vdwg.mxu0
        %4442 = vmatprep.subr.mxu0 0.0
        %4443 = vmatpush1.msra.mxu0 0.0
        %4444 = vmatprep.subr.mxu0 0.0
        %4445 = vmatpush1.msra.mxu0 0.0
        %4446 = vmatprep.subr.mxu0 0.0
        %4447 = vmatpush1.msra.mxu0 0.0
        %4448 = vmatprep.subr.mxu0 0.0
        %4449 = vmatpush1.msra.mxu0 0.0
        %4450 = vmatprep.subr.mxu0 0.0
        %4451 = vmatpush1.msra.mxu0 0.0
        %4452 = vmatprep.subr.mxu0 0.0
        %4453 = vmatpush1.msra.mxu0 0.0
        %4454 = vmatprep.subr.mxu0 0.0
        %4455 = vmatpush1.msra.mxu0 0.0
        %4456 = vmatprep.subr.mxu0 0.0
        %4457 = vmatpush1.msra.mxu0 0.0
        %4458 = vmatprep.subr.mxu0 0.0
        %4459 = vmatpush1.msra.mxu0 0.0
        %4460 = vmatprep.subr.mxu0 0.0
        %4461 = vmatpush1.msra.mxu0 0.0
        %4462 = vmatprep.subr.mxu0 0.0
        %4463 = vmatpush1.msra.mxu0 0.0
        %4464 = vmatprep.subr.mxu0 0.0
        %4465 = vmatpush1.msra.mxu0 0.0
        %4466 = vmatprep.subr.mxu0 0.0
        %4467 = vmatpush1.msra.mxu0 0.0
        %4468 = vmatprep.subr.mxu0 0.0
        %4469 = vmatpush1.msra.mxu0 0.0
        %4470 = vmatprep.subr.mxu0 0.0
        %4471 = vmatpush1.msra.mxu0 0.0
        %4472 = vmatprep.subr.mxu0 0.0
        %v4473 = vand.u32 %v4215, 4294901760
        %4474 = vmatpush1.msra.mxu0 %v4473
        %4475 = vmatprep.subr.mxu0 0.0
        %4476 = vmatpush2.msra.mxu0 0.0
        %4477 = vmatprep.subr.mxu0 0.0
        %4478 = vmatpush2.msra.mxu0 0.0
        %4479 = vmatprep.subr.mxu0 0.0
        %4480 = vmatpush2.msra.mxu0 0.0
        %4481 = vmatprep.subr.mxu0 0.0
        %4482 = vmatpush2.msra.mxu0 0.0
        %4483 = vmatprep.subr.mxu0 0.0
        %4484 = vmatpush2.msra.mxu0 0.0
        %4485 = vmatprep.subr.mxu0 0.0
        %4486 = vmatpush2.msra.mxu0 0.0
        %4487 = vmatprep.subr.mxu0 0.0
        %4488 = vmatpush2.msra.mxu0 0.0
        %4489 = vmatprep.subr.mxu0 0.0
        %4490 = vmatpush2.msra.mxu0 0.0
        %4491 = vmatprep.subr.mxu0 0.0
        %4492 = vmatpush2.msra.mxu0 0.0
        %4493 = vmatprep.subr.mxu0 0.0
        %4494 = vmatpush2.msra.mxu0 0.0
        %4495 = vmatprep.subr.mxu0 0.0
        %4496 = vmatpush2.msra.mxu0 0.0
        %4497 = vmatprep.subr.mxu0 0.0
        %4498 = vmatpush2.msra.mxu0 0.0
        %4499 = vmatprep.subr.mxu0 0.0
        %4500 = vmatpush2.msra.mxu0 0.0
        %4501 = vmatprep.subr.mxu0 0.0
        %4502 = vmatpush2.msra.mxu0 0.0
        %4503 = vmatprep.subr.mxu0 0.0
        %4504 = vmatpush2.msra.mxu0 0.0
        %4505 = vmatprep.subr.mxu0 0.0
        %4506 = vmatpush2.msra.mxu0 0.0
        %4507 = vmatprep.mubr.f32.mxu0 0.0
        %v4508 = vand.u32 %v3767, 4294901760
        %v4509 = vsub.f32 %v3767, %v4508
        %v4510 = vand.u32 %v4509, 4294901760
        %4511 = vmatmul.mubr.f32.gmra.mxu0 %v4510
        %v4512 = vpop.f32.mrf.mxu0
        %v4513 = vadd.f32 %v4439, %v4512
        %v4514 = vpop.f32.mrf.mxu0
        %4515 = vdwg.mxu0
        %4516 = vmatprep.subr.mxu0 0.0
        %4517 = vmatpush1.msra.mxu0 0.0
        %4518 = vmatprep.subr.mxu0 0.0
        %4519 = vmatpush1.msra.mxu0 0.0
        %4520 = vmatprep.subr.mxu0 0.0
        %4521 = vmatpush1.msra.mxu0 0.0
        %4522 = vmatprep.subr.mxu0 0.0
        %4523 = vmatpush1.msra.mxu0 0.0
        %4524 = vmatprep.subr.mxu0 0.0
        %4525 = vmatpush1.msra.mxu0 0.0
        %4526 = vmatprep.subr.mxu0 0.0
        %4527 = vmatpush1.msra.mxu0 0.0
        %4528 = vmatprep.subr.mxu0 0.0
        %4529 = vmatpush1.msra.mxu0 0.0
        %4530 = vmatprep.subr.mxu0 0.0
        %4531 = vmatpush1.msra.mxu0 0.0
        %4532 = vmatprep.subr.mxu0 0.0
        %4533 = vmatpush1.msra.mxu0 0.0
        %4534 = vmatprep.subr.mxu0 0.0
        %4535 = vmatpush1.msra.mxu0 0.0
        %4536 = vmatprep.subr.mxu0 0.0
        %4537 = vmatpush1.msra.mxu0 0.0
        %4538 = vmatprep.subr.mxu0 0.0
        %4539 = vmatpush1.msra.mxu0 0.0
        %4540 = vmatprep.subr.mxu0 0.0
        %4541 = vmatpush1.msra.mxu0 0.0
        %4542 = vmatprep.subr.mxu0 0.0
        %4543 = vmatpush1.msra.mxu0 0.0
        %4544 = vmatprep.subr.mxu0 0.0
        %4545 = vmatpush1.msra.mxu0 0.0
        %4546 = vmatprep.subr.mxu0 0.0
        %v4547 = vand.u32 %v4215, 4294901760
        %v4548 = vsub.f32 %v4215, %v4547
        %v4549 = vand.u32 %v4548, 4294901760
        %4550 = vmatpush1.msra.mxu0 %v4549
        %4551 = vmatprep.subr.mxu0 0.0
        %4552 = vmatpush2.msra.mxu0 0.0
        %4553 = vmatprep.subr.mxu0 0.0
        %4554 = vmatpush2.msra.mxu0 0.0
        %4555 = vmatprep.subr.mxu0 0.0
        %4556 = vmatpush2.msra.mxu0 0.0
        %4557 = vmatprep.subr.mxu0 0.0
        %4558 = vmatpush2.msra.mxu0 0.0
        %4559 = vmatprep.subr.mxu0 0.0
        %4560 = vmatpush2.msra.mxu0 0.0
        %4561 = vmatprep.subr.mxu0 0.0
        %4562 = vmatpush2.msra.mxu0 0.0
        %4563 = vmatprep.subr.mxu0 0.0
        %4564 = vmatpush2.msra.mxu0 0.0
        %4565 = vmatprep.subr.mxu0 0.0
        %4566 = vmatpush2.msra.mxu0 0.0
        %4567 = vmatprep.subr.mxu0 0.0
        %4568 = vmatpush2.msra.mxu0 0.0
        %4569 = vmatprep.subr.mxu0 0.0
        %4570 = vmatpush2.msra.mxu0 0.0
        %4571 = vmatprep.subr.mxu0 0.0
        %4572 = vmatpush2.msra.mxu0 0.0
        %4573 = vmatprep.subr.mxu0 0.0
        %4574 = vmatpush2.msra.mxu0 0.0
        %4575 = vmatprep.subr.mxu0 0.0
        %4576 = vmatpush2.msra.mxu0 0.0
        %4577 = vmatprep.subr.mxu0 0.0
        %4578 = vmatpush2.msra.mxu0 0.0
        %4579 = vmatprep.subr.mxu0 0.0
        %4580 = vmatpush2.msra.mxu0 0.0
        %4581 = vmatprep.subr.mxu0 0.0
        %4582 = vmatpush2.msra.mxu0 0.0
        %4583 = vmatprep.mubr.f32.mxu0 0.0
        %v4584 = vand.u32 %v3767, 4294901760
        %4585 = vmatmul.mubr.f32.gmra.mxu0 %v4584
        %v4586 = vpop.f32.mrf.mxu0
        %v4587 = vadd.f32 %v4513, %v4586
        %v4588 = vpop.f32.mrf.mxu0
        %4589 = vdwg.mxu0
        %4590 = vmatprep.subr.mxu0 0.0
        %4591 = vmatpush1.msra.mxu0 0.0
        %4592 = vmatprep.subr.mxu0 0.0
        %4593 = vmatpush1.msra.mxu0 0.0
        %4594 = vmatprep.subr.mxu0 0.0
        %4595 = vmatpush1.msra.mxu0 0.0
        %4596 = vmatprep.subr.mxu0 0.0
        %4597 = vmatpush1.msra.mxu0 0.0
        %4598 = vmatprep.subr.mxu0 0.0
        %4599 = vmatpush1.msra.mxu0 0.0
        %4600 = vmatprep.subr.mxu0 0.0
        %4601 = vmatpush1.msra.mxu0 0.0
        %4602 = vmatprep.subr.mxu0 0.0
        %4603 = vmatpush1.msra.mxu0 0.0
        %4604 = vmatprep.subr.mxu0 0.0
        %4605 = vmatpush1.msra.mxu0 0.0
        %4606 = vmatprep.subr.mxu0 0.0
        %4607 = vmatpush1.msra.mxu0 0.0
        %4608 = vmatprep.subr.mxu0 0.0
        %4609 = vmatpush1.msra.mxu0 0.0
        %4610 = vmatprep.subr.mxu0 0.0
        %4611 = vmatpush1.msra.mxu0 0.0
        %4612 = vmatprep.subr.mxu0 0.0
        %4613 = vmatpush1.msra.mxu0 0.0
        %4614 = vmatprep.subr.mxu0 0.0
        %4615 = vmatpush1.msra.mxu0 0.0
        %4616 = vmatprep.subr.mxu0 0.0
        %4617 = vmatpush1.msra.mxu0 0.0
        %4618 = vmatprep.subr.mxu0 0.0
        %4619 = vmatpush1.msra.mxu0 0.0
        %4620 = vmatprep.subr.mxu0 0.0
        %v4621 = vand.u32 %v4215, 4294901760
        %4622 = vmatpush1.msra.mxu0 %v4621
        %4623 = vmatprep.subr.mxu0 0.0
        %4624 = vmatpush2.msra.mxu0 0.0
        %4625 = vmatprep.subr.mxu0 0.0
        %4626 = vmatpush2.msra.mxu0 0.0
        %4627 = vmatprep.subr.mxu0 0.0
        %4628 = vmatpush2.msra.mxu0 0.0
        %4629 = vmatprep.subr.mxu0 0.0
        %4630 = vmatpush2.msra.mxu0 0.0
        %4631 = vmatprep.subr.mxu0 0.0
        %4632 = vmatpush2.msra.mxu0 0.0
        %4633 = vmatprep.subr.mxu0 0.0
        %4634 = vmatpush2.msra.mxu0 0.0
        %4635 = vmatprep.subr.mxu0 0.0
        %4636 = vmatpush2.msra.mxu0 0.0
        %4637 = vmatprep.subr.mxu0 0.0
        %4638 = vmatpush2.msra.mxu0 0.0
        %4639 = vmatprep.subr.mxu0 0.0
        %4640 = vmatpush2.msra.mxu0 0.0
        %4641 = vmatprep.subr.mxu0 0.0
        %4642 = vmatpush2.msra.mxu0 0.0
        %4643 = vmatprep.subr.mxu0 0.0
        %4644 = vmatpush2.msra.mxu0 0.0
        %4645 = vmatprep.subr.mxu0 0.0
        %4646 = vmatpush2.msra.mxu0 0.0
        %4647 = vmatprep.subr.mxu0 0.0
        %4648 = vmatpush2.msra.mxu0 0.0
        %4649 = vmatprep.subr.mxu0 0.0
        %4650 = vmatpush2.msra.mxu0 0.0
        %4651 = vmatprep.subr.mxu0 0.0
        %4652 = vmatpush2.msra.mxu0 0.0
        %4653 = vmatprep.subr.mxu0 0.0
        %4654 = vmatpush2.msra.mxu0 0.0
        %4655 = vmatprep.mubr.f32.mxu0 0.0
        %v4656 = vand.u32 %v3767, 4294901760
        %4657 = vmatmul.mubr.f32.gmra.mxu0 %v4656
        %v4658 = vpop.f32.mrf.mxu0
        %v4659 = vadd.f32 %v4587, %v4658
        %v4660 = vpop.f32.mrf.mxu0
        %4661 = vdwg.mxu0
        %v4662 = vadd.f32 %v4212, %v4659
        %v4663 = vrcp.pop %v4662
        %v4664 = vmul.f32 %v4212, %v4663
        %v4665 = vsub.f32 1.0, %v4664
        %v4666 = vlaneseq
        %v4667 = vshrl.u32 %v4666, 7
        %v4668 = vsub.s32 0, %v4667
        %v4669 = vrot.slane %v3621, %v4668
        %v4670 = vmul.f32 %v2112, %v4669
        %v4671 = vmul.f32 %v2113, %v4669
        %v4672 = vmul.f32 %v2114, %v4669
        %v4673 = vmul.f32 %v2115, %v4669
        %v4674 = vmul.f32 %v2116, %v4669
        %v4675 = vmul.f32 %v2117, %v4669
        %v4676 = vmul.f32 %v2118, %v4669
        %v4677 = vmul.f32 %v2119, %v4669
        %v4678 = vlaneseq
        %v4679 = vshrl.u32 %v4678, 7
        %v4680 = vsub.s32 0, %v4679
        %v4681 = vrot.slane %v3622, %v4680
        %4683 = vrot.lane.b32.xlu0 %v4681, 8
        %v4684 = vpop.permute.xlu0 %4683
        %v4686 = vmul.f32 %v2112, %v4684
        %v4687 = vmul.f32 %v2113, %v4684
        %v4688 = vmul.f32 %v2114, %v4684
        %v4689 = vmul.f32 %v2115, %v4684
        %v4690 = vmul.f32 %v2116, %v4684
        %v4691 = vmul.f32 %v2117, %v4684
        %v4692 = vmul.f32 %v2118, %v4684
        %v4693 = vmul.f32 %v2119, %v4684
        %4702 = vrot.lane.b32.xlu0 %v4686, 120
        %v4703 = vpop.permute.xlu0 %4702
        %4704 = vrot.lane.b32.xlu0 %v4687, 120
        %v4705 = vpop.permute.xlu0 %4704
        %4706 = vrot.lane.b32.xlu0 %v4688, 120
        %v4707 = vpop.permute.xlu0 %4706
        %4708 = vrot.lane.b32.xlu0 %v4689, 120
        %v4709 = vpop.permute.xlu0 %4708
        %4710 = vrot.lane.b32.xlu0 %v4690, 120
        %v4711 = vpop.permute.xlu0 %4710
        %4712 = vrot.lane.b32.xlu0 %v4691, 120
        %v4713 = vpop.permute.xlu0 %4712
        %4714 = vrot.lane.b32.xlu0 %v4692, 120
        %v4715 = vpop.permute.xlu0 %4714
        %4716 = vrot.lane.b32.xlu0 %v4693, 120
        %v4717 = vpop.permute.xlu0 %4716
        %v4726 = vadd.f32 %v4670, %v4703
        %v4727 = vadd.f32 %v4671, %v4705
        %v4728 = vadd.f32 %v4672, %v4707
        %v4729 = vadd.f32 %v4673, %v4709
        %v4730 = vadd.f32 %v4674, %v4711
        %v4731 = vadd.f32 %v4675, %v4713
        %v4732 = vadd.f32 %v4676, %v4715
        %v4733 = vadd.f32 %v4677, %v4717
        %v4734 = vlaneseq
        %v4735 = vshrl.u32 %v4734, 7
        %v4736 = vsub.s32 0, %v4735
        %v4737 = vrot.slane %v4664, %v4736
        %4739 = vbcast.lane.b32.xlu0 %v4737, 256
        %v4740 = vpop.permute.xlu0 %4739
        %v4741 = vlaneseq
        %v4742 = vshrl.u32 %v4741, 7
        %v4743 = vsub.s32 1, %v4742
        %v4744 = vrot.slane %v4664, %v4743
        %4746 = vbcast.lane.b32.xlu0 %v4744, 256
        %v4747 = vpop.permute.xlu0 %4746
        %v4748 = vlaneseq
        %v4749 = vshrl.u32 %v4748, 7
        %v4750 = vsub.s32 2, %v4749
        %v4751 = vrot.slane %v4664, %v4750
        %4753 = vbcast.lane.b32.xlu0 %v4751, 256
        %v4754 = vpop.permute.xlu0 %4753
        %v4755 = vlaneseq
        %v4756 = vshrl.u32 %v4755, 7
        %v4757 = vsub.s32 3, %v4756
        %v4758 = vrot.slane %v4664, %v4757
        %4760 = vbcast.lane.b32.xlu0 %v4758, 256
        %v4761 = vpop.permute.xlu0 %4760
        %v4762 = vlaneseq
        %v4763 = vshrl.u32 %v4762, 7
        %v4764 = vsub.s32 4, %v4763
        %v4765 = vrot.slane %v4664, %v4764
        %4767 = vbcast.lane.b32.xlu0 %v4765, 256
        %v4768 = vpop.permute.xlu0 %4767
        %v4769 = vlaneseq
        %v4770 = vshrl.u32 %v4769, 7
        %v4771 = vsub.s32 5, %v4770
        %v4772 = vrot.slane %v4664, %v4771
        %4774 = vbcast.lane.b32.xlu0 %v4772, 256
        %v4775 = vpop.permute.xlu0 %4774
        %v4776 = vlaneseq
        %v4777 = vshrl.u32 %v4776, 7
        %v4778 = vsub.s32 6, %v4777
        %v4779 = vrot.slane %v4664, %v4778
        %4781 = vbcast.lane.b32.xlu0 %v4779, 256
        %v4782 = vpop.permute.xlu0 %4781
        %v4783 = vlaneseq
        %v4784 = vshrl.u32 %v4783, 7
        %v4785 = vsub.s32 7, %v4784
        %v4786 = vrot.slane %v4664, %v4785
        %4788 = vbcast.lane.b32.xlu0 %v4786, 256
        %v4789 = vpop.permute.xlu0 %4788
        %v4790 = vmul.f32 %v2112, %v4740
        %v4791 = vmul.f32 %v2113, %v4747
        %v4792 = vmul.f32 %v2114, %v4754
        %v4793 = vmul.f32 %v2115, %v4761
        %v4794 = vmul.f32 %v2116, %v4768
        %v4795 = vmul.f32 %v2117, %v4775
        %v4796 = vmul.f32 %v2118, %v4782
        %v4797 = vmul.f32 %v2119, %v4789
        %v4798 = vlaneseq
        %v4799 = vshrl.u32 %v4798, 7
        %v4800 = vsub.s32 0, %v4799
        %v4801 = vrot.slane %v4665, %v4800
        %4803 = vbcast.lane.b32.xlu0 %v4801, 256
        %v4804 = vpop.permute.xlu0 %4803
        %v4805 = vlaneseq
        %v4806 = vshrl.u32 %v4805, 7
        %v4807 = vsub.s32 1, %v4806
        %v4808 = vrot.slane %v4665, %v4807
        %4810 = vbcast.lane.b32.xlu0 %v4808, 256
        %v4811 = vpop.permute.xlu0 %4810
        %v4812 = vlaneseq
        %v4813 = vshrl.u32 %v4812, 7
        %v4814 = vsub.s32 2, %v4813
        %v4815 = vrot.slane %v4665, %v4814
        %4817 = vbcast.lane.b32.xlu0 %v4815, 256
        %v4818 = vpop.permute.xlu0 %4817
        %v4819 = vlaneseq
        %v4820 = vshrl.u32 %v4819, 7
        %v4821 = vsub.s32 3, %v4820
        %v4822 = vrot.slane %v4665, %v4821
        %4824 = vbcast.lane.b32.xlu0 %v4822, 256
        %v4825 = vpop.permute.xlu0 %4824
        %v4826 = vlaneseq
        %v4827 = vshrl.u32 %v4826, 7
        %v4828 = vsub.s32 4, %v4827
        %v4829 = vrot.slane %v4665, %v4828
        %4831 = vbcast.lane.b32.xlu0 %v4829, 256
        %v4832 = vpop.permute.xlu0 %4831
        %v4833 = vlaneseq
        %v4834 = vshrl.u32 %v4833, 7
        %v4835 = vsub.s32 5, %v4834
        %v4836 = vrot.slane %v4665, %v4835
        %4838 = vbcast.lane.b32.xlu0 %v4836, 256
        %v4839 = vpop.permute.xlu0 %4838
        %v4840 = vlaneseq
        %v4841 = vshrl.u32 %v4840, 7
        %v4842 = vsub.s32 6, %v4841
        %v4843 = vrot.slane %v4665, %v4842
        %4845 = vbcast.lane.b32.xlu0 %v4843, 256
        %v4846 = vpop.permute.xlu0 %4845
        %v4847 = vlaneseq
        %v4848 = vshrl.u32 %v4847, 7
        %v4849 = vsub.s32 7, %v4848
        %v4850 = vrot.slane %v4665, %v4849
        %4852 = vbcast.lane.b32.xlu0 %v4850, 256
        %v4853 = vpop.permute.xlu0 %4852
        %v4854 = vmul.f32 %v2112, %v4804
        %v4855 = vmul.f32 %v2113, %v4811
        %v4856 = vmul.f32 %v2114, %v4818
        %v4857 = vmul.f32 %v2115, %v4825
        %v4858 = vmul.f32 %v2116, %v4832
        %v4859 = vmul.f32 %v2117, %v4839
        %v4860 = vmul.f32 %v2118, %v4846
        %v4861 = vmul.f32 %v2119, %v4853
        %4870 = vrot.lane.b32.xlu0 %v4854, 120
        %v4871 = vpop.permute.xlu0 %4870
        %4872 = vrot.lane.b32.xlu0 %v4855, 120
        %v4873 = vpop.permute.xlu0 %4872
        %4874 = vrot.lane.b32.xlu0 %v4856, 120
        %v4875 = vpop.permute.xlu0 %4874
        %4876 = vrot.lane.b32.xlu0 %v4857, 120
        %v4877 = vpop.permute.xlu0 %4876
        %4878 = vrot.lane.b32.xlu0 %v4858, 120
        %v4879 = vpop.permute.xlu0 %4878
        %4880 = vrot.lane.b32.xlu0 %v4859, 120
        %v4881 = vpop.permute.xlu0 %4880
        %4882 = vrot.lane.b32.xlu0 %v4860, 120
        %v4883 = vpop.permute.xlu0 %4882
        %4884 = vrot.lane.b32.xlu0 %v4861, 120
        %v4885 = vpop.permute.xlu0 %4884
        %v4894 = vadd.f32 %v4790, %v4871
        %v4895 = vadd.f32 %v4791, %v4873
        %v4896 = vadd.f32 %v4792, %v4875
        %v4897 = vadd.f32 %v4793, %v4877
        %v4898 = vadd.f32 %v4794, %v4879
        %v4899 = vadd.f32 %v4795, %v4881
        %v4900 = vadd.f32 %v4796, %v4883
        %v4901 = vadd.f32 %v4797, %v4885
        %v4902 = vadd.f32 %v4726, %v4894
        %v4903 = vadd.f32 %v4727, %v4895
        %v4904 = vadd.f32 %v4728, %v4896
        %v4905 = vadd.f32 %v4729, %v4897
        %v4906 = vadd.f32 %v4730, %v4898
        %v4907 = vadd.f32 %v4731, %v4899
        %v4908 = vadd.f32 %v4732, %v4900
        %v4909 = vadd.f32 %v4733, %v4901
        %4910 = vst.msk [vmem:[%s378] sm:$0xff] %vm1013, %v4902
        %4911 = vst.msk [vmem:[%s378 + $0x8] sm:$0xff] %vm1013, %v4903
        %4912 = vst.msk [vmem:[%s378 + $0x10] sm:$0xff] %vm1013, %v4904
        %4913 = vst.msk [vmem:[%s378 + $0x18] sm:$0xff] %vm1013, %v4905
        %4914 = vst.msk [vmem:[%s378 + $0x20] sm:$0xff] %vm1013, %v4906
        %4915 = vst.msk [vmem:[%s378 + $0x28] sm:$0xff] %vm1013, %v4907
        %4916 = vst.msk [vmem:[%s378 + $0x30] sm:$0xff] %vm1013, %v4908
        %4917 = vst.msk [vmem:[%s378 + $0x38] sm:$0xff] %vm1013, %v4909
        %s4918 = sand.u32 %s257, 1
        %s4919 = scalar_lea.sflag [#allocation3], %s4918
        %s4920 = sand.u32 %s257, 1
        %s4921 = smul.addr %s4920, 64
        %s4922 = scalar_lea.vmem [#allocation2], %s4921
        // Predicated region
        $region61: #{tpu_custom_call.1} parent=59 // pred_check
          %p4923 = pneg %p267
        $region62: #{tpu_custom_call.1} parent=59 // pred_check_branch
          %4925 = sbr.rel (%p4923) target = $region64
        $region63: #{tpu_custom_call.1} parent=59 // pred_region
          %s4927 = ssub.s32 1024, 1024
          %4928 = vsyncadd %s4919, %s4927
          %s4929 = smul.addr %s24, 8
          %s4930 = smul.addr %s4929, 128
          %s4931 = scalar_lea.hbm %s10, %s4930
          %s4932 = sshll.u32 %s4922, 4
          %s4933 = int_to_ptr.vmem [resolvable:$true] %s4932
          %4938 = dma.vmem_to_hbm [thread:$0]  %s4933, 1024, %s4931, %s4919, 128, 128, 8
        $region64: #{tpu_custom_call.1} parent=59 // pred_fallthru
          _
      $region60: #{tpu_custom_call.1} parent=5 // pred_fallthru
        _
      %p4939 = scmp.le.s32.totalorder 2, %s19
      // Predicated region
      $region65: #{tpu_custom_call.1} parent=5 // pred_check
        %p4940 = pneg %p4939
      $region66: #{tpu_custom_call.1} parent=5 // pred_check_branch
        %4942 = sbr.rel (%p4940) target = $region68
      $region67: #{tpu_custom_call.1} parent=5 // pred_region
        %s4943 = ssub.s32 %s19, 2
        // Predicated region
        $region69: #{tpu_custom_call.1} parent=67 // pred_check
          %p4944 = pneg %p273
        $region70: #{tpu_custom_call.1} parent=67 // pred_check_branch
          %4946 = sbr.rel (%p4944) target = $region72
        $region71: #{tpu_custom_call.1} parent=67 // pred_region
          %s4947 = sand.u32 %s258, 1
          %s4948 = scalar_lea.sflag [#allocation3], %s4947
          %s4949 = sand.u32 %s258, 1
          %s4950 = smul.addr %s4949, 64
          %s4951 = scalar_lea.vmem [#allocation2], %s4950
          %4952 = dma.done %s4948, 1024
        $region72: #{tpu_custom_call.1} parent=67 // pred_fallthru
          _
      $region68: #{tpu_custom_call.1} parent=5 // pred_fallthru
        _
    $region6: #{tpu_custom_call.1} parent=1 // loop_footer
      %s23 = sadd.s32 1, %s19
    $region7: #{tpu_custom_call.1} parent=1 // loop_footer_branch
      %18 = sbr.rel target = $region3
    $region8: #{tpu_custom_call.1} parent=1 // loop_exit
      _
    %4953 = vsyncpa [#allocation3], 1
    %s4954 = scalar_lea.sflag [#allocation3], 1
    %4955 = vsyncpa %s4954, 1

</llo_original>
